<compile_context>
chip_gen: v6e
topology: v6e:2x2x1
jax: 0.10.0
libtpu: 0.0.40
codegen_flags: <defaults>
</compile_context>

<pallas_src>
import jax
import jax.numpy as jnp
from jax import lax
from jax.experimental import pallas as pl
from jax.experimental.pallas import tpu as pltpu

EMB = 8            # emb_dim
SEQ = 8            # seq_len
BATCH = 512        # example batch (exercises a 2-tile grid)

FEAT_W = 128       # packed [u_static(64) | p_input(64)]
SEQ_BLOB_W = 384   # packed [inv_len(1) | seq_flat(320) | zeros(63)]
PAD_N = 128        # every matmul N dim padded to full lane width

# Row offsets inside the single packed bf16 weight stack (W_ROWS, 128):
W1B_OFF = 0                       # (384,128): row 0 = 0 (inv_len lane), rows 1:321 = tile(w1b, 8)
W1A_OFF = W1B_OFF + SEQ_BLOB_W    # 384: rows 0:64 = w1a, rows 64:128 = 0
WP1_OFF = W1A_OFF + FEAT_W        # 512: rows 0:64 = 0, rows 64:128 = wp1
W2_OFF = WP1_OFF + FEAT_W         # 640
W3_OFF = W2_OFF + FEAT_W          # 768
WP2_OFF = W3_OFF + FEAT_W         # 896
WP3_OFF = WP2_OFF + FEAT_W        # 1024
W_ROWS = WP3_OFF + FEAT_W         # 1152

# Lane offsets inside the single packed f32 bias row (1, 768):
B1_OFF, B2_OFF, B3_OFF = 0, 128, 256
BP1_OFF, BP2_OFF, BP3_OFF = 384, 512, 640
BIAS_W = 768


# ----------------------------------------------------------------------------
# Pallas kernel: fused mean-pool + user MLP + photo MLP + dot-product logit
# ----------------------------------------------------------------------------
def dssm_kernel(feat_ref, seq_ref, w_ref, b_ref, out_ref):
    f32, bf16 = jnp.float32, jnp.bfloat16

    feat = feat_ref[...]                                   # (TB, 128) bf16
    seqb = seq_ref[...]                                    # (TB, 384) bf16

    # ---- layer 1 (user + photo) ---------------------------------------------
    # seq path: (sum_t seq_emb_t) @ w1b via the 8x row-replicated weight, then
    # scaled by inv_len (lane 0 of the seq blob; its weight row is zero).
    seq_part = jnp.dot(seqb, w_ref[W1B_OFF:W1B_OFF + SEQ_BLOB_W, :],
                       preferred_element_type=f32)         # (TB, 128)
    inv_len = seq_ref[:, 0:1].astype(f32)                  # (TB, 1)
    u_part = jnp.dot(feat, w_ref[W1A_OFF:W1A_OFF + FEAT_W, :],
                     preferred_element_type=f32)           # u_static @ w1a
    h = jnp.maximum(u_part + seq_part * inv_len + b_ref[:, B1_OFF:B1_OFF + 128],
                    0.0).astype(bf16)
    g = jnp.maximum(jnp.dot(feat, w_ref[WP1_OFF:WP1_OFF + FEAT_W, :],
                            preferred_element_type=f32)    # p_input @ wp1
                    + b_ref[:, BP1_OFF:BP1_OFF + 128], 0.0).astype(bf16)

    # ---- layers 2 & 3 ---------------------------------------------------------
    h = jnp.maximum(jnp.dot(h, w_ref[W2_OFF:W2_OFF + FEAT_W, :],
                            preferred_element_type=f32)
                    + b_ref[:, B2_OFF:B2_OFF + 128], 0.0).astype(bf16)
    u_out = (jnp.dot(h, w_ref[W3_OFF:W3_OFF + FEAT_W, :],
                     preferred_element_type=f32)
             + b_ref[:, B3_OFF:B3_OFF + 128])              # (TB, 128) f32
    g = jnp.maximum(jnp.dot(g, w_ref[WP2_OFF:WP2_OFF + FEAT_W, :],
                            preferred_element_type=f32)
                    + b_ref[:, BP2_OFF:BP2_OFF + 128], 0.0).astype(bf16)
    p_out = (jnp.dot(g, w_ref[WP3_OFF:WP3_OFF + FEAT_W, :],
                     preferred_element_type=f32)
             + b_ref[:, BP3_OFF:BP3_OFF + 128])            # (TB, 128) f32

    # ---- logits, lane-dense ----------------------------------------------------
    # Lanes >= 32 of u_out/p_out are exactly zero (zero-padded weight cols AND
    # zero-padded bias lanes), so the 128-lane reduction equals the 32-wide
    # reference sum. Reduce via ones(1,128) @ prod^T on the MXU so the batch
    # lands in lanes -> a dense (1, TB) output row (no 128x write broadcast).
    prod = (u_out * p_out).astype(bf16)                    # (TB, 128)
    ones_row = jnp.ones((1, PAD_N), bf16)
    logits_row = lax.dot_general(ones_row, prod,
                                 (((1,), (1,)), ((), ())),
                                 preferred_element_type=f32)   # (1, TB)
    out_ref[...] = logits_row


# ----------------------------------------------------------------------------
# Wrapper: batch-tiled grid, resident packed weights, lane-dense output
# ----------------------------------------------------------------------------
def dssm_forward_pallas(u_static, seq_emb, seq_len_f, p_input,
                        w_packed, bias_packed, block_b=None):
    B = u_static.shape[0]
    L, E5 = seq_emb.shape[1], seq_emb.shape[2]
    bf16 = jnp.bfloat16

    if block_b is None:
        # 256 -> >=2 tiles at B>=512 (keeps both v7x TCs busy); per-step
        # overhead (~0.35us) is negligible on v5e/v6e. Raise for 1-TC chips.
        if B % 256 == 0:
            block_b = 256
        elif B % 128 == 0:
            block_b = 128
        else:
            block_b = 128   # ragged batch -> padded below (rare path)
    n_tiles = pl.cdiv(B, block_b)
    Bp = n_tiles * block_b

    # Pack activations lane-dense. These elementwise/concat ops fuse into the
    # same XLA fusion that already does the embedding gathers.
    feat = jnp.concatenate([u_static, p_input], axis=1).astype(bf16)   # (B,128)
    assert feat.shape[1] == FEAT_W
    inv_len = 1.0 / seq_len_f                                          # (B,1) f32
    seq_flat = seq_emb.reshape(B, L * E5)                              # (B,320)
    pad_lanes = SEQ_BLOB_W - 1 - seq_flat.shape[1]
    seqblob = jnp.concatenate(
        [inv_len, seq_flat, jnp.zeros((B, pad_lanes), jnp.float32)],
        axis=1).astype(bf16)                                           # (B,384)

    if Bp != B:
        # TODO(synk): replace with an in-kernel tail-row mask to avoid this copy.
        feat = jnp.pad(feat, ((0, Bp - B), (0, 0)))
        seqblob = jnp.pad(seqblob, ((0, Bp - B), (0, 0)))

    in_specs = [
        pl.BlockSpec((block_b, FEAT_W), lambda i: (i, 0)),
        pl.BlockSpec((block_b, SEQ_BLOB_W), lambda i: (i, 0)),
        pl.BlockSpec(w_packed.shape, lambda i: (0, 0)),      # VMEM-resident
        pl.BlockSpec(bias_packed.shape, lambda i: (0, 0)),   # VMEM-resident
    ]
    out_specs = pl.BlockSpec((1, block_b), lambda i: (0, i))

    flops = 2 * Bp * PAD_N * (W_ROWS + 1)
    bytes_accessed = int(feat.size * 2 + seqblob.size * 2
                         + w_packed.size * 2 + bias_packed.size * 4 + Bp * 4)

    out = pl.pallas_call(
        dssm_kernel,
        out_shape=jax.ShapeDtypeStruct((1, Bp), jnp.float32),
        grid_spec=pltpu.PrefetchScalarGridSpec(
            num_scalar_prefetch=0,
            grid=(n_tiles,),
            in_specs=in_specs,
            out_specs=out_specs,
        ),
        compiler_params=pltpu.CompilerParams(
            dimension_semantics=("parallel",),
        ),
        cost_estimate=pl.CostEstimate(
            flops=int(flops), transcendentals=0,
            bytes_accessed=bytes_accessed),
    )(feat, seqblob, w_packed, bias_packed)

    return out[0, :B]


# ----------------------------------------------------------------------------
# Deterministic parameter init (synthetic; mirrors nn.Embedding / nn.Linear
# shapes from DSSM.__init__)
# ----------------------------------------------------------------------------
def make_embedding(key, num_rows, emb_dim, padding_idx=0):
    tbl = jax.random.normal(key, (num_rows, emb_dim), jnp.float32)
    return tbl.at[padding_idx].set(0.0)


def make_linear(key, fan_in, fan_out):
    k1, k2 = jax.random.split(key)
    scale = 1.0 / jnp.sqrt(float(fan_in))
    w = jax.random.uniform(k1, (fan_in, fan_out), jnp.float32, -scale, scale)
    b = jax.random.uniform(k2, (1, fan_out), jnp.float32, -scale, scale)
    return w, b


def build_params(key, id_cnt):
    keys = jax.random.split(key, 32)
    E = EMB
    emb = {
        "uid":      make_embedding(keys[0],  id_cnt["user_id"] + 2, E),
        "did":      make_embedding(keys[1],  id_cnt["device_id"] + 2, E),
        "gender":   make_embedding(keys[2],  id_cnt["gender"] + 2, E),
        "age":      make_embedding(keys[3],  id_cnt["age"] + 2, E),
        "province": make_embedding(keys[4],  id_cnt["province"] + 2, E),
        "vid":      make_embedding(keys[5],  id_cnt["photo_id"] + 2, E),
        "aid":      make_embedding(keys[6],  id_cnt["author_id"] + 2, E),
        "cate2":    make_embedding(keys[7],  id_cnt["category_level_two"] + 2, E),
        "cate1":    make_embedding(keys[8],  id_cnt["category_level_one"] + 2, E,
                                   padding_idx=2),
        "uptype":   make_embedding(keys[9],  id_cnt["upload_type"] + 2, E),
        "wday":     make_embedding(keys[10], 7 + 2, E),
        "hour":     make_embedding(keys[11], 24 + 2, E),
        "min":      make_embedding(keys[12], 60 + 2, E),
    }
    # user encoder: Linear(13E,128) -> ReLU -> Linear(128,64) -> ReLU -> Linear(64,32)
    w1, b1 = make_linear(keys[13], 13 * E, 128)
    w2, b2 = make_linear(keys[14], 128, 64)
    w3, b3 = make_linear(keys[15], 64, 32)
    # photo encoder: Linear(8E,128) -> ReLU -> Linear(128,64) -> ReLU -> Linear(64,32)
    wp1, bp1 = make_linear(keys[16], 8 * E, 128)
    wp2, bp2 = make_linear(keys[17], 128, 64)
    wp3, bp3 = make_linear(keys[18], 64, 32)
    mlp = {
        # split W1 along the input dim: first 8E rows act on static user
        # features, last 5E rows on the seq mean (matches torch.cat order).
        "w1a": w1[: 8 * E], "w1b": w1[8 * E:], "b1": b1,
        "w2": w2, "b2": b2, "w3": w3, "b3": b3,
        "wp1": wp1, "bp1": bp1, "wp2": wp2, "bp2": bp2, "wp3": wp3, "bp3": bp3,
    }
    return emb, mlp


def build_kernel_params(mlp):
    """Pack all MLP weights into one bf16 (1152,128) stack and all biases into
    one f32 (1,768) row (2 resident kernel inputs instead of 13).

    Zero padding of unused weight rows/cols AND bias lanes is load-bearing: it
    guarantees encoder output lanes >= 32 are exactly zero, so the in-kernel
    128-lane logit reduction equals the 32-wide reference sum.
    """
    E = EMB
    w1b_rep = jnp.tile(mlp["w1b"], (SEQ, 1))                          # (320,128)
    w1b_blk = jnp.pad(w1b_rep,
                      ((1, SEQ_BLOB_W - 1 - w1b_rep.shape[0]), (0, 0)))  # (384,128)
    w1a_blk = jnp.pad(mlp["w1a"], ((0, FEAT_W - 8 * E), (0, 0)))      # rows 64:128 -> 0
    wp1_blk = jnp.pad(mlp["wp1"], ((8 * E, 0), (0, 0)))               # rows 0:64 -> 0

    def sq(x):   # zero-pad deeper-layer weights to (128, 128)
        return jnp.pad(x, ((0, FEAT_W - x.shape[0]), (0, PAD_N - x.shape[1])))

    w_packed = jnp.concatenate(
        [w1b_blk, w1a_blk, wp1_blk, sq(mlp["w2"]), sq(mlp["w3"]),
         sq(mlp["wp2"]), sq(mlp["wp3"])], axis=0).astype(jnp.bfloat16)
    assert w_packed.shape == (W_ROWS, PAD_N)

    def pb(b):   # zero-pad bias lanes to 128
        return jnp.pad(b, ((0, 0), (0, PAD_N - b.shape[1])))

    bias_packed = jnp.concatenate(
        [pb(mlp["b1"]), pb(mlp["b2"]), pb(mlp["b3"]),
         pb(mlp["bp1"]), pb(mlp["bp2"]), pb(mlp["bp3"])], axis=1)     # (1,768) f32
    assert bias_packed.shape == (1, BIAS_W)
    return w_packed, bias_packed


# ----------------------------------------------------------------------------
# Glue: embedding gathers + concats (plain JAX), matching forward() semantics
# ----------------------------------------------------------------------------
def lookup(tbl, idx):
    return jnp.take(tbl, idx, axis=0)


def build_kernel_inputs(emb, inputs):
    (req_wday, req_hour, req_min, uid, did, gender, age, province,
     vid, aid, cate_two, cate_one, upload_type,
     up_wday, up_hour, up_min, seq_arr, seq_mask, seq_len) = inputs

    # user-side static features (order matches torch.cat in forward)
    u_static = jnp.concatenate([
        lookup(emb["wday"], req_wday), lookup(emb["hour"], req_hour),
        lookup(emb["min"], req_min), lookup(emb["uid"], uid),
        lookup(emb["did"], did), lookup(emb["gender"], gender),
        lookup(emb["age"], age), lookup(emb["province"], province),
    ], axis=1)                                               # (B, 8*EMB)

    # sequence embeddings (B, L, 5*EMB)
    seq_emb = jnp.concatenate([
        lookup(emb["vid"], seq_arr[:, :, 0]),
        lookup(emb["aid"], seq_arr[:, :, 1]),
        lookup(emb["cate2"], seq_arr[:, :, 2]),
        lookup(emb["cate1"], seq_arr[:, :, 3]),
        lookup(emb["uptype"], seq_arr[:, :, 4]),
    ], axis=2)

    seq_len_f = seq_len.astype(jnp.float32)[:, None]         # (B, 1)

    # photo-side features
    p_input = jnp.concatenate([
        lookup(emb["vid"], vid), lookup(emb["aid"], aid),
        lookup(emb["cate2"], cate_two), lookup(emb["cate1"], cate_one),
        lookup(emb["uptype"], upload_type), lookup(emb["wday"], up_wday),
        lookup(emb["hour"], up_hour), lookup(emb["min"], up_min),
    ], axis=1)                                               # (B, 8*EMB)

    return u_static, seq_emb, seq_len_f, p_input


def reference_forward(u_static, seq_emb, seq_len_f, p_input, p):
    """Pure f32 JAX reference matching the PyTorch forward()."""
    seq_mean = jnp.sum(seq_emb, axis=1) / seq_len_f
    u_in = jnp.concatenate([u_static, seq_mean], axis=1)
    w1 = jnp.concatenate([p["w1a"], p["w1b"]], axis=0)
    h = jnp.maximum(u_in @ w1 + p["b1"], 0.0)
    h = jnp.maximum(h @ p["w2"] + p["b2"], 0.0)
    u_out = h @ p["w3"] + p["b3"]
    g = jnp.maximum(p_input @ p["wp1"] + p["bp1"], 0.0)
    g = jnp.maximum(g @ p["wp2"] + p["bp2"], 0.0)
    p_out = g @ p["wp3"] + p["bp3"]
    return jnp.sum(u_out * p_out, axis=1)


# ----------------------------------------------------------------------------
if __name__ == "__main__":
    key = jax.random.PRNGKey(0)
    id_cnt = {
        "user_id": 50, "device_id": 50, "gender": 3, "age": 10, "province": 30,
        "photo_id": 100, "author_id": 80, "category_level_two": 20,
        "category_level_one": 10, "upload_type": 5,
    }
    kp, ki = jax.random.split(key)
    emb, mlp = build_params(kp, id_cnt)
    w_packed, bias_packed = build_kernel_params(mlp)

    ks = jax.random.split(ki, 24)
    B, L = BATCH, SEQ

    def rint(k, hi, shape=(B,)):
        return jax.random.randint(k, shape, 1, hi + 2, dtype=jnp.int32)

    req_wday = rint(ks[0], 7);   req_hour = rint(ks[1], 24); req_min = rint(ks[2], 60)
    uid = rint(ks[3], id_cnt["user_id"]); did = rint(ks[4], id_cnt["device_id"])
    gender = rint(ks[5], id_cnt["gender"]); age = rint(ks[6], id_cnt["age"])
    province = rint(ks[7], id_cnt["province"])
    vid = rint(ks[8], id_cnt["photo_id"]); aid = rint(ks[9], id_cnt["author_id"])
    cate_two = rint(ks[10], id_cnt["category_level_two"])
    cate_one = rint(ks[11], id_cnt["category_level_one"])
    upload_type = rint(ks[12], id_cnt["upload_type"])
    up_wday = rint(ks[13], 7); up_hour = rint(ks[14], 24); up_min = rint(ks[15], 60)

    seq_len = jax.random.randint(ks[16], (B,), 1, L + 1, dtype=jnp.int32)
    seq_cols = [
        rint(ks[17], id_cnt["photo_id"], (B, L)),
        rint(ks[18], id_cnt["author_id"], (B, L)),
        rint(ks[19], id_cnt["category_level_two"], (B, L)),
        rint(ks[20], id_cnt["category_level_one"], (B, L)),
        rint(ks[21], id_cnt["upload_type"], (B, L)),
    ]
    seq_arr = jnp.stack(seq_cols, axis=-1)                     # (B, L, 5)
    pos = jnp.arange(L)[None, :]
    seq_mask = (pos < seq_len[:, None]).astype(jnp.int32)      # (B, L)
    seq_arr = seq_arr * seq_mask[:, :, None]                   # pad -> idx 0

    inputs = (req_wday, req_hour, req_min, uid, did, gender, age, province,
              vid, aid, cate_two, cate_one, upload_type,
              up_wday, up_hour, up_min, seq_arr, seq_mask, seq_len)

    u_static, seq_emb, seq_len_f, p_input = build_kernel_inputs(emb, inputs)

    logits = dssm_forward_pallas(u_static, seq_emb, seq_len_f, p_input,
                                 w_packed, bias_packed)
    logits = jax.block_until_ready(logits)

    ref = reference_forward(u_static, seq_emb, seq_len_f, p_input, mlp)
    assert logits.shape == (B,)
    # bf16 matmuls + bf16-packed inv_len vs f32 reference -> loosened tolerance.
    assert jnp.allclose(logits, ref, atol=3e-2, rtol=3e-2), (
        f"max abs err = {float(jnp.max(jnp.abs(logits - ref)))}")
    print("KERNEL_OK")
</pallas_src>

<mosaic_0001>
module attributes {stable_mosaic.version = 11 : i64} {
  func.func @dssm_kernel(%arg0: i32, %arg1: memref<256x128xbf16, #tpu.memory_space<vmem>>, %arg2: memref<256x384xbf16, #tpu.memory_space<vmem>>, %arg3: memref<1152x128xbf16, #tpu.memory_space<vmem>>, %arg4: memref<1x768xf32, #tpu.memory_space<vmem>>, %arg5: memref<1x256xf32, #tpu.memory_space<vmem>>) attributes {dimension_semantics = [#tpu.dimension_semantics<parallel>], iteration_bounds = array<i64: 2>, scalar_prefetch = 0 : i64, scratch_operands = 0 : i64, tpu.core_type = #tpu.core_type<tc>, window_params = [{transform_indices = @transform_0, window_bounds = array<i64: 256, 128>}, {transform_indices = @transform_1, window_bounds = array<i64: 256, 384>}, {pipeline_mode = #tpu.pipeline_mode<synchronous>, transform_indices = @transform_2, window_bounds = array<i64: 1152, 128>}, {pipeline_mode = #tpu.pipeline_mode<synchronous>, transform_indices = @transform_3, window_bounds = array<i64: 1, 768>}, {transform_indices = @transform_4, window_bounds = array<i64: 1, 256>}]} {
    %c0 = arith.constant 0 : index
    %c0_0 = arith.constant 0 : index
    %0 = vector.load %arg1[%c0, %c0_0] : memref<256x128xbf16, #tpu.memory_space<vmem>>, vector<256x128xbf16>
    %c0_1 = arith.constant 0 : index
    %c0_2 = arith.constant 0 : index
    %1 = vector.load %arg2[%c0_1, %c0_2] : memref<256x384xbf16, #tpu.memory_space<vmem>>, vector<256x384xbf16>
    %c0_3 = arith.constant 0 : index
    %c0_4 = arith.constant 0 : index
    %2 = vector.load %arg3[%c0_3, %c0_4] : memref<1152x128xbf16, #tpu.memory_space<vmem>>, vector<384x128xbf16>
    %cst = arith.constant dense<0.000000e+00> : vector<256x128xf32>
    %3 = tpu.matmul %1, %2, %cst {dimension_numbers = #tpu.dot_dimension_numbers<[1], [0], [0], [1], [0, 0, 1, 1], [], []>} : vector<256x384xbf16>, vector<384x128xbf16>, vector<256x128xf32> -> vector<256x128xf32>
    %c0_5 = arith.constant 0 : index
    %c0_6 = arith.constant 0 : index
    %4 = vector.load %arg2[%c0_5, %c0_6] : memref<256x384xbf16, #tpu.memory_space<vmem>>, vector<256x1xbf16>
    %5 = arith.extf %4 : vector<256x1xbf16> to vector<256x1xf32>
    %c384 = arith.constant 384 : index
    %c0_7 = arith.constant 0 : index
    %6 = vector.load %arg3[%c384, %c0_7] : memref<1152x128xbf16, #tpu.memory_space<vmem>>, vector<128x128xbf16>
    %cst_8 = arith.constant dense<0.000000e+00> : vector<256x128xf32>
    %7 = tpu.matmul %0, %6, %cst_8 {dimension_numbers = #tpu.dot_dimension_numbers<[1], [0], [0], [1], [0, 0, 1, 1], [], []>} : vector<256x128xbf16>, vector<128x128xbf16>, vector<256x128xf32> -> vector<256x128xf32>
    %8 = vector.broadcast %5 : vector<256x1xf32> to vector<256x128xf32>
    %9 = arith.mulf %3, %8 : vector<256x128xf32>
    %10 = arith.addf %7, %9 : vector<256x128xf32>
    %c0_9 = arith.constant 0 : index
    %c0_10 = arith.constant 0 : index
    %11 = vector.load %arg4[%c0_9, %c0_10] : memref<1x768xf32, #tpu.memory_space<vmem>>, vector<1x128xf32>
    %12 = vector.broadcast %11 : vector<1x128xf32> to vector<256x128xf32>
    %13 = arith.addf %10, %12 : vector<256x128xf32>
    %cst_11 = arith.constant 0.000000e+00 : f32
    %14 = vector.broadcast %cst_11 : f32 to vector<256x128xf32>
    %15 = arith.maximumf %13, %14 : vector<256x128xf32>
    %16 = arith.truncf %15 : vector<256x128xf32> to vector<256x128xbf16>
    %c512 = arith.constant 512 : index
    %c0_12 = arith.constant 0 : index
    %17 = vector.load %arg3[%c512, %c0_12] : memref<1152x128xbf16, #tpu.memory_space<vmem>>, vector<128x128xbf16>
    %cst_13 = arith.constant dense<0.000000e+00> : vector<256x128xf32>
    %18 = tpu.matmul %0, %17, %cst_13 {dimension_numbers = #tpu.dot_dimension_numbers<[1], [0], [0], [1], [0, 0, 1, 1], [], []>} : vector<256x128xbf16>, vector<128x128xbf16>, vector<256x128xf32> -> vector<256x128xf32>
    %c0_14 = arith.constant 0 : index
    %c384_15 = arith.constant 384 : index
    %19 = vector.load %arg4[%c0_14, %c384_15] : memref<1x768xf32, #tpu.memory_space<vmem>>, vector<1x128xf32>
    %20 = vector.broadcast %19 : vector<1x128xf32> to vector<256x128xf32>
    %21 = arith.addf %18, %20 : vector<256x128xf32>
    %cst_16 = arith.constant 0.000000e+00 : f32
    %22 = vector.broadcast %cst_16 : f32 to vector<256x128xf32>
    %23 = arith.maximumf %21, %22 : vector<256x128xf32>
    %24 = arith.truncf %23 : vector<256x128xf32> to vector<256x128xbf16>
    %c640 = arith.constant 640 : index
    %c0_17 = arith.constant 0 : index
    %25 = vector.load %arg3[%c640, %c0_17] : memref<1152x128xbf16, #tpu.memory_space<vmem>>, vector<128x128xbf16>
    %cst_18 = arith.constant dense<0.000000e+00> : vector<256x128xf32>
    %26 = tpu.matmul %16, %25, %cst_18 {dimension_numbers = #tpu.dot_dimension_numbers<[1], [0], [0], [1], [0, 0, 1, 1], [], []>} : vector<256x128xbf16>, vector<128x128xbf16>, vector<256x128xf32> -> vector<256x128xf32>
    %c0_19 = arith.constant 0 : index
    %c128 = arith.constant 128 : index
    %27 = vector.load %arg4[%c0_19, %c128] : memref<1x768xf32, #tpu.memory_space<vmem>>, vector<1x128xf32>
    %28 = vector.broadcast %27 : vector<1x128xf32> to vector<256x128xf32>
    %29 = arith.addf %26, %28 : vector<256x128xf32>
    %cst_20 = arith.constant 0.000000e+00 : f32
    %30 = vector.broadcast %cst_20 : f32 to vector<256x128xf32>
    %31 = arith.maximumf %29, %30 : vector<256x128xf32>
    %32 = arith.truncf %31 : vector<256x128xf32> to vector<256x128xbf16>
    %c768 = arith.constant 768 : index
    %c0_21 = arith.constant 0 : index
    %33 = vector.load %arg3[%c768, %c0_21] : memref<1152x128xbf16, #tpu.memory_space<vmem>>, vector<128x128xbf16>
    %cst_22 = arith.constant dense<0.000000e+00> : vector<256x128xf32>
    %34 = tpu.matmul %32, %33, %cst_22 {dimension_numbers = #tpu.dot_dimension_numbers<[1], [0], [0], [1], [0, 0, 1, 1], [], []>} : vector<256x128xbf16>, vector<128x128xbf16>, vector<256x128xf32> -> vector<256x128xf32>
    %c0_23 = arith.constant 0 : index
    %c256 = arith.constant 256 : index
    %35 = vector.load %arg4[%c0_23, %c256] : memref<1x768xf32, #tpu.memory_space<vmem>>, vector<1x128xf32>
    %36 = vector.broadcast %35 : vector<1x128xf32> to vector<256x128xf32>
    %37 = arith.addf %34, %36 : vector<256x128xf32>
    %c896 = arith.constant 896 : index
    %c0_24 = arith.constant 0 : index
    %38 = vector.load %arg3[%c896, %c0_24] : memref<1152x128xbf16, #tpu.memory_space<vmem>>, vector<128x128xbf16>
    %cst_25 = arith.constant dense<0.000000e+00> : vector<256x128xf32>
    %39 = tpu.matmul %24, %38, %cst_25 {dimension_numbers = #tpu.dot_dimension_numbers<[1], [0], [0], [1], [0, 0, 1, 1], [], []>} : vector<256x128xbf16>, vector<128x128xbf16>, vector<256x128xf32> -> vector<256x128xf32>
    %c0_26 = arith.constant 0 : index
    %c512_27 = arith.constant 512 : index
    %40 = vector.load %arg4[%c0_26, %c512_27] : memref<1x768xf32, #tpu.memory_space<vmem>>, vector<1x128xf32>
    %41 = vector.broadcast %40 : vector<1x128xf32> to vector<256x128xf32>
    %42 = arith.addf %39, %41 : vector<256x128xf32>
    %cst_28 = arith.constant 0.000000e+00 : f32
    %43 = vector.broadcast %cst_28 : f32 to vector<256x128xf32>
    %44 = arith.maximumf %42, %43 : vector<256x128xf32>
    %45 = arith.truncf %44 : vector<256x128xf32> to vector<256x128xbf16>
    %c1024 = arith.constant 1024 : index
    %c0_29 = arith.constant 0 : index
    %46 = vector.load %arg3[%c1024, %c0_29] : memref<1152x128xbf16, #tpu.memory_space<vmem>>, vector<128x128xbf16>
    %cst_30 = arith.constant dense<0.000000e+00> : vector<256x128xf32>
    %47 = tpu.matmul %45, %46, %cst_30 {dimension_numbers = #tpu.dot_dimension_numbers<[1], [0], [0], [1], [0, 0, 1, 1], [], []>} : vector<256x128xbf16>, vector<128x128xbf16>, vector<256x128xf32> -> vector<256x128xf32>
    %c0_31 = arith.constant 0 : index
    %c640_32 = arith.constant 640 : index
    %48 = vector.load %arg4[%c0_31, %c640_32] : memref<1x768xf32, #tpu.memory_space<vmem>>, vector<1x128xf32>
    %49 = vector.broadcast %48 : vector<1x128xf32> to vector<256x128xf32>
    %50 = arith.addf %47, %49 : vector<256x128xf32>
    %51 = arith.mulf %37, %50 : vector<256x128xf32>
    %52 = arith.truncf %51 : vector<256x128xf32> to vector<256x128xbf16>
    %cst_33 = arith.constant 1.000000e+00 : bf16
    %53 = vector.broadcast %cst_33 : bf16 to vector<1x128xbf16>
    %cst_34 = arith.constant dense<0.000000e+00> : vector<1x256xf32>
    %54 = tpu.matmul %53, %52, %cst_34 {dimension_numbers = #tpu.dot_dimension_numbers<[1], [1], [0], [0], [0, 0, 1, 0], [], []>} : vector<1x128xbf16>, vector<256x128xbf16>, vector<1x256xf32> -> vector<1x256xf32>
    %c0_35 = arith.constant 0 : index
    %c0_36 = arith.constant 0 : index
    %55 = vector.load %arg5[%c0_35, %c0_36] : memref<1x256xf32, #tpu.memory_space<vmem>>, vector<1x256xf32>
    tpu.vector_store %arg5[%c0_35, %c0_36], %54 {strides = array<i32>} : memref<1x256xf32, #tpu.memory_space<vmem>>, vector<1x256xf32>,
    return
  }
  func.func @transform_0(%arg0: i32) -> (i32, i32) {
    %c0_i32 = arith.constant 0 : i32
    %c0_i32_0 = arith.constant 0 : i32
    return %arg0, %c0_i32 : i32, i32
  }
  func.func @transform_1(%arg0: i32) -> (i32, i32) {
    %c0_i32 = arith.constant 0 : i32
    %c0_i32_0 = arith.constant 0 : i32
    return %arg0, %c0_i32 : i32, i32
  }
  func.func @transform_2(%arg0: i32) -> (i32, i32) {
    %c0_i32 = arith.constant 0 : i32
    %c0_i32_0 = arith.constant 0 : i32
    %c0_i32_1 = arith.constant 0 : i32
    return %c0_i32, %c0_i32_0 : i32, i32
  }
  func.func @transform_3(%arg0: i32) -> (i32, i32) {
    %c0_i32 = arith.constant 0 : i32
    %c0_i32_0 = arith.constant 0 : i32
    %c0_i32_1 = arith.constant 0 : i32
    return %c0_i32, %c0_i32_0 : i32, i32
  }
  func.func @transform_4(%arg0: i32) -> (i32, i32) {
    %c0_i32 = arith.constant 0 : i32
    %c0_i32_0 = arith.constant 0 : i32
    return %c0_i32, %arg0 : i32, i32
  }
}

</mosaic_0001>

<llo_original>
// kernel: tpu_custom_call.1
$region0: #{tpu_custom_call.1}
  #allocation0 [shape = 'u32[]', space=smem, size = 0x4, offset = 0x4, fixed_abs, tag = 'smem constant byte address 0x4 - core index']
  #allocation1 [shape = 'u32[144,128]{1,0:T(1,128)}', space=vmem, size = 0x12000, scoped, tag = 'internal scratch']
  %s0 = inlined_call_operand.hbm [shape: bf16[512,128], index: 0, kind: input, shape index: {}]
  %s1 = inlined_call_operand.hbm [shape: bf16[512,384], index: 1, kind: input, shape index: {}]
  %s2 = inlined_call_operand.hbm [shape: bf16[1152,128], index: 2, kind: input, shape index: {}]
  %s3 = inlined_call_operand.hbm [shape: f32[1,768], index: 3, kind: input, shape index: {}]
  %s4 = inlined_call_operand.hbm [shape: f32[1,512], index: 4, kind: output, shape index: {}]
  %s5 = sld [smem:[#allocation0]]
  $region65: #{tpu_custom_call.1} parent=0
    _
  %s7 = ssub.s32 1, %s5
  %s8 = scalar_select 0, %s7, %s5
  $region1: #{tpu_custom_call.1} parent=0
    #allocation2 [shape = 'u8[131072]{0}', space=vmem, size = 0x20000, scoped, tag = 'input window, operand 0']
    #allocation3 [shape = 's32[2]{0}', space=sflag, size = 0x8, scoped, tag = 'scoped memory for tpu_custom_call.1']
    #allocation4 [shape = 's32[2]{0}', space=sflag, size = 0x8, scoped, tag = 'scoped memory for tpu_custom_call.1']
    #allocation5 [shape = 'u8[393216]{0}', space=vmem, size = 0x60000, scoped, tag = 'input window, operand 1']
    #allocation6 [shape = 's32[2]{0}', space=sflag, size = 0x8, scoped, tag = 'scoped memory for tpu_custom_call.1']
    #allocation7 [shape = 'u8[294912]{0}', space=vmem, size = 0x48000, scoped, tag = 'input window, operand 2, single buffered']
    #allocation8 [shape = 'u8[3072]{0}', space=vmem, size = 0xc00, scoped, tag = 'input window, operand 3, single buffered']
    #allocation9 [shape = 's32[1]{0}', space=sflag, size = 0x4, scoped, tag = 'scoped memory for tpu_custom_call.1']
    #allocation10 [shape = 'u8[2048]{0}', space=vmem, size = 0x800, scoped, tag = 'output window, operand 0']
    %9 = vsyncpa [#allocation3], 0
    %s10 = scalar_lea.sflag [#allocation3], 1
    %11 = vsyncpa %s10, 0
    %12 = vsyncpa [#allocation6], 0
    %s13 = scalar_lea.sflag [#allocation6], 1
    %14 = vsyncpa %s13, 0
    %15 = vsyncpa [#allocation9], 0
    %16 = vsyncpa [#allocation4], 0
    %s17 = scalar_lea.sflag [#allocation4], 1
    %18 = vsyncpa %s17, 0
    loop: start=0, step=1, limit=4
    $region2: #{tpu_custom_call.1} parent=1 // loop_pre_header
      _
    $region3: #{tpu_custom_call.1} parent=1 // loop_header
      %s20 = sphi 0, %s24
      %p21 = scmp.ge.s32.totalorder %s20, 4
      %s30 = sphi 0, %s32
      %s33 = sphi 0, %s30
      %s34 = sphi 0, %s33
      %s50 = sphi 0, %s34
      %s56 = sphi 0, %s58
      %s59 = sphi 0, %s56
      %s60 = sphi 0, %s59
      %s76 = sphi 0, %s60
      %s80 = sphi 0, %s80
      %s82 = sphi 0, %s80
      %s83 = sphi 0, %s82
      %s97 = sphi 0, %s83
      %s101 = sphi 0, %s101
      %s103 = sphi 0, %s101
      %s104 = sphi 0, %s103
      %s118 = sphi 0, %s104
      %s124 = sphi 0, %s126
      %s127 = sphi 0, %s124
      %s128 = sphi 0, %s127
      %s144 = sphi 0, %s128
    $region4: #{tpu_custom_call.1} parent=1 // loop_header_branch
      %23 = sbr.rel (%p21) target = $region8
    $region5: #{tpu_custom_call.1} parent=1 // loop_body
      %s25 = ssub.s32 %s20, 1
      %s26 = ssub.s32 %s20, 2
      %s27 = sadd.s32 %s20, 1
      %s28 = ssub.s32 %s20, %s27
      %p29 = scmp.eq.s32.totalorder %s28, 0
      %s31 = sadd.s32 %s30, 1
      %s32 = scalar_select %p29, %s30, %s31
      %p35 = pneg %p29
      %p36 = scmp.eq.s32.totalorder %s20, 1
      %p37 = por %p35, %p36
      %p38 = scmp.ne.s32.totalorder %s30, %s33
      %p39 = scmp.eq.s32.totalorder %s20, 0
      %p40 = por %p38, %p39
      %p41 = scmp.ne.s32.totalorder %s30, %s33
      %p42 = scmp.eq.s32.totalorder %s25, 1
      %p43 = por %p41, %p42
      %p44 = scmp.ne.s32.totalorder %s33, %s34
      %p45 = scmp.eq.s32.totalorder %s25, 0
      %p46 = por %p44, %p45
      %p47 = scmp.ne.s32.totalorder %s33, %s34
      %p48 = scmp.eq.s32.totalorder %s26, 1
      %p49 = por %p47, %p48
      %p51 = scmp.ne.s32.totalorder %s34, %s50
      %p52 = scmp.eq.s32.totalorder %s26, 0
      %p53 = por %p51, %p52
      %s54 = ssub.s32 %s20, %s27
      %p55 = scmp.eq.s32.totalorder %s54, 0
      %s57 = sadd.s32 %s56, 1
      %s58 = scalar_select %p55, %s56, %s57
      %p61 = pneg %p55
      %p62 = scmp.eq.s32.totalorder %s20, 1
      %p63 = por %p61, %p62
      %p64 = scmp.ne.s32.totalorder %s56, %s59
      %p65 = scmp.eq.s32.totalorder %s20, 0
      %p66 = por %p64, %p65
      %p67 = scmp.ne.s32.totalorder %s56, %s59
      %p68 = scmp.eq.s32.totalorder %s25, 1
      %p69 = por %p67, %p68
      %p70 = scmp.ne.s32.totalorder %s59, %s60
      %p71 = scmp.eq.s32.totalorder %s25, 0
      %p72 = por %p70, %p71
      %p73 = scmp.ne.s32.totalorder %s59, %s60
      %p74 = scmp.eq.s32.totalorder %s26, 1
      %p75 = por %p73, %p74
      %p77 = scmp.ne.s32.totalorder %s60, %s76
      %p78 = scmp.eq.s32.totalorder %s26, 0
      %p79 = por %p77, %p78
      %s81 = sadd.s32 %s80, 1
      %p84 = scmp.eq.s32.totalorder %s20, 1
      %p85 = scmp.ne.s32.totalorder %s80, %s82
      %p86 = scmp.eq.s32.totalorder %s20, 0
      %p87 = por %p85, %p86
      %p88 = scmp.ne.s32.totalorder %s80, %s82
      %p89 = scmp.eq.s32.totalorder %s25, 1
      %p90 = por %p88, %p89
      %p91 = scmp.ne.s32.totalorder %s82, %s83
      %p92 = scmp.eq.s32.totalorder %s25, 0
      %p93 = por %p91, %p92
      %p94 = scmp.ne.s32.totalorder %s82, %s83
      %p95 = scmp.eq.s32.totalorder %s26, 1
      %p96 = por %p94, %p95
      %p98 = scmp.ne.s32.totalorder %s83, %s97
      %p99 = scmp.eq.s32.totalorder %s26, 0
      %p100 = por %p98, %p99
      %s102 = sadd.s32 %s101, 1
      %p105 = scmp.eq.s32.totalorder %s20, 1
      %p106 = scmp.ne.s32.totalorder %s101, %s103
      %p107 = scmp.eq.s32.totalorder %s20, 0
      %p108 = por %p106, %p107
      %p109 = scmp.ne.s32.totalorder %s101, %s103
      %p110 = scmp.eq.s32.totalorder %s25, 1
      %p111 = por %p109, %p110
      %p112 = scmp.ne.s32.totalorder %s103, %s104
      %p113 = scmp.eq.s32.totalorder %s25, 0
      %p114 = por %p112, %p113
      %p115 = scmp.ne.s32.totalorder %s103, %s104
      %p116 = scmp.eq.s32.totalorder %s26, 1
      %p117 = por %p115, %p116
      %p119 = scmp.ne.s32.totalorder %s104, %s118
      %p120 = scmp.eq.s32.totalorder %s26, 0
      %p121 = por %p119, %p120
      %s122 = ssub.s32 %s20, %s27
      %p123 = scmp.eq.s32.totalorder %s122, 0
      %s125 = sadd.s32 %s124, 1
      %s126 = scalar_select %p123, %s124, %s125
      %p129 = pneg %p123
      %p130 = scmp.eq.s32.totalorder %s20, 1
      %p131 = por %p129, %p130
      %p132 = scmp.ne.s32.totalorder %s124, %s127
      %p133 = scmp.eq.s32.totalorder %s20, 0
      %p134 = por %p132, %p133
      %p135 = scmp.ne.s32.totalorder %s124, %s127
      %p136 = scmp.eq.s32.totalorder %s25, 1
      %p137 = por %p135, %p136
      %p138 = scmp.ne.s32.totalorder %s127, %s128
      %p139 = scmp.eq.s32.totalorder %s25, 0
      %p140 = por %p138, %p139
      %p141 = scmp.ne.s32.totalorder %s127, %s128
      %p142 = scmp.eq.s32.totalorder %s26, 1
      %p143 = por %p141, %p142
      %p145 = scmp.ne.s32.totalorder %s128, %s144
      %p146 = scmp.eq.s32.totalorder %s26, 0
      %p147 = por %p145, %p146
      %p148 = scmp.le.s32.totalorder 1, %s20
      %p149 = scmp.lt.s32.totalorder %s20, 3
      %p150 = pnand %p148, %p149
      %p151 = pneg %p150
      // Predicated region
      $region9: #{tpu_custom_call.1} parent=5 // pred_check
        _
      $region10: #{tpu_custom_call.1} parent=5 // pred_check_branch
        %153 = sbr.rel (%p150) target = $region12
      $region11: #{tpu_custom_call.1} parent=5 // pred_region
        %s154 = ssub.s32 %s20, 1
        // Predicated region
        $region13: #{tpu_custom_call.1} parent=11 // pred_check
          %p155 = pneg %p93
        $region14: #{tpu_custom_call.1} parent=11 // pred_check_branch
          %157 = sbr.rel (%p155) target = $region16
        $region15: #{tpu_custom_call.1} parent=11 // pred_region
          %s159 = ssub.s32 9216, 9216
          %160 = vsyncadd [#allocation6], %s159
          %s161 = sshll.u32 [#allocation7], 4
          %s162 = int_to_ptr.vmem [resolvable:$true] %s161
          %167 = dma.hbm_to_vmem [thread:$0]  %s2, 9216, %s162, [#allocation6], 64, 64, 4
        $region16: #{tpu_custom_call.1} parent=11 // pred_fallthru
          _
        // Predicated region
        $region17: #{tpu_custom_call.1} parent=11 // pred_check
          %p168 = pneg %p114
        $region18: #{tpu_custom_call.1} parent=11 // pred_check_branch
          %170 = sbr.rel (%p168) target = $region20
        $region19: #{tpu_custom_call.1} parent=11 // pred_region
          %s172 = ssub.s32 96, 96
          %173 = vsyncadd [#allocation9], %s172
          %s175 = sshll.u32 [#allocation8], 4
          %s176 = int_to_ptr.vmem [resolvable:$true] %s175
          %178 = dma.hbm_to_vmem [thread:$0]  %s3, 96, %s176, [#allocation9]
        $region20: #{tpu_custom_call.1} parent=11 // pred_fallthru
          _
      $region12: #{tpu_custom_call.1} parent=5 // pred_fallthru
        _
      %p179 = scmp.lt.s32.totalorder %s20, 2
      // Predicated region
      $region21: #{tpu_custom_call.1} parent=5 // pred_check
        %p180 = pneg %p179
      $region22: #{tpu_custom_call.1} parent=5 // pred_check_branch
        %182 = sbr.rel (%p180) target = $region24
      $region23: #{tpu_custom_call.1} parent=5 // pred_region
        // Predicated region
        $region25: #{tpu_custom_call.1} parent=23 // pred_check
          %p183 = pneg %p40
        $region26: #{tpu_custom_call.1} parent=23 // pred_check_branch
          %185 = sbr.rel (%p183) target = $region28
        $region27: #{tpu_custom_call.1} parent=23 // pred_region
          %s186 = sand.u32 %s30, 1
          %s187 = scalar_lea.sflag [#allocation3], %s186
          %s188 = sand.u32 %s30, 1
          %s189 = smul.addr %s188, 128
          %s190 = scalar_lea.vmem [#allocation2], %s189
          %s191 = smul.u32 32, %s20
          %s193 = ssub.s32 2048, 2048
          %194 = vsyncadd %s187, %s193
          %s195 = smul.addr %s191, 64
          %s196 = scalar_lea.hbm %s0, %s195
          %s197 = sshll.u32 %s190, 4
          %s198 = int_to_ptr.vmem [resolvable:$true] %s197
          %203 = dma.hbm_to_vmem [thread:$0]  %s196, 2048, %s198, %s187, 64, 64, 4
        $region28: #{tpu_custom_call.1} parent=23 // pred_fallthru
          _
        // Predicated region
        $region29: #{tpu_custom_call.1} parent=23 // pred_check
          %p204 = pneg %p66
        $region30: #{tpu_custom_call.1} parent=23 // pred_check_branch
          %206 = sbr.rel (%p204) target = $region32
        $region31: #{tpu_custom_call.1} parent=23 // pred_region
          %s207 = sand.u32 %s20, 1
          %s208 = scalar_lea.sflag [#allocation6], %s207
          %s209 = sand.u32 %s56, 1
          %s210 = smul.addr %s209, 384
          %s211 = scalar_lea.vmem [#allocation5], %s210
          %s212 = smul.u32 32, %s20
          %s214 = ssub.s32 6144, 6144
          %215 = vsyncadd %s208, %s214
          %s216 = smul.addr %s212, 3
          %s217 = smul.addr %s216, 64
          %s218 = scalar_lea.hbm %s1, %s217
          %s219 = sshll.u32 %s211, 4
          %s220 = int_to_ptr.vmem [resolvable:$true] %s219
          %225 = dma.hbm_to_vmem [thread:$0]  %s218, 6144, %s220, %s208, 192, 192, 12
        $region32: #{tpu_custom_call.1} parent=23 // pred_fallthru
          _
      $region24: #{tpu_custom_call.1} parent=5 // pred_fallthru
        _
      %p226 = scmp.le.s32.totalorder 1, %s20
      %p227 = scmp.lt.s32.totalorder %s20, 3
      %p228 = pnand %p226, %p227
      %p229 = pneg %p228
      // Predicated region
      $region33: #{tpu_custom_call.1} parent=5 // pred_check
        _
      $region34: #{tpu_custom_call.1} parent=5 // pred_check_branch
        %231 = sbr.rel (%p228) target = $region36
      $region35: #{tpu_custom_call.1} parent=5 // pred_region
        %s232 = ssub.s32 %s20, 1
        %s233 = sand.u32 %s33, 1
        %s234 = scalar_lea.sflag [#allocation3], %s233
        %s235 = sand.u32 %s33, 1
        %s236 = smul.addr %s235, 128
        %s237 = scalar_lea.vmem [#allocation2], %s236
        // Predicated region
        $region37: #{tpu_custom_call.1} parent=35 // pred_check
          %p238 = pneg %p46
        $region38: #{tpu_custom_call.1} parent=35 // pred_check_branch
          %240 = sbr.rel (%p238) target = $region40
        $region39: #{tpu_custom_call.1} parent=35 // pred_region
          %241 = dma.done %s234, 2048
        $region40: #{tpu_custom_call.1} parent=35 // pred_fallthru
          _
        %s242 = sand.u32 %s25, 1
        %s243 = scalar_lea.sflag [#allocation6], %s242
        %s244 = sand.u32 %s59, 1
        %s245 = smul.addr %s244, 384
        %s246 = scalar_lea.vmem [#allocation5], %s245
        // Predicated region
        $region41: #{tpu_custom_call.1} parent=35 // pred_check
          %p247 = pneg %p72
        $region42: #{tpu_custom_call.1} parent=35 // pred_check_branch
          %249 = sbr.rel (%p247) target = $region44
        $region43: #{tpu_custom_call.1} parent=35 // pred_region
          %250 = dma.done %s243, 6144
        $region44: #{tpu_custom_call.1} parent=35 // pred_fallthru
          _
        // Predicated region
        $region45: #{tpu_custom_call.1} parent=35 // pred_check
          %p251 = pneg %p93
        $region46: #{tpu_custom_call.1} parent=35 // pred_check_branch
          %253 = sbr.rel (%p251) target = $region48
        $region47: #{tpu_custom_call.1} parent=35 // pred_region
          %254 = dma.done [#allocation6], 9216
        $region48: #{tpu_custom_call.1} parent=35 // pred_fallthru
          _
        // Predicated region
        $region49: #{tpu_custom_call.1} parent=35 // pred_check
          %p255 = pneg %p114
        $region50: #{tpu_custom_call.1} parent=35 // pred_check_branch
          %257 = sbr.rel (%p255) target = $region52
        $region51: #{tpu_custom_call.1} parent=35 // pred_region
          %258 = dma.done [#allocation9], 96
        $region52: #{tpu_custom_call.1} parent=35 // pred_fallthru
          _
        %s259 = sand.u32 %s33, 1
        %s260 = scalar_lea.sflag [#allocation3], %s259
        %s261 = sand.u32 %s33, 1
        %s262 = smul.addr %s261, 128
        %s263 = scalar_lea.vmem [#allocation2], %s262
        %p264 = pneg %p46
        %p265 = pneg %p43
        %s266 = sand.u32 %s25, 1
        %s267 = scalar_lea.sflag [#allocation6], %s266
        %s268 = sand.u32 %s59, 1
        %s269 = smul.addr %s268, 384
        %s270 = scalar_lea.vmem [#allocation5], %s269
        %p271 = pneg %p72
        %p272 = pneg %p69
        %p273 = pneg %p93
        %p274 = pneg %p90
        %p275 = pneg %p114
        %p276 = pneg %p111
        %p277 = pneg %p140
        %p278 = pneg %p137
        %s279 = sand.u32 %s127, 1
        %s280 = scalar_lea.sflag [#allocation4], %s279
        %s281 = sand.u32 %s127, 1
        %s282 = smul.addr %s281, 2
        %s283 = scalar_lea.vmem [#allocation10], %s282
        %s284 = smul.u32 32, %s25
        %s285 = smul.u32 32, %s25
        %s286 = smul.u32 2, %s25
        %v289 = vld [vmem:[%s237] sm:$0xf]
        %v290 = vld [vmem:[%s237 + $0x4] sm:$0xf]
        %v291 = vld [vmem:[%s237 + $0x8] sm:$0xf]
        %v292 = vld [vmem:[%s237 + $0xc] sm:$0xf]
        %v293 = vld [vmem:[%s237 + $0x10] sm:$0xf]
        %v294 = vld [vmem:[%s237 + $0x14] sm:$0xf]
        %v295 = vld [vmem:[%s237 + $0x18] sm:$0xf]
        %v296 = vld [vmem:[%s237 + $0x1c] sm:$0xf]
        %v297 = vld [vmem:[%s237 + $0x20] sm:$0xf]
        %v298 = vld [vmem:[%s237 + $0x24] sm:$0xf]
        %v299 = vld [vmem:[%s237 + $0x28] sm:$0xf]
        %v300 = vld [vmem:[%s237 + $0x2c] sm:$0xf]
        %v301 = vld [vmem:[%s237 + $0x30] sm:$0xf]
        %v302 = vld [vmem:[%s237 + $0x34] sm:$0xf]
        %v303 = vld [vmem:[%s237 + $0x38] sm:$0xf]
        %v304 = vld [vmem:[%s237 + $0x3c] sm:$0xf]
        %v305 = vld [vmem:[%s237 + $0x40] sm:$0xf]
        %v306 = vld [vmem:[%s237 + $0x44] sm:$0xf]
        %v307 = vld [vmem:[%s237 + $0x48] sm:$0xf]
        %v308 = vld [vmem:[%s237 + $0x4c] sm:$0xf]
        %v309 = vld [vmem:[%s237 + $0x50] sm:$0xf]
        %v310 = vld [vmem:[%s237 + $0x54] sm:$0xf]
        %v311 = vld [vmem:[%s237 + $0x58] sm:$0xf]
        %v312 = vld [vmem:[%s237 + $0x5c] sm:$0xf]
        %v313 = vld [vmem:[%s237 + $0x60] sm:$0xf]
        %v314 = vld [vmem:[%s237 + $0x64] sm:$0xf]
        %v315 = vld [vmem:[%s237 + $0x68] sm:$0xf]
        %v316 = vld [vmem:[%s237 + $0x6c] sm:$0xf]
        %v317 = vld [vmem:[%s237 + $0x70] sm:$0xf]
        %v318 = vld [vmem:[%s237 + $0x74] sm:$0xf]
        %v319 = vld [vmem:[%s237 + $0x78] sm:$0xf]
        %v320 = vld [vmem:[%s237 + $0x7c] sm:$0xf]
        %v321 = vld [vmem:[%s246] sm:$0xff]
        %v322 = vld [vmem:[%s246 + $0x8] sm:$0xf]
        %v323 = vld [vmem:[%s246 + $0xc] sm:$0xff]
        %v324 = vld [vmem:[%s246 + $0x14] sm:$0xf]
        %v325 = vld [vmem:[%s246 + $0x18] sm:$0xff]
        %v326 = vld [vmem:[%s246 + $0x20] sm:$0xf]
        %v327 = vld [vmem:[%s246 + $0x24] sm:$0xff]
        %v328 = vld [vmem:[%s246 + $0x2c] sm:$0xf]
        %v329 = vld [vmem:[%s246 + $0x30] sm:$0xff]
        %v330 = vld [vmem:[%s246 + $0x38] sm:$0xf]
        %v331 = vld [vmem:[%s246 + $0x3c] sm:$0xff]
        %v332 = vld [vmem:[%s246 + $0x44] sm:$0xf]
        %v333 = vld [vmem:[%s246 + $0x48] sm:$0xff]
        %v334 = vld [vmem:[%s246 + $0x50] sm:$0xf]
        %v335 = vld [vmem:[%s246 + $0x54] sm:$0xff]
        %v336 = vld [vmem:[%s246 + $0x5c] sm:$0xf]
        %v337 = vld [vmem:[%s246 + $0x60] sm:$0xff]
        %v338 = vld [vmem:[%s246 + $0x68] sm:$0xf]
        %v339 = vld [vmem:[%s246 + $0x6c] sm:$0xff]
        %v340 = vld [vmem:[%s246 + $0x74] sm:$0xf]
        %v341 = vld [vmem:[%s246 + $0x78] sm:$0xff]
        %v342 = vld [vmem:[%s246 + $0x80] sm:$0xf]
        %v343 = vld [vmem:[%s246 + $0x84] sm:$0xff]
        %v344 = vld [vmem:[%s246 + $0x8c] sm:$0xf]
        %v345 = vld [vmem:[%s246 + $0x90] sm:$0xff]
        %v346 = vld [vmem:[%s246 + $0x98] sm:$0xf]
        %v347 = vld [vmem:[%s246 + $0x9c] sm:$0xff]
        %v348 = vld [vmem:[%s246 + $0xa4] sm:$0xf]
        %v349 = vld [vmem:[%s246 + $0xa8] sm:$0xff]
        %v350 = vld [vmem:[%s246 + $0xb0] sm:$0xf]
        %v351 = vld [vmem:[%s246 + $0xb4] sm:$0xff]
        %v352 = vld [vmem:[%s246 + $0xbc] sm:$0xf]
        %v353 = vld [vmem:[%s246 + $0xc0] sm:$0xff]
        %v354 = vld [vmem:[%s246 + $0xc8] sm:$0xf]
        %v355 = vld [vmem:[%s246 + $0xcc] sm:$0xff]
        %v356 = vld [vmem:[%s246 + $0xd4] sm:$0xf]
        %v357 = vld [vmem:[%s246 + $0xd8] sm:$0xff]
        %v358 = vld [vmem:[%s246 + $0xe0] sm:$0xf]
        %v359 = vld [vmem:[%s246 + $0xe4] sm:$0xff]
        %v360 = vld [vmem:[%s246 + $0xec] sm:$0xf]
        %v361 = vld [vmem:[%s246 + $0xf0] sm:$0xff]
        %v362 = vld [vmem:[%s246 + $0xf8] sm:$0xf]
        %v363 = vld [vmem:[%s246 + $0xfc] sm:$0xff]
        %v364 = vld [vmem:[%s246 + $0x104] sm:$0xf]
        %v365 = vld [vmem:[%s246 + $0x108] sm:$0xff]
        %v366 = vld [vmem:[%s246 + $0x110] sm:$0xf]
        %v367 = vld [vmem:[%s246 + $0x114] sm:$0xff]
        %v368 = vld [vmem:[%s246 + $0x11c] sm:$0xf]
        %v369 = vld [vmem:[%s246 + $0x120] sm:$0xff]
        %v370 = vld [vmem:[%s246 + $0x128] sm:$0xf]
        %v371 = vld [vmem:[%s246 + $0x12c] sm:$0xff]
        %v372 = vld [vmem:[%s246 + $0x134] sm:$0xf]
        %v373 = vld [vmem:[%s246 + $0x138] sm:$0xff]
        %v374 = vld [vmem:[%s246 + $0x140] sm:$0xf]
        %v375 = vld [vmem:[%s246 + $0x144] sm:$0xff]
        %v376 = vld [vmem:[%s246 + $0x14c] sm:$0xf]
        %v377 = vld [vmem:[%s246 + $0x150] sm:$0xff]
        %v378 = vld [vmem:[%s246 + $0x158] sm:$0xf]
        %v379 = vld [vmem:[%s246 + $0x15c] sm:$0xff]
        %v380 = vld [vmem:[%s246 + $0x164] sm:$0xf]
        %v381 = vld [vmem:[%s246 + $0x168] sm:$0xff]
        %v382 = vld [vmem:[%s246 + $0x170] sm:$0xf]
        %v383 = vld [vmem:[%s246 + $0x174] sm:$0xff]
        %v384 = vld [vmem:[%s246 + $0x17c] sm:$0xf]
        %v385 = vld [vmem:[#allocation7] sm:$0xf]
        %v386 = vld [vmem:[#allocation7 + $0x4] sm:$0xf]
        %v387 = vld [vmem:[#allocation7 + $0x8] sm:$0xf]
        %v388 = vld [vmem:[#allocation7 + $0xc] sm:$0xf]
        %v389 = vld [vmem:[#allocation7 + $0x10] sm:$0xf]
        %v390 = vld [vmem:[#allocation7 + $0x14] sm:$0xf]
        %v391 = vld [vmem:[#allocation7 + $0x18] sm:$0xf]
        %v392 = vld [vmem:[#allocation7 + $0x1c] sm:$0xf]
        %v393 = vld [vmem:[#allocation7 + $0x20] sm:$0xf]
        %v394 = vld [vmem:[#allocation7 + $0x24] sm:$0xf]
        %v395 = vld [vmem:[#allocation7 + $0x28] sm:$0xf]
        %v396 = vld [vmem:[#allocation7 + $0x2c] sm:$0xf]
        %v397 = vld [vmem:[#allocation7 + $0x30] sm:$0xf]
        %v398 = vld [vmem:[#allocation7 + $0x34] sm:$0xf]
        %v399 = vld [vmem:[#allocation7 + $0x38] sm:$0xf]
        %v400 = vld [vmem:[#allocation7 + $0x3c] sm:$0xf]
        %v401 = vld [vmem:[#allocation7 + $0x40] sm:$0xf]
        %v402 = vld [vmem:[#allocation7 + $0x44] sm:$0xf]
        %v403 = vld [vmem:[#allocation7 + $0x48] sm:$0xf]
        %v404 = vld [vmem:[#allocation7 + $0x4c] sm:$0xf]
        %v405 = vld [vmem:[#allocation7 + $0x50] sm:$0xf]
        %v406 = vld [vmem:[#allocation7 + $0x54] sm:$0xf]
        %v407 = vld [vmem:[#allocation7 + $0x58] sm:$0xf]
        %v408 = vld [vmem:[#allocation7 + $0x5c] sm:$0xf]
        %v409 = vld [vmem:[#allocation7 + $0x60] sm:$0xf]
        %v410 = vld [vmem:[#allocation7 + $0x64] sm:$0xf]
        %v411 = vld [vmem:[#allocation7 + $0x68] sm:$0xf]
        %v412 = vld [vmem:[#allocation7 + $0x6c] sm:$0xf]
        %v413 = vld [vmem:[#allocation7 + $0x70] sm:$0xf]
        %v414 = vld [vmem:[#allocation7 + $0x74] sm:$0xf]
        %v415 = vld [vmem:[#allocation7 + $0x78] sm:$0xf]
        %v416 = vld [vmem:[#allocation7 + $0x7c] sm:$0xf]
        %v417 = vld [vmem:[#allocation7 + $0x80] sm:$0xf]
        %v418 = vld [vmem:[#allocation7 + $0x84] sm:$0xf]
        %v419 = vld [vmem:[#allocation7 + $0x88] sm:$0xf]
        %v420 = vld [vmem:[#allocation7 + $0x8c] sm:$0xf]
        %v421 = vld [vmem:[#allocation7 + $0x90] sm:$0xf]
        %v422 = vld [vmem:[#allocation7 + $0x94] sm:$0xf]
        %v423 = vld [vmem:[#allocation7 + $0x98] sm:$0xf]
        %v424 = vld [vmem:[#allocation7 + $0x9c] sm:$0xf]
        %v425 = vld [vmem:[#allocation7 + $0xa0] sm:$0xf]
        %v426 = vld [vmem:[#allocation7 + $0xa4] sm:$0xf]
        %v427 = vld [vmem:[#allocation7 + $0xa8] sm:$0xf]
        %v428 = vld [vmem:[#allocation7 + $0xac] sm:$0xf]
        %v429 = vld [vmem:[#allocation7 + $0xb0] sm:$0xf]
        %v430 = vld [vmem:[#allocation7 + $0xb4] sm:$0xf]
        %v431 = vld [vmem:[#allocation7 + $0xb8] sm:$0xf]
        %v432 = vld [vmem:[#allocation7 + $0xbc] sm:$0xf]
        %v497 = vunpack.c.l.b16 %v321
        %v498 = vunpack.c.h.b16 %v321
        %v499 = vunpack.c.l.b16 %v322
        %v500 = vunpack.c.l.b16 %v323
        %v501 = vunpack.c.h.b16 %v323
        %v502 = vunpack.c.l.b16 %v324
        %v503 = vunpack.c.l.b16 %v325
        %v504 = vunpack.c.h.b16 %v325
        %v505 = vunpack.c.l.b16 %v326
        %v506 = vunpack.c.l.b16 %v327
        %v507 = vunpack.c.h.b16 %v327
        %v508 = vunpack.c.l.b16 %v328
        %v509 = vunpack.c.l.b16 %v329
        %v510 = vunpack.c.h.b16 %v329
        %v511 = vunpack.c.l.b16 %v330
        %v512 = vunpack.c.l.b16 %v331
        %v513 = vunpack.c.h.b16 %v331
        %v514 = vunpack.c.l.b16 %v332
        %v515 = vunpack.c.l.b16 %v333
        %v516 = vunpack.c.h.b16 %v333
        %v517 = vunpack.c.l.b16 %v334
        %v518 = vunpack.c.l.b16 %v335
        %v519 = vunpack.c.h.b16 %v335
        %v520 = vunpack.c.l.b16 %v336
        %v521 = vunpack.c.l.b16 %v337
        %v522 = vunpack.c.h.b16 %v337
        %v523 = vunpack.c.l.b16 %v338
        %v524 = vunpack.c.l.b16 %v339
        %v525 = vunpack.c.h.b16 %v339
        %v526 = vunpack.c.l.b16 %v340
        %v527 = vunpack.c.l.b16 %v341
        %v528 = vunpack.c.h.b16 %v341
        %v529 = vunpack.c.l.b16 %v342
        %v530 = vunpack.c.l.b16 %v343
        %v531 = vunpack.c.h.b16 %v343
        %v532 = vunpack.c.l.b16 %v344
        %v533 = vunpack.c.l.b16 %v345
        %v534 = vunpack.c.h.b16 %v345
        %v535 = vunpack.c.l.b16 %v346
        %v536 = vunpack.c.l.b16 %v347
        %v537 = vunpack.c.h.b16 %v347
        %v538 = vunpack.c.l.b16 %v348
        %v539 = vunpack.c.l.b16 %v349
        %v540 = vunpack.c.h.b16 %v349
        %v541 = vunpack.c.l.b16 %v350
        %v542 = vunpack.c.l.b16 %v351
        %v543 = vunpack.c.h.b16 %v351
        %v544 = vunpack.c.l.b16 %v352
        %v545 = vunpack.c.l.b16 %v353
        %v546 = vunpack.c.h.b16 %v353
        %v547 = vunpack.c.l.b16 %v354
        %v548 = vunpack.c.l.b16 %v355
        %v549 = vunpack.c.h.b16 %v355
        %v550 = vunpack.c.l.b16 %v356
        %v551 = vunpack.c.l.b16 %v357
        %v552 = vunpack.c.h.b16 %v357
        %v553 = vunpack.c.l.b16 %v358
        %v554 = vunpack.c.l.b16 %v359
        %v555 = vunpack.c.h.b16 %v359
        %v556 = vunpack.c.l.b16 %v360
        %v557 = vunpack.c.l.b16 %v361
        %v558 = vunpack.c.h.b16 %v361
        %v559 = vunpack.c.l.b16 %v362
        %v560 = vunpack.c.l.b16 %v363
        %v561 = vunpack.c.h.b16 %v363
        %v562 = vunpack.c.l.b16 %v364
        %v563 = vunpack.c.l.b16 %v365
        %v564 = vunpack.c.h.b16 %v365
        %v565 = vunpack.c.l.b16 %v366
        %v566 = vunpack.c.l.b16 %v367
        %v567 = vunpack.c.h.b16 %v367
        %v568 = vunpack.c.l.b16 %v368
        %v569 = vunpack.c.l.b16 %v369
        %v570 = vunpack.c.h.b16 %v369
        %v571 = vunpack.c.l.b16 %v370
        %v572 = vunpack.c.l.b16 %v371
        %v573 = vunpack.c.h.b16 %v371
        %v574 = vunpack.c.l.b16 %v372
        %v575 = vunpack.c.l.b16 %v373
        %v576 = vunpack.c.h.b16 %v373
        %v577 = vunpack.c.l.b16 %v374
        %v578 = vunpack.c.l.b16 %v375
        %v579 = vunpack.c.h.b16 %v375
        %v580 = vunpack.c.l.b16 %v376
        %v581 = vunpack.c.l.b16 %v377
        %v582 = vunpack.c.h.b16 %v377
        %v583 = vunpack.c.l.b16 %v378
        %v584 = vunpack.c.l.b16 %v379
        %v585 = vunpack.c.h.b16 %v379
        %v586 = vunpack.c.l.b16 %v380
        %v587 = vunpack.c.l.b16 %v381
        %v588 = vunpack.c.h.b16 %v381
        %v589 = vunpack.c.l.b16 %v382
        %v590 = vunpack.c.l.b16 %v383
        %v591 = vunpack.c.h.b16 %v383
        %v592 = vunpack.c.l.b16 %v384
        %v593 = vpack.c.b16 %v500, %v497
        %v594 = vpack.c.b16 %v501, %v498
        %v595 = vpack.c.b16 %v502, %v499
        %v596 = vpack.c.b16 %v506, %v503
        %v597 = vpack.c.b16 %v507, %v504
        %v598 = vpack.c.b16 %v508, %v505
        %v599 = vpack.c.b16 %v512, %v509
        %v600 = vpack.c.b16 %v513, %v510
        %v601 = vpack.c.b16 %v514, %v511
        %v602 = vpack.c.b16 %v518, %v515
        %v603 = vpack.c.b16 %v519, %v516
        %v604 = vpack.c.b16 %v520, %v517
        %v605 = vpack.c.b16 %v524, %v521
        %v606 = vpack.c.b16 %v525, %v522
        %v607 = vpack.c.b16 %v526, %v523
        %v608 = vpack.c.b16 %v530, %v527
        %v609 = vpack.c.b16 %v531, %v528
        %v610 = vpack.c.b16 %v532, %v529
        %v611 = vpack.c.b16 %v536, %v533
        %v612 = vpack.c.b16 %v537, %v534
        %v613 = vpack.c.b16 %v538, %v535
        %v614 = vpack.c.b16 %v542, %v539
        %v615 = vpack.c.b16 %v543, %v540
        %v616 = vpack.c.b16 %v544, %v541
        %v617 = vpack.c.b16 %v548, %v545
        %v618 = vpack.c.b16 %v549, %v546
        %v619 = vpack.c.b16 %v550, %v547
        %v620 = vpack.c.b16 %v554, %v551
        %v621 = vpack.c.b16 %v555, %v552
        %v622 = vpack.c.b16 %v556, %v553
        %v623 = vpack.c.b16 %v560, %v557
        %v624 = vpack.c.b16 %v561, %v558
        %v625 = vpack.c.b16 %v562, %v559
        %v626 = vpack.c.b16 %v566, %v563
        %v627 = vpack.c.b16 %v567, %v564
        %v628 = vpack.c.b16 %v568, %v565
        %v629 = vpack.c.b16 %v572, %v569
        %v630 = vpack.c.b16 %v573, %v570
        %v631 = vpack.c.b16 %v574, %v571
        %v632 = vpack.c.b16 %v578, %v575
        %v633 = vpack.c.b16 %v579, %v576
        %v634 = vpack.c.b16 %v580, %v577
        %v635 = vpack.c.b16 %v584, %v581
        %v636 = vpack.c.b16 %v585, %v582
        %v637 = vpack.c.b16 %v586, %v583
        %v638 = vpack.c.b16 %v590, %v587
        %v639 = vpack.c.b16 %v591, %v588
        %v640 = vpack.c.b16 %v592, %v589
        %v737 = vunpack.c.l.b16 %v385
        %v738 = vunpack.c.l.b16 %v386
        %v739 = vunpack.c.l.b16 %v387
        %v740 = vunpack.c.l.b16 %v388
        %v741 = vunpack.c.l.b16 %v389
        %v742 = vunpack.c.l.b16 %v390
        %v743 = vunpack.c.l.b16 %v391
        %v744 = vunpack.c.l.b16 %v392
        %v745 = vunpack.c.l.b16 %v393
        %v746 = vunpack.c.l.b16 %v394
        %v747 = vunpack.c.l.b16 %v395
        %v748 = vunpack.c.l.b16 %v396
        %v749 = vunpack.c.l.b16 %v397
        %v750 = vunpack.c.l.b16 %v398
        %v751 = vunpack.c.l.b16 %v399
        %v752 = vunpack.c.l.b16 %v400
        %v753 = vunpack.c.l.b16 %v401
        %v754 = vunpack.c.l.b16 %v402
        %v755 = vunpack.c.l.b16 %v403
        %v756 = vunpack.c.l.b16 %v404
        %v757 = vunpack.c.l.b16 %v405
        %v758 = vunpack.c.l.b16 %v406
        %v759 = vunpack.c.l.b16 %v407
        %v760 = vunpack.c.l.b16 %v408
        %v761 = vunpack.c.l.b16 %v409
        %v762 = vunpack.c.l.b16 %v410
        %v763 = vunpack.c.l.b16 %v411
        %v764 = vunpack.c.l.b16 %v412
        %v765 = vunpack.c.l.b16 %v413
        %v766 = vunpack.c.l.b16 %v414
        %v767 = vunpack.c.l.b16 %v415
        %v768 = vunpack.c.l.b16 %v416
        %v769 = vunpack.c.l.b16 %v417
        %v770 = vunpack.c.l.b16 %v418
        %v771 = vunpack.c.l.b16 %v419
        %v772 = vunpack.c.l.b16 %v420
        %v773 = vunpack.c.l.b16 %v421
        %v774 = vunpack.c.l.b16 %v422
        %v775 = vunpack.c.l.b16 %v423
        %v776 = vunpack.c.l.b16 %v424
        %v777 = vunpack.c.l.b16 %v425
        %v778 = vunpack.c.l.b16 %v426
        %v779 = vunpack.c.l.b16 %v427
        %v780 = vunpack.c.l.b16 %v428
        %v781 = vunpack.c.l.b16 %v429
        %v782 = vunpack.c.l.b16 %v430
        %v783 = vunpack.c.l.b16 %v431
        %v784 = vunpack.c.l.b16 %v432
        %v785 = vpack.c.b16 %v738, %v737
        %v786 = vpack.c.b16 %v740, %v739
        %v787 = vpack.c.b16 %v742, %v741
        %v788 = vpack.c.b16 %v744, %v743
        %v789 = vpack.c.b16 %v746, %v745
        %v790 = vpack.c.b16 %v748, %v747
        %v791 = vpack.c.b16 %v750, %v749
        %v792 = vpack.c.b16 %v752, %v751
        %v793 = vpack.c.b16 %v754, %v753
        %v794 = vpack.c.b16 %v756, %v755
        %v795 = vpack.c.b16 %v758, %v757
        %v796 = vpack.c.b16 %v760, %v759
        %v797 = vpack.c.b16 %v762, %v761
        %v798 = vpack.c.b16 %v764, %v763
        %v799 = vpack.c.b16 %v766, %v765
        %v800 = vpack.c.b16 %v768, %v767
        %v801 = vpack.c.b16 %v770, %v769
        %v802 = vpack.c.b16 %v772, %v771
        %v803 = vpack.c.b16 %v774, %v773
        %v804 = vpack.c.b16 %v776, %v775
        %v805 = vpack.c.b16 %v778, %v777
        %v806 = vpack.c.b16 %v780, %v779
        %v807 = vpack.c.b16 %v782, %v781
        %v808 = vpack.c.b16 %v784, %v783
        %833 = vmatprep.subr.bf16.mxu0 0
        %834 = vmatpush1.bf16.msra.mxu0 %v792
        %835 = vmatprep.subr.bf16.mxu0 0
        %836 = vmatpush1.bf16.msra.mxu0 %v791
        %837 = vmatprep.subr.bf16.mxu0 0
        %838 = vmatpush1.bf16.msra.mxu0 %v790
        %839 = vmatprep.subr.bf16.mxu0 0
        %840 = vmatpush1.bf16.msra.mxu0 %v789
        %841 = vmatprep.subr.bf16.mxu0 0
        %842 = vmatpush1.bf16.msra.mxu0 %v788
        %843 = vmatprep.subr.bf16.mxu0 0
        %844 = vmatpush1.bf16.msra.mxu0 %v787
        %845 = vmatprep.subr.bf16.mxu0 0
        %846 = vmatpush1.bf16.msra.mxu0 %v786
        %847 = vmatprep.subr.bf16.mxu0 0
        %848 = vmatpush1.bf16.msra.mxu0 %v785
        %849 = vmatprep.subr.bf16.mxu0 0
        %850 = vmatpush2.bf16.msra.mxu0 %v800
        %851 = vmatprep.subr.bf16.mxu0 0
        %852 = vmatpush2.bf16.msra.mxu0 %v799
        %853 = vmatprep.subr.bf16.mxu0 0
        %854 = vmatpush2.bf16.msra.mxu0 %v798
        %855 = vmatprep.subr.bf16.mxu0 0
        %856 = vmatpush2.bf16.msra.mxu0 %v797
        %857 = vmatprep.subr.bf16.mxu0 0
        %858 = vmatpush2.bf16.msra.mxu0 %v796
        %859 = vmatprep.subr.bf16.mxu0 0
        %860 = vmatpush2.bf16.msra.mxu0 %v795
        %861 = vmatprep.subr.bf16.mxu0 0
        %862 = vmatpush2.bf16.msra.mxu0 %v794
        %863 = vmatprep.subr.bf16.mxu0 0
        %864 = vmatpush2.bf16.msra.mxu0 %v793
        %865 = vmatprep.mubr.bf16.mxu0 %v594
        %866 = vmatmul.mubr.bf16.gmra.mxu0 %v593
        %v867 = vpop.f32.mrf.mxu0
        %v868 = vadd.f32 0.0, %v867
        %v869 = vpop.f32.mrf.mxu0
        %v870 = vpop.f32.mrf.mxu0
        %v871 = vadd.f32 0.0, %v870
        %v872 = vpop.f32.mrf.mxu0
        %873 = vmatprep.mubr.bf16.mxu0 %v597
        %874 = vmatmul.mubr.bf16.gmra.mxu0 %v596
        %v875 = vpop.f32.mrf.mxu0
        %v876 = vadd.f32 0.0, %v875
        %v877 = vpop.f32.mrf.mxu0
        %v878 = vpop.f32.mrf.mxu0
        %v879 = vadd.f32 0.0, %v878
        %v880 = vpop.f32.mrf.mxu0
        %881 = vmatprep.mubr.bf16.mxu0 %v600
        %882 = vmatmul.mubr.bf16.gmra.mxu0 %v599
        %v883 = vpop.f32.mrf.mxu0
        %v884 = vadd.f32 0.0, %v883
        %v885 = vpop.f32.mrf.mxu0
        %v886 = vpop.f32.mrf.mxu0
        %v887 = vadd.f32 0.0, %v886
        %v888 = vpop.f32.mrf.mxu0
        %889 = vmatprep.mubr.bf16.mxu0 %v603
        %890 = vmatmul.mubr.bf16.gmra.mxu0 %v602
        %v891 = vpop.f32.mrf.mxu0
        %v892 = vadd.f32 0.0, %v891
        %v893 = vpop.f32.mrf.mxu0
        %v894 = vpop.f32.mrf.mxu0
        %v895 = vadd.f32 0.0, %v894
        %v896 = vpop.f32.mrf.mxu0
        %897 = vmatprep.mubr.bf16.mxu0 %v606
        %898 = vmatmul.mubr.bf16.gmra.mxu0 %v605
        %v899 = vpop.f32.mrf.mxu0
        %v900 = vadd.f32 0.0, %v899
        %v901 = vpop.f32.mrf.mxu0
        %v902 = vpop.f32.mrf.mxu0
        %v903 = vadd.f32 0.0, %v902
        %v904 = vpop.f32.mrf.mxu0
        %905 = vmatprep.mubr.bf16.mxu0 %v609
        %906 = vmatmul.mubr.bf16.gmra.mxu0 %v608
        %v907 = vpop.f32.mrf.mxu0
        %v908 = vadd.f32 0.0, %v907
        %v909 = vpop.f32.mrf.mxu0
        %v910 = vpop.f32.mrf.mxu0
        %v911 = vadd.f32 0.0, %v910
        %v912 = vpop.f32.mrf.mxu0
        %913 = vmatprep.mubr.bf16.mxu0 %v612
        %914 = vmatmul.mubr.bf16.gmra.mxu0 %v611
        %v915 = vpop.f32.mrf.mxu0
        %v916 = vadd.f32 0.0, %v915
        %v917 = vpop.f32.mrf.mxu0
        %v918 = vpop.f32.mrf.mxu0
        %v919 = vadd.f32 0.0, %v918
        %v920 = vpop.f32.mrf.mxu0
        %921 = vmatprep.mubr.bf16.mxu0 %v615
        %922 = vmatmul.mubr.bf16.gmra.mxu0 %v614
        %v923 = vpop.f32.mrf.mxu0
        %v924 = vadd.f32 0.0, %v923
        %v925 = vpop.f32.mrf.mxu0
        %v926 = vpop.f32.mrf.mxu0
        %v927 = vadd.f32 0.0, %v926
        %v928 = vpop.f32.mrf.mxu0
        %929 = vmatprep.mubr.bf16.mxu0 %v618
        %930 = vmatmul.mubr.bf16.gmra.mxu0 %v617
        %v931 = vpop.f32.mrf.mxu0
        %v932 = vadd.f32 0.0, %v931
        %v933 = vpop.f32.mrf.mxu0
        %v934 = vpop.f32.mrf.mxu0
        %v935 = vadd.f32 0.0, %v934
        %v936 = vpop.f32.mrf.mxu0
        %937 = vmatprep.mubr.bf16.mxu0 %v621
        %938 = vmatmul.mubr.bf16.gmra.mxu0 %v620
        %v939 = vpop.f32.mrf.mxu0
        %v940 = vadd.f32 0.0, %v939
        %v941 = vpop.f32.mrf.mxu0
        %v942 = vpop.f32.mrf.mxu0
        %v943 = vadd.f32 0.0, %v942
        %v944 = vpop.f32.mrf.mxu0
        %945 = vmatprep.mubr.bf16.mxu0 %v624
        %946 = vmatmul.mubr.bf16.gmra.mxu0 %v623
        %v947 = vpop.f32.mrf.mxu0
        %v948 = vadd.f32 0.0, %v947
        %v949 = vpop.f32.mrf.mxu0
        %v950 = vpop.f32.mrf.mxu0
        %v951 = vadd.f32 0.0, %v950
        %v952 = vpop.f32.mrf.mxu0
        %953 = vmatprep.mubr.bf16.mxu0 %v627
        %954 = vmatmul.mubr.bf16.gmra.mxu0 %v626
        %v955 = vpop.f32.mrf.mxu0
        %v956 = vadd.f32 0.0, %v955
        %v957 = vpop.f32.mrf.mxu0
        %v958 = vpop.f32.mrf.mxu0
        %v959 = vadd.f32 0.0, %v958
        %v960 = vpop.f32.mrf.mxu0
        %961 = vmatprep.mubr.bf16.mxu0 %v630
        %962 = vmatmul.mubr.bf16.gmra.mxu0 %v629
        %v963 = vpop.f32.mrf.mxu0
        %v964 = vadd.f32 0.0, %v963
        %v965 = vpop.f32.mrf.mxu0
        %v966 = vpop.f32.mrf.mxu0
        %v967 = vadd.f32 0.0, %v966
        %v968 = vpop.f32.mrf.mxu0
        %969 = vmatprep.mubr.bf16.mxu0 %v633
        %970 = vmatmul.mubr.bf16.gmra.mxu0 %v632
        %v971 = vpop.f32.mrf.mxu0
        %v972 = vadd.f32 0.0, %v971
        %v973 = vpop.f32.mrf.mxu0
        %v974 = vpop.f32.mrf.mxu0
        %v975 = vadd.f32 0.0, %v974
        %v976 = vpop.f32.mrf.mxu0
        %977 = vmatprep.mubr.bf16.mxu0 %v636
        %978 = vmatmul.mubr.bf16.gmra.mxu0 %v635
        %v979 = vpop.f32.mrf.mxu0
        %v980 = vadd.f32 0.0, %v979
        %v981 = vpop.f32.mrf.mxu0
        %v982 = vpop.f32.mrf.mxu0
        %v983 = vadd.f32 0.0, %v982
        %v984 = vpop.f32.mrf.mxu0
        %985 = vmatprep.mubr.bf16.mxu0 %v639
        %986 = vmatmul.mubr.bf16.gmra.mxu0 %v638
        %v987 = vpop.f32.mrf.mxu0
        %v988 = vadd.f32 0.0, %v987
        %v989 = vpop.f32.mrf.mxu0
        %v990 = vpop.f32.mrf.mxu0
        %v991 = vadd.f32 0.0, %v990
        %v992 = vpop.f32.mrf.mxu0
        %993 = vdwg.mxu0
        %994 = vmatprep.subr.bf16.mxu0 0
        %995 = vmatpush1.bf16.msra.mxu0 %v808
        %996 = vmatprep.subr.bf16.mxu0 0
        %997 = vmatpush1.bf16.msra.mxu0 %v807
        %998 = vmatprep.subr.bf16.mxu0 0
        %999 = vmatpush1.bf16.msra.mxu0 %v806
        %1000 = vmatprep.subr.bf16.mxu0 0
        %1001 = vmatpush1.bf16.msra.mxu0 %v805
        %1002 = vmatprep.subr.bf16.mxu0 0
        %1003 = vmatpush1.bf16.msra.mxu0 %v804
        %1004 = vmatprep.subr.bf16.mxu0 0
        %1005 = vmatpush1.bf16.msra.mxu0 %v803
        %1006 = vmatprep.subr.bf16.mxu0 0
        %1007 = vmatpush1.bf16.msra.mxu0 %v802
        %1008 = vmatprep.subr.bf16.mxu0 0
        %1009 = vmatpush1.bf16.msra.mxu0 %v801
        %1010 = vmatprep.subr.bf16.mxu0 0
        %1011 = vmatpush2.bf16.msra.mxu0 0
        %1012 = vmatprep.subr.bf16.mxu0 0
        %1013 = vmatpush2.bf16.msra.mxu0 0
        %1014 = vmatprep.subr.bf16.mxu0 0
        %1015 = vmatpush2.bf16.msra.mxu0 0
        %1016 = vmatprep.subr.bf16.mxu0 0
        %1017 = vmatpush2.bf16.msra.mxu0 0
        %1018 = vmatprep.subr.bf16.mxu0 0
        %1019 = vmatpush2.bf16.msra.mxu0 0
        %1020 = vmatprep.subr.bf16.mxu0 0
        %1021 = vmatpush2.bf16.msra.mxu0 0
        %1022 = vmatprep.subr.bf16.mxu0 0
        %1023 = vmatpush2.bf16.msra.mxu0 0
        %1024 = vmatprep.subr.bf16.mxu0 0
        %1025 = vmatpush2.bf16.msra.mxu0 0
        %1026 = vmatprep.mubr.bf16.mxu0 0
        %1027 = vmatmul.mubr.bf16.gmra.mxu0 %v595
        %v1028 = vpop.f32.mrf.mxu0
        %v1029 = vadd.f32 %v868, %v1028
        %v1030 = vpop.f32.mrf.mxu0
        %v1031 = vpop.f32.mrf.mxu0
        %v1032 = vadd.f32 %v871, %v1031
        %v1033 = vpop.f32.mrf.mxu0
        %1034 = vmatprep.mubr.bf16.mxu0 0
        %1035 = vmatmul.mubr.bf16.gmra.mxu0 %v598
        %v1036 = vpop.f32.mrf.mxu0
        %v1037 = vadd.f32 %v876, %v1036
        %v1038 = vpop.f32.mrf.mxu0
        %v1039 = vpop.f32.mrf.mxu0
        %v1040 = vadd.f32 %v879, %v1039
        %v1041 = vpop.f32.mrf.mxu0
        %1042 = vmatprep.mubr.bf16.mxu0 0
        %1043 = vmatmul.mubr.bf16.gmra.mxu0 %v601
        %v1044 = vpop.f32.mrf.mxu0
        %v1045 = vadd.f32 %v884, %v1044
        %v1046 = vpop.f32.mrf.mxu0
        %v1047 = vpop.f32.mrf.mxu0
        %v1048 = vadd.f32 %v887, %v1047
        %v1049 = vpop.f32.mrf.mxu0
        %1050 = vmatprep.mubr.bf16.mxu0 0
        %1051 = vmatmul.mubr.bf16.gmra.mxu0 %v604
        %v1052 = vpop.f32.mrf.mxu0
        %v1053 = vadd.f32 %v892, %v1052
        %v1054 = vpop.f32.mrf.mxu0
        %v1055 = vpop.f32.mrf.mxu0
        %v1056 = vadd.f32 %v895, %v1055
        %v1057 = vpop.f32.mrf.mxu0
        %1058 = vmatprep.mubr.bf16.mxu0 0
        %1059 = vmatmul.mubr.bf16.gmra.mxu0 %v607
        %v1060 = vpop.f32.mrf.mxu0
        %v1061 = vadd.f32 %v900, %v1060
        %v1062 = vpop.f32.mrf.mxu0
        %v1063 = vpop.f32.mrf.mxu0
        %v1064 = vadd.f32 %v903, %v1063
        %v1065 = vpop.f32.mrf.mxu0
        %1066 = vmatprep.mubr.bf16.mxu0 0
        %1067 = vmatmul.mubr.bf16.gmra.mxu0 %v610
        %v1068 = vpop.f32.mrf.mxu0
        %v1069 = vadd.f32 %v908, %v1068
        %v1070 = vpop.f32.mrf.mxu0
        %v1071 = vpop.f32.mrf.mxu0
        %v1072 = vadd.f32 %v911, %v1071
        %v1073 = vpop.f32.mrf.mxu0
        %1074 = vmatprep.mubr.bf16.mxu0 0
        %1075 = vmatmul.mubr.bf16.gmra.mxu0 %v613
        %v1076 = vpop.f32.mrf.mxu0
        %v1077 = vadd.f32 %v916, %v1076
        %v1078 = vpop.f32.mrf.mxu0
        %v1079 = vpop.f32.mrf.mxu0
        %v1080 = vadd.f32 %v919, %v1079
        %v1081 = vpop.f32.mrf.mxu0
        %1082 = vmatprep.mubr.bf16.mxu0 0
        %1083 = vmatmul.mubr.bf16.gmra.mxu0 %v616
        %v1084 = vpop.f32.mrf.mxu0
        %v1085 = vadd.f32 %v924, %v1084
        %v1086 = vpop.f32.mrf.mxu0
        %v1087 = vpop.f32.mrf.mxu0
        %v1088 = vadd.f32 %v927, %v1087
        %v1089 = vpop.f32.mrf.mxu0
        %1090 = vmatprep.mubr.bf16.mxu0 0
        %1091 = vmatmul.mubr.bf16.gmra.mxu0 %v619
        %v1092 = vpop.f32.mrf.mxu0
        %v1093 = vadd.f32 %v932, %v1092
        %v1094 = vpop.f32.mrf.mxu0
        %v1095 = vpop.f32.mrf.mxu0
        %v1096 = vadd.f32 %v935, %v1095
        %v1097 = vpop.f32.mrf.mxu0
        %1098 = vmatprep.mubr.bf16.mxu0 0
        %1099 = vmatmul.mubr.bf16.gmra.mxu0 %v622
        %v1100 = vpop.f32.mrf.mxu0
        %v1101 = vadd.f32 %v940, %v1100
        %v1102 = vpop.f32.mrf.mxu0
        %v1103 = vpop.f32.mrf.mxu0
        %v1104 = vadd.f32 %v943, %v1103
        %v1105 = vpop.f32.mrf.mxu0
        %1106 = vmatprep.mubr.bf16.mxu0 0
        %1107 = vmatmul.mubr.bf16.gmra.mxu0 %v625
        %v1108 = vpop.f32.mrf.mxu0
        %v1109 = vadd.f32 %v948, %v1108
        %v1110 = vpop.f32.mrf.mxu0
        %v1111 = vpop.f32.mrf.mxu0
        %v1112 = vadd.f32 %v951, %v1111
        %v1113 = vpop.f32.mrf.mxu0
        %1114 = vmatprep.mubr.bf16.mxu0 0
        %1115 = vmatmul.mubr.bf16.gmra.mxu0 %v628
        %v1116 = vpop.f32.mrf.mxu0
        %v1117 = vadd.f32 %v956, %v1116
        %v1118 = vpop.f32.mrf.mxu0
        %v1119 = vpop.f32.mrf.mxu0
        %v1120 = vadd.f32 %v959, %v1119
        %v1121 = vpop.f32.mrf.mxu0
        %1122 = vmatprep.mubr.bf16.mxu0 0
        %1123 = vmatmul.mubr.bf16.gmra.mxu0 %v631
        %v1124 = vpop.f32.mrf.mxu0
        %v1125 = vadd.f32 %v964, %v1124
        %v1126 = vpop.f32.mrf.mxu0
        %v1127 = vpop.f32.mrf.mxu0
        %v1128 = vadd.f32 %v967, %v1127
        %v1129 = vpop.f32.mrf.mxu0
        %1130 = vmatprep.mubr.bf16.mxu0 0
        %1131 = vmatmul.mubr.bf16.gmra.mxu0 %v634
        %v1132 = vpop.f32.mrf.mxu0
        %v1133 = vadd.f32 %v972, %v1132
        %v1134 = vpop.f32.mrf.mxu0
        %v1135 = vpop.f32.mrf.mxu0
        %v1136 = vadd.f32 %v975, %v1135
        %v1137 = vpop.f32.mrf.mxu0
        %1138 = vmatprep.mubr.bf16.mxu0 0
        %1139 = vmatmul.mubr.bf16.gmra.mxu0 %v637
        %v1140 = vpop.f32.mrf.mxu0
        %v1141 = vadd.f32 %v980, %v1140
        %v1142 = vpop.f32.mrf.mxu0
        %v1143 = vpop.f32.mrf.mxu0
        %v1144 = vadd.f32 %v983, %v1143
        %v1145 = vpop.f32.mrf.mxu0
        %1146 = vmatprep.mubr.bf16.mxu0 0
        %1147 = vmatmul.mubr.bf16.gmra.mxu0 %v640
        %v1148 = vpop.f32.mrf.mxu0
        %v1149 = vadd.f32 %v988, %v1148
        %v1150 = vpop.f32.mrf.mxu0
        %v1151 = vpop.f32.mrf.mxu0
        %v1152 = vadd.f32 %v991, %v1151
        %v1153 = vpop.f32.mrf.mxu0
        %1154 = vdwg.mxu0
        %v1155 = vld [vmem:[%s246] sm:$0xf]
        %v1156 = vld [vmem:[%s246 + $0xc] sm:$0xf]
        %v1157 = vld [vmem:[%s246 + $0x18] sm:$0xf]
        %v1158 = vld [vmem:[%s246 + $0x24] sm:$0xf]
        %v1159 = vld [vmem:[%s246 + $0x30] sm:$0xf]
        %v1160 = vld [vmem:[%s246 + $0x3c] sm:$0xf]
        %v1161 = vld [vmem:[%s246 + $0x48] sm:$0xf]
        %v1162 = vld [vmem:[%s246 + $0x54] sm:$0xf]
        %v1163 = vld [vmem:[%s246 + $0x60] sm:$0xf]
        %v1164 = vld [vmem:[%s246 + $0x6c] sm:$0xf]
        %v1165 = vld [vmem:[%s246 + $0x78] sm:$0xf]
        %v1166 = vld [vmem:[%s246 + $0x84] sm:$0xf]
        %v1167 = vld [vmem:[%s246 + $0x90] sm:$0xf]
        %v1168 = vld [vmem:[%s246 + $0x9c] sm:$0xf]
        %v1169 = vld [vmem:[%s246 + $0xa8] sm:$0xf]
        %v1170 = vld [vmem:[%s246 + $0xb4] sm:$0xf]
        %v1171 = vld [vmem:[%s246 + $0xc0] sm:$0xf]
        %v1172 = vld [vmem:[%s246 + $0xcc] sm:$0xf]
        %v1173 = vld [vmem:[%s246 + $0xd8] sm:$0xf]
        %v1174 = vld [vmem:[%s246 + $0xe4] sm:$0xf]
        %v1175 = vld [vmem:[%s246 + $0xf0] sm:$0xf]
        %v1176 = vld [vmem:[%s246 + $0xfc] sm:$0xf]
        %v1177 = vld [vmem:[%s246 + $0x108] sm:$0xf]
        %v1178 = vld [vmem:[%s246 + $0x114] sm:$0xf]
        %v1179 = vld [vmem:[%s246 + $0x120] sm:$0xf]
        %v1180 = vld [vmem:[%s246 + $0x12c] sm:$0xf]
        %v1181 = vld [vmem:[%s246 + $0x138] sm:$0xf]
        %v1182 = vld [vmem:[%s246 + $0x144] sm:$0xf]
        %v1183 = vld [vmem:[%s246 + $0x150] sm:$0xf]
        %v1184 = vld [vmem:[%s246 + $0x15c] sm:$0xf]
        %v1185 = vld [vmem:[%s246 + $0x168] sm:$0xf]
        %v1186 = vld [vmem:[%s246 + $0x174] sm:$0xf]
        %v1187 = vunpack.c.l.bf16 %v1155
        %v1188 = vunpack.c.l.bf16 %v1156
        %v1189 = vunpack.c.l.bf16 %v1157
        %v1190 = vunpack.c.l.bf16 %v1158
        %v1191 = vunpack.c.l.bf16 %v1159
        %v1192 = vunpack.c.l.bf16 %v1160
        %v1193 = vunpack.c.l.bf16 %v1161
        %v1194 = vunpack.c.l.bf16 %v1162
        %v1195 = vunpack.c.l.bf16 %v1163
        %v1196 = vunpack.c.l.bf16 %v1164
        %v1197 = vunpack.c.l.bf16 %v1165
        %v1198 = vunpack.c.l.bf16 %v1166
        %v1199 = vunpack.c.l.bf16 %v1167
        %v1200 = vunpack.c.l.bf16 %v1168
        %v1201 = vunpack.c.l.bf16 %v1169
        %v1202 = vunpack.c.l.bf16 %v1170
        %v1203 = vunpack.c.l.bf16 %v1171
        %v1204 = vunpack.c.l.bf16 %v1172
        %v1205 = vunpack.c.l.bf16 %v1173
        %v1206 = vunpack.c.l.bf16 %v1174
        %v1207 = vunpack.c.l.bf16 %v1175
        %v1208 = vunpack.c.l.bf16 %v1176
        %v1209 = vunpack.c.l.bf16 %v1177
        %v1210 = vunpack.c.l.bf16 %v1178
        %v1211 = vunpack.c.l.bf16 %v1179
        %v1212 = vunpack.c.l.bf16 %v1180
        %v1213 = vunpack.c.l.bf16 %v1181
        %v1214 = vunpack.c.l.bf16 %v1182
        %v1215 = vunpack.c.l.bf16 %v1183
        %v1216 = vunpack.c.l.bf16 %v1184
        %v1217 = vunpack.c.l.bf16 %v1185
        %v1218 = vunpack.c.l.bf16 %v1186
        %v1219 = vld [vmem:[#allocation7 + $0xc0] sm:$0xf]
        %v1220 = vld [vmem:[#allocation7 + $0xc4] sm:$0xf]
        %v1221 = vld [vmem:[#allocation7 + $0xc8] sm:$0xf]
        %v1222 = vld [vmem:[#allocation7 + $0xcc] sm:$0xf]
        %v1223 = vld [vmem:[#allocation7 + $0xd0] sm:$0xf]
        %v1224 = vld [vmem:[#allocation7 + $0xd4] sm:$0xf]
        %v1225 = vld [vmem:[#allocation7 + $0xd8] sm:$0xf]
        %v1226 = vld [vmem:[#allocation7 + $0xdc] sm:$0xf]
        %v1227 = vld [vmem:[#allocation7 + $0xe0] sm:$0xf]
        %v1228 = vld [vmem:[#allocation7 + $0xe4] sm:$0xf]
        %v1229 = vld [vmem:[#allocation7 + $0xe8] sm:$0xf]
        %v1230 = vld [vmem:[#allocation7 + $0xec] sm:$0xf]
        %v1231 = vld [vmem:[#allocation7 + $0xf0] sm:$0xf]
        %v1232 = vld [vmem:[#allocation7 + $0xf4] sm:$0xf]
        %v1233 = vld [vmem:[#allocation7 + $0xf8] sm:$0xf]
        %v1234 = vld [vmem:[#allocation7 + $0xfc] sm:$0xf]
        %1236 = vset.pattern.permute.xlu0 0
        %1237 = vperm.xlu0 %1236, %v1187
        %v1238 = vpop.permute.xlu0 %1237
        %1241 = vset.pattern.permute.xlu0 0
        %1242 = vperm.xlu0 %1241, %v1188
        %v1243 = vpop.permute.xlu0 %1242
        %1246 = vset.pattern.permute.xlu0 0
        %1247 = vperm.xlu0 %1246, %v1189
        %v1248 = vpop.permute.xlu0 %1247
        %1251 = vset.pattern.permute.xlu0 0
        %1252 = vperm.xlu0 %1251, %v1190
        %v1253 = vpop.permute.xlu0 %1252
        %1256 = vset.pattern.permute.xlu0 0
        %1257 = vperm.xlu0 %1256, %v1191
        %v1258 = vpop.permute.xlu0 %1257
        %1261 = vset.pattern.permute.xlu0 0
        %1262 = vperm.xlu0 %1261, %v1192
        %v1263 = vpop.permute.xlu0 %1262
        %1266 = vset.pattern.permute.xlu0 0
        %1267 = vperm.xlu0 %1266, %v1193
        %v1268 = vpop.permute.xlu0 %1267
        %1271 = vset.pattern.permute.xlu0 0
        %1272 = vperm.xlu0 %1271, %v1194
        %v1273 = vpop.permute.xlu0 %1272
        %1276 = vset.pattern.permute.xlu0 0
        %1277 = vperm.xlu0 %1276, %v1195
        %v1278 = vpop.permute.xlu0 %1277
        %1281 = vset.pattern.permute.xlu0 0
        %1282 = vperm.xlu0 %1281, %v1196
        %v1283 = vpop.permute.xlu0 %1282
        %1286 = vset.pattern.permute.xlu0 0
        %1287 = vperm.xlu0 %1286, %v1197
        %v1288 = vpop.permute.xlu0 %1287
        %1291 = vset.pattern.permute.xlu0 0
        %1292 = vperm.xlu0 %1291, %v1198
        %v1293 = vpop.permute.xlu0 %1292
        %1296 = vset.pattern.permute.xlu0 0
        %1297 = vperm.xlu0 %1296, %v1199
        %v1298 = vpop.permute.xlu0 %1297
        %1301 = vset.pattern.permute.xlu0 0
        %1302 = vperm.xlu0 %1301, %v1200
        %v1303 = vpop.permute.xlu0 %1302
        %1306 = vset.pattern.permute.xlu0 0
        %1307 = vperm.xlu0 %1306, %v1201
        %v1308 = vpop.permute.xlu0 %1307
        %1311 = vset.pattern.permute.xlu0 0
        %1312 = vperm.xlu0 %1311, %v1202
        %v1313 = vpop.permute.xlu0 %1312
        %1316 = vset.pattern.permute.xlu0 0
        %1317 = vperm.xlu0 %1316, %v1203
        %v1318 = vpop.permute.xlu0 %1317
        %1321 = vset.pattern.permute.xlu0 0
        %1322 = vperm.xlu0 %1321, %v1204
        %v1323 = vpop.permute.xlu0 %1322
        %1326 = vset.pattern.permute.xlu0 0
        %1327 = vperm.xlu0 %1326, %v1205
        %v1328 = vpop.permute.xlu0 %1327
        %1331 = vset.pattern.permute.xlu0 0
        %1332 = vperm.xlu0 %1331, %v1206
        %v1333 = vpop.permute.xlu0 %1332
        %1336 = vset.pattern.permute.xlu0 0
        %1337 = vperm.xlu0 %1336, %v1207
        %v1338 = vpop.permute.xlu0 %1337
        %1341 = vset.pattern.permute.xlu0 0
        %1342 = vperm.xlu0 %1341, %v1208
        %v1343 = vpop.permute.xlu0 %1342
        %1346 = vset.pattern.permute.xlu0 0
        %1347 = vperm.xlu0 %1346, %v1209
        %v1348 = vpop.permute.xlu0 %1347
        %1351 = vset.pattern.permute.xlu0 0
        %1352 = vperm.xlu0 %1351, %v1210
        %v1353 = vpop.permute.xlu0 %1352
        %1356 = vset.pattern.permute.xlu0 0
        %1357 = vperm.xlu0 %1356, %v1211
        %v1358 = vpop.permute.xlu0 %1357
        %1361 = vset.pattern.permute.xlu0 0
        %1362 = vperm.xlu0 %1361, %v1212
        %v1363 = vpop.permute.xlu0 %1362
        %1366 = vset.pattern.permute.xlu0 0
        %1367 = vperm.xlu0 %1366, %v1213
        %v1368 = vpop.permute.xlu0 %1367
        %1371 = vset.pattern.permute.xlu0 0
        %1372 = vperm.xlu0 %1371, %v1214
        %v1373 = vpop.permute.xlu0 %1372
        %1376 = vset.pattern.permute.xlu0 0
        %1377 = vperm.xlu0 %1376, %v1215
        %v1378 = vpop.permute.xlu0 %1377
        %1381 = vset.pattern.permute.xlu0 0
        %1382 = vperm.xlu0 %1381, %v1216
        %v1383 = vpop.permute.xlu0 %1382
        %1386 = vset.pattern.permute.xlu0 0
        %1387 = vperm.xlu0 %1386, %v1217
        %v1388 = vpop.permute.xlu0 %1387
        %1391 = vset.pattern.permute.xlu0 0
        %1392 = vperm.xlu0 %1391, %v1218
        %v1393 = vpop.permute.xlu0 %1392
        %v1395 = vmul.f32 %v1029, %v1238
        %v1396 = vmul.f32 %v1032, %v1243
        %v1397 = vmul.f32 %v1037, %v1248
        %v1398 = vmul.f32 %v1040, %v1253
        %v1399 = vmul.f32 %v1045, %v1258
        %v1400 = vmul.f32 %v1048, %v1263
        %v1401 = vmul.f32 %v1053, %v1268
        %v1402 = vmul.f32 %v1056, %v1273
        %v1403 = vmul.f32 %v1061, %v1278
        %v1404 = vmul.f32 %v1064, %v1283
        %v1405 = vmul.f32 %v1069, %v1288
        %v1406 = vmul.f32 %v1072, %v1293
        %v1407 = vmul.f32 %v1077, %v1298
        %v1408 = vmul.f32 %v1080, %v1303
        %v1409 = vmul.f32 %v1085, %v1308
        %v1410 = vmul.f32 %v1088, %v1313
        %v1411 = vmul.f32 %v1093, %v1318
        %v1412 = vmul.f32 %v1096, %v1323
        %v1413 = vmul.f32 %v1101, %v1328
        %v1414 = vmul.f32 %v1104, %v1333
        %v1415 = vmul.f32 %v1109, %v1338
        %v1416 = vmul.f32 %v1112, %v1343
        %v1417 = vmul.f32 %v1117, %v1348
        %v1418 = vmul.f32 %v1120, %v1353
        %v1419 = vmul.f32 %v1125, %v1358
        %v1420 = vmul.f32 %v1128, %v1363
        %v1421 = vmul.f32 %v1133, %v1368
        %v1422 = vmul.f32 %v1136, %v1373
        %v1423 = vmul.f32 %v1141, %v1378
        %v1424 = vmul.f32 %v1144, %v1383
        %v1425 = vmul.f32 %v1149, %v1388
        %v1426 = vmul.f32 %v1152, %v1393
        %v1459 = vunpack.c.l.b16 %v289
        %v1460 = vunpack.c.l.b16 %v290
        %v1461 = vunpack.c.l.b16 %v291
        %v1462 = vunpack.c.l.b16 %v292
        %v1463 = vunpack.c.l.b16 %v293
        %v1464 = vunpack.c.l.b16 %v294
        %v1465 = vunpack.c.l.b16 %v295
        %v1466 = vunpack.c.l.b16 %v296
        %v1467 = vunpack.c.l.b16 %v297
        %v1468 = vunpack.c.l.b16 %v298
        %v1469 = vunpack.c.l.b16 %v299
        %v1470 = vunpack.c.l.b16 %v300
        %v1471 = vunpack.c.l.b16 %v301
        %v1472 = vunpack.c.l.b16 %v302
        %v1473 = vunpack.c.l.b16 %v303
        %v1474 = vunpack.c.l.b16 %v304
        %v1475 = vunpack.c.l.b16 %v305
        %v1476 = vunpack.c.l.b16 %v306
        %v1477 = vunpack.c.l.b16 %v307
        %v1478 = vunpack.c.l.b16 %v308
        %v1479 = vunpack.c.l.b16 %v309
        %v1480 = vunpack.c.l.b16 %v310
        %v1481 = vunpack.c.l.b16 %v311
        %v1482 = vunpack.c.l.b16 %v312
        %v1483 = vunpack.c.l.b16 %v313
        %v1484 = vunpack.c.l.b16 %v314
        %v1485 = vunpack.c.l.b16 %v315
        %v1486 = vunpack.c.l.b16 %v316
        %v1487 = vunpack.c.l.b16 %v317
        %v1488 = vunpack.c.l.b16 %v318
        %v1489 = vunpack.c.l.b16 %v319
        %v1490 = vunpack.c.l.b16 %v320
        %v1491 = vpack.c.b16 %v1460, %v1459
        %v1492 = vpack.c.b16 %v1462, %v1461
        %v1493 = vpack.c.b16 %v1464, %v1463
        %v1494 = vpack.c.b16 %v1466, %v1465
        %v1495 = vpack.c.b16 %v1468, %v1467
        %v1496 = vpack.c.b16 %v1470, %v1469
        %v1497 = vpack.c.b16 %v1472, %v1471
        %v1498 = vpack.c.b16 %v1474, %v1473
        %v1499 = vpack.c.b16 %v1476, %v1475
        %v1500 = vpack.c.b16 %v1478, %v1477
        %v1501 = vpack.c.b16 %v1480, %v1479
        %v1502 = vpack.c.b16 %v1482, %v1481
        %v1503 = vpack.c.b16 %v1484, %v1483
        %v1504 = vpack.c.b16 %v1486, %v1485
        %v1505 = vpack.c.b16 %v1488, %v1487
        %v1506 = vpack.c.b16 %v1490, %v1489
        %v1539 = vunpack.c.l.b16 %v1219
        %v1540 = vunpack.c.l.b16 %v1220
        %v1541 = vunpack.c.l.b16 %v1221
        %v1542 = vunpack.c.l.b16 %v1222
        %v1543 = vunpack.c.l.b16 %v1223
        %v1544 = vunpack.c.l.b16 %v1224
        %v1545 = vunpack.c.l.b16 %v1225
        %v1546 = vunpack.c.l.b16 %v1226
        %v1547 = vunpack.c.l.b16 %v1227
        %v1548 = vunpack.c.l.b16 %v1228
        %v1549 = vunpack.c.l.b16 %v1229
        %v1550 = vunpack.c.l.b16 %v1230
        %v1551 = vunpack.c.l.b16 %v1231
        %v1552 = vunpack.c.l.b16 %v1232
        %v1553 = vunpack.c.l.b16 %v1233
        %v1554 = vunpack.c.l.b16 %v1234
        %v1555 = vpack.c.b16 %v1540, %v1539
        %v1556 = vpack.c.b16 %v1542, %v1541
        %v1557 = vpack.c.b16 %v1544, %v1543
        %v1558 = vpack.c.b16 %v1546, %v1545
        %v1559 = vpack.c.b16 %v1548, %v1547
        %v1560 = vpack.c.b16 %v1550, %v1549
        %v1561 = vpack.c.b16 %v1552, %v1551
        %v1562 = vpack.c.b16 %v1554, %v1553
        %1571 = vmatprep.subr.bf16.mxu0 0
        %1572 = vmatpush1.bf16.msra.mxu0 %v1562
        %1573 = vmatprep.subr.bf16.mxu0 0
        %1574 = vmatpush1.bf16.msra.mxu0 %v1561
        %1575 = vmatprep.subr.bf16.mxu0 0
        %1576 = vmatpush1.bf16.msra.mxu0 %v1560
        %1577 = vmatprep.subr.bf16.mxu0 0
        %1578 = vmatpush1.bf16.msra.mxu0 %v1559
        %1579 = vmatprep.subr.bf16.mxu0 0
        %1580 = vmatpush1.bf16.msra.mxu0 %v1558
        %1581 = vmatprep.subr.bf16.mxu0 0
        %1582 = vmatpush1.bf16.msra.mxu0 %v1557
        %1583 = vmatprep.subr.bf16.mxu0 0
        %1584 = vmatpush1.bf16.msra.mxu0 %v1556
        %1585 = vmatprep.subr.bf16.mxu0 0
        %1586 = vmatpush1.bf16.msra.mxu0 %v1555
        %1587 = vmatprep.subr.bf16.mxu0 0
        %1588 = vmatpush2.bf16.msra.mxu0 0
        %1589 = vmatprep.subr.bf16.mxu0 0
        %1590 = vmatpush2.bf16.msra.mxu0 0
        %1591 = vmatprep.subr.bf16.mxu0 0
        %1592 = vmatpush2.bf16.msra.mxu0 0
        %1593 = vmatprep.subr.bf16.mxu0 0
        %1594 = vmatpush2.bf16.msra.mxu0 0
        %1595 = vmatprep.subr.bf16.mxu0 0
        %1596 = vmatpush2.bf16.msra.mxu0 0
        %1597 = vmatprep.subr.bf16.mxu0 0
        %1598 = vmatpush2.bf16.msra.mxu0 0
        %1599 = vmatprep.subr.bf16.mxu0 0
        %1600 = vmatpush2.bf16.msra.mxu0 0
        %1601 = vmatprep.subr.bf16.mxu0 0
        %1602 = vmatpush2.bf16.msra.mxu0 0
        %1603 = vmatprep.mubr.bf16.mxu0 0
        %1604 = vmatmul.mubr.bf16.gmra.mxu0 %v1491
        %v1605 = vpop.f32.mrf.mxu0
        %v1606 = vadd.f32 %v1395, %v1605
        %v1607 = vpop.f32.mrf.mxu0
        %v1608 = vpop.f32.mrf.mxu0
        %v1609 = vadd.f32 %v1396, %v1608
        %v1610 = vpop.f32.mrf.mxu0
        %1611 = vmatprep.mubr.bf16.mxu0 0
        %1612 = vmatmul.mubr.bf16.gmra.mxu0 %v1492
        %v1613 = vpop.f32.mrf.mxu0
        %v1614 = vadd.f32 %v1397, %v1613
        %v1615 = vpop.f32.mrf.mxu0
        %v1616 = vpop.f32.mrf.mxu0
        %v1617 = vadd.f32 %v1398, %v1616
        %v1618 = vpop.f32.mrf.mxu0
        %1619 = vmatprep.mubr.bf16.mxu0 0
        %1620 = vmatmul.mubr.bf16.gmra.mxu0 %v1493
        %v1621 = vpop.f32.mrf.mxu0
        %v1622 = vadd.f32 %v1399, %v1621
        %v1623 = vpop.f32.mrf.mxu0
        %v1624 = vpop.f32.mrf.mxu0
        %v1625 = vadd.f32 %v1400, %v1624
        %v1626 = vpop.f32.mrf.mxu0
        %1627 = vmatprep.mubr.bf16.mxu0 0
        %1628 = vmatmul.mubr.bf16.gmra.mxu0 %v1494
        %v1629 = vpop.f32.mrf.mxu0
        %v1630 = vadd.f32 %v1401, %v1629
        %v1631 = vpop.f32.mrf.mxu0
        %v1632 = vpop.f32.mrf.mxu0
        %v1633 = vadd.f32 %v1402, %v1632
        %v1634 = vpop.f32.mrf.mxu0
        %1635 = vmatprep.mubr.bf16.mxu0 0
        %1636 = vmatmul.mubr.bf16.gmra.mxu0 %v1495
        %v1637 = vpop.f32.mrf.mxu0
        %v1638 = vadd.f32 %v1403, %v1637
        %v1639 = vpop.f32.mrf.mxu0
        %v1640 = vpop.f32.mrf.mxu0
        %v1641 = vadd.f32 %v1404, %v1640
        %v1642 = vpop.f32.mrf.mxu0
        %1643 = vmatprep.mubr.bf16.mxu0 0
        %1644 = vmatmul.mubr.bf16.gmra.mxu0 %v1496
        %v1645 = vpop.f32.mrf.mxu0
        %v1646 = vadd.f32 %v1405, %v1645
        %v1647 = vpop.f32.mrf.mxu0
        %v1648 = vpop.f32.mrf.mxu0
        %v1649 = vadd.f32 %v1406, %v1648
        %v1650 = vpop.f32.mrf.mxu0
        %1651 = vmatprep.mubr.bf16.mxu0 0
        %1652 = vmatmul.mubr.bf16.gmra.mxu0 %v1497
        %v1653 = vpop.f32.mrf.mxu0
        %v1654 = vadd.f32 %v1407, %v1653
        %v1655 = vpop.f32.mrf.mxu0
        %v1656 = vpop.f32.mrf.mxu0
        %v1657 = vadd.f32 %v1408, %v1656
        %v1658 = vpop.f32.mrf.mxu0
        %1659 = vmatprep.mubr.bf16.mxu0 0
        %1660 = vmatmul.mubr.bf16.gmra.mxu0 %v1498
        %v1661 = vpop.f32.mrf.mxu0
        %v1662 = vadd.f32 %v1409, %v1661
        %v1663 = vpop.f32.mrf.mxu0
        %v1664 = vpop.f32.mrf.mxu0
        %v1665 = vadd.f32 %v1410, %v1664
        %v1666 = vpop.f32.mrf.mxu0
        %1667 = vmatprep.mubr.bf16.mxu0 0
        %1668 = vmatmul.mubr.bf16.gmra.mxu0 %v1499
        %v1669 = vpop.f32.mrf.mxu0
        %v1670 = vadd.f32 %v1411, %v1669
        %v1671 = vpop.f32.mrf.mxu0
        %v1672 = vpop.f32.mrf.mxu0
        %v1673 = vadd.f32 %v1412, %v1672
        %v1674 = vpop.f32.mrf.mxu0
        %1675 = vmatprep.mubr.bf16.mxu0 0
        %1676 = vmatmul.mubr.bf16.gmra.mxu0 %v1500
        %v1677 = vpop.f32.mrf.mxu0
        %v1678 = vadd.f32 %v1413, %v1677
        %v1679 = vpop.f32.mrf.mxu0
        %v1680 = vpop.f32.mrf.mxu0
        %v1681 = vadd.f32 %v1414, %v1680
        %v1682 = vpop.f32.mrf.mxu0
        %1683 = vmatprep.mubr.bf16.mxu0 0
        %1684 = vmatmul.mubr.bf16.gmra.mxu0 %v1501
        %v1685 = vpop.f32.mrf.mxu0
        %v1686 = vadd.f32 %v1415, %v1685
        %v1687 = vpop.f32.mrf.mxu0
        %v1688 = vpop.f32.mrf.mxu0
        %v1689 = vadd.f32 %v1416, %v1688
        %v1690 = vpop.f32.mrf.mxu0
        %1691 = vmatprep.mubr.bf16.mxu0 0
        %1692 = vmatmul.mubr.bf16.gmra.mxu0 %v1502
        %v1693 = vpop.f32.mrf.mxu0
        %v1694 = vadd.f32 %v1417, %v1693
        %v1695 = vpop.f32.mrf.mxu0
        %v1696 = vpop.f32.mrf.mxu0
        %v1697 = vadd.f32 %v1418, %v1696
        %v1698 = vpop.f32.mrf.mxu0
        %1699 = vmatprep.mubr.bf16.mxu0 0
        %1700 = vmatmul.mubr.bf16.gmra.mxu0 %v1503
        %v1701 = vpop.f32.mrf.mxu0
        %v1702 = vadd.f32 %v1419, %v1701
        %v1703 = vpop.f32.mrf.mxu0
        %v1704 = vpop.f32.mrf.mxu0
        %v1705 = vadd.f32 %v1420, %v1704
        %v1706 = vpop.f32.mrf.mxu0
        %1707 = vmatprep.mubr.bf16.mxu0 0
        %1708 = vmatmul.mubr.bf16.gmra.mxu0 %v1504
        %v1709 = vpop.f32.mrf.mxu0
        %v1710 = vadd.f32 %v1421, %v1709
        %v1711 = vpop.f32.mrf.mxu0
        %v1712 = vpop.f32.mrf.mxu0
        %v1713 = vadd.f32 %v1422, %v1712
        %v1714 = vpop.f32.mrf.mxu0
        %1715 = vmatprep.mubr.bf16.mxu0 0
        %1716 = vmatmul.mubr.bf16.gmra.mxu0 %v1505
        %v1717 = vpop.f32.mrf.mxu0
        %v1718 = vadd.f32 %v1423, %v1717
        %v1719 = vpop.f32.mrf.mxu0
        %v1720 = vpop.f32.mrf.mxu0
        %v1721 = vadd.f32 %v1424, %v1720
        %v1722 = vpop.f32.mrf.mxu0
        %1723 = vmatprep.mubr.bf16.mxu0 0
        %1724 = vmatmul.mubr.bf16.gmra.mxu0 %v1506
        %v1725 = vpop.f32.mrf.mxu0
        %v1726 = vadd.f32 %v1425, %v1725
        %v1727 = vpop.f32.mrf.mxu0
        %v1728 = vpop.f32.mrf.mxu0
        %v1729 = vadd.f32 %v1426, %v1728
        %v1730 = vpop.f32.mrf.mxu0
        %1731 = vdwg.mxu0
        %v1732 = vld [vmem:[#allocation8] sm:$0x1]
        %v1734 = vlaneseq
        %v1735 = vshrl.u32 %v1734, 7
        %v1736 = vsub.s32 0, %v1735
        %v1737 = vrot.slane %v1732, %v1736
        %v1739 = vadd.f32 %v1606, %v1737
        %v1740 = vadd.f32 %v1609, %v1737
        %v1741 = vadd.f32 %v1614, %v1737
        %v1742 = vadd.f32 %v1617, %v1737
        %v1743 = vadd.f32 %v1622, %v1737
        %v1744 = vadd.f32 %v1625, %v1737
        %v1745 = vadd.f32 %v1630, %v1737
        %v1746 = vadd.f32 %v1633, %v1737
        %v1747 = vadd.f32 %v1638, %v1737
        %v1748 = vadd.f32 %v1641, %v1737
        %v1749 = vadd.f32 %v1646, %v1737
        %v1750 = vadd.f32 %v1649, %v1737
        %v1751 = vadd.f32 %v1654, %v1737
        %v1752 = vadd.f32 %v1657, %v1737
        %v1753 = vadd.f32 %v1662, %v1737
        %v1754 = vadd.f32 %v1665, %v1737
        %v1755 = vadd.f32 %v1670, %v1737
        %v1756 = vadd.f32 %v1673, %v1737
        %v1757 = vadd.f32 %v1678, %v1737
        %v1758 = vadd.f32 %v1681, %v1737
        %v1759 = vadd.f32 %v1686, %v1737
        %v1760 = vadd.f32 %v1689, %v1737
        %v1761 = vadd.f32 %v1694, %v1737
        %v1762 = vadd.f32 %v1697, %v1737
        %v1763 = vadd.f32 %v1702, %v1737
        %v1764 = vadd.f32 %v1705, %v1737
        %v1765 = vadd.f32 %v1710, %v1737
        %v1766 = vadd.f32 %v1713, %v1737
        %v1767 = vadd.f32 %v1718, %v1737
        %v1768 = vadd.f32 %v1721, %v1737
        %v1769 = vadd.f32 %v1726, %v1737
        %v1770 = vadd.f32 %v1729, %v1737
        %v1771 = vmax.f32 %v1739, 0.0
        %v1772 = vmax.f32 %v1740, 0.0
        %v1773 = vmax.f32 %v1741, 0.0
        %v1774 = vmax.f32 %v1742, 0.0
        %v1775 = vmax.f32 %v1743, 0.0
        %v1776 = vmax.f32 %v1744, 0.0
        %v1777 = vmax.f32 %v1745, 0.0
        %v1778 = vmax.f32 %v1746, 0.0
        %v1779 = vmax.f32 %v1747, 0.0
        %v1780 = vmax.f32 %v1748, 0.0
        %v1781 = vmax.f32 %v1749, 0.0
        %v1782 = vmax.f32 %v1750, 0.0
        %v1783 = vmax.f32 %v1751, 0.0
        %v1784 = vmax.f32 %v1752, 0.0
        %v1785 = vmax.f32 %v1753, 0.0
        %v1786 = vmax.f32 %v1754, 0.0
        %v1787 = vmax.f32 %v1755, 0.0
        %v1788 = vmax.f32 %v1756, 0.0
        %v1789 = vmax.f32 %v1757, 0.0
        %v1790 = vmax.f32 %v1758, 0.0
        %v1791 = vmax.f32 %v1759, 0.0
        %v1792 = vmax.f32 %v1760, 0.0
        %v1793 = vmax.f32 %v1761, 0.0
        %v1794 = vmax.f32 %v1762, 0.0
        %v1795 = vmax.f32 %v1763, 0.0
        %v1796 = vmax.f32 %v1764, 0.0
        %v1797 = vmax.f32 %v1765, 0.0
        %v1798 = vmax.f32 %v1766, 0.0
        %v1799 = vmax.f32 %v1767, 0.0
        %v1800 = vmax.f32 %v1768, 0.0
        %v1801 = vmax.f32 %v1769, 0.0
        %v1802 = vmax.f32 %v1770, 0.0
        %v1803 = vpack.c.bf16 %v1772, %v1771
        %v1804 = vpack.c.bf16 %v1774, %v1773
        %v1805 = vpack.c.bf16 %v1776, %v1775
        %v1806 = vpack.c.bf16 %v1778, %v1777
        %v1807 = vpack.c.bf16 %v1780, %v1779
        %v1808 = vpack.c.bf16 %v1782, %v1781
        %v1809 = vpack.c.bf16 %v1784, %v1783
        %v1810 = vpack.c.bf16 %v1786, %v1785
        %v1811 = vpack.c.bf16 %v1788, %v1787
        %v1812 = vpack.c.bf16 %v1790, %v1789
        %v1813 = vpack.c.bf16 %v1792, %v1791
        %v1814 = vpack.c.bf16 %v1794, %v1793
        %v1815 = vpack.c.bf16 %v1796, %v1795
        %v1816 = vpack.c.bf16 %v1798, %v1797
        %v1817 = vpack.c.bf16 %v1800, %v1799
        %v1818 = vpack.c.bf16 %v1802, %v1801
        %v1819 = vld [vmem:[#allocation7 + $0x100] sm:$0xf]
        %v1820 = vld [vmem:[#allocation7 + $0x104] sm:$0xf]
        %v1821 = vld [vmem:[#allocation7 + $0x108] sm:$0xf]
        %v1822 = vld [vmem:[#allocation7 + $0x10c] sm:$0xf]
        %v1823 = vld [vmem:[#allocation7 + $0x110] sm:$0xf]
        %v1824 = vld [vmem:[#allocation7 + $0x114] sm:$0xf]
        %v1825 = vld [vmem:[#allocation7 + $0x118] sm:$0xf]
        %v1826 = vld [vmem:[#allocation7 + $0x11c] sm:$0xf]
        %v1827 = vld [vmem:[#allocation7 + $0x120] sm:$0xf]
        %v1828 = vld [vmem:[#allocation7 + $0x124] sm:$0xf]
        %v1829 = vld [vmem:[#allocation7 + $0x128] sm:$0xf]
        %v1830 = vld [vmem:[#allocation7 + $0x12c] sm:$0xf]
        %v1831 = vld [vmem:[#allocation7 + $0x130] sm:$0xf]
        %v1832 = vld [vmem:[#allocation7 + $0x134] sm:$0xf]
        %v1833 = vld [vmem:[#allocation7 + $0x138] sm:$0xf]
        %v1834 = vld [vmem:[#allocation7 + $0x13c] sm:$0xf]
        %v1835 = vld [vmem:[#allocation8 + $0x3] sm:$0x1]
        %v1837 = vlaneseq
        %v1838 = vshrl.u32 %v1837, 7
        %v1839 = vsub.s32 0, %v1838
        %v1840 = vrot.slane %v1835, %v1839
        %v1858 = vunpack.c.l.b16 %v1819
        %v1859 = vunpack.c.l.b16 %v1820
        %v1860 = vunpack.c.l.b16 %v1821
        %v1861 = vunpack.c.l.b16 %v1822
        %v1862 = vunpack.c.l.b16 %v1823
        %v1863 = vunpack.c.l.b16 %v1824
        %v1864 = vunpack.c.l.b16 %v1825
        %v1865 = vunpack.c.l.b16 %v1826
        %v1866 = vunpack.c.l.b16 %v1827
        %v1867 = vunpack.c.l.b16 %v1828
        %v1868 = vunpack.c.l.b16 %v1829
        %v1869 = vunpack.c.l.b16 %v1830
        %v1870 = vunpack.c.l.b16 %v1831
        %v1871 = vunpack.c.l.b16 %v1832
        %v1872 = vunpack.c.l.b16 %v1833
        %v1873 = vunpack.c.l.b16 %v1834
        %v1874 = vpack.c.b16 %v1859, %v1858
        %v1875 = vpack.c.b16 %v1861, %v1860
        %v1876 = vpack.c.b16 %v1863, %v1862
        %v1877 = vpack.c.b16 %v1865, %v1864
        %v1878 = vpack.c.b16 %v1867, %v1866
        %v1879 = vpack.c.b16 %v1869, %v1868
        %v1880 = vpack.c.b16 %v1871, %v1870
        %v1881 = vpack.c.b16 %v1873, %v1872
        %1890 = vmatprep.subr.bf16.mxu0 0
        %1891 = vmatpush1.bf16.msra.mxu0 %v1881
        %1892 = vmatprep.subr.bf16.mxu0 0
        %1893 = vmatpush1.bf16.msra.mxu0 %v1880
        %1894 = vmatprep.subr.bf16.mxu0 0
        %1895 = vmatpush1.bf16.msra.mxu0 %v1879
        %1896 = vmatprep.subr.bf16.mxu0 0
        %1897 = vmatpush1.bf16.msra.mxu0 %v1878
        %1898 = vmatprep.subr.bf16.mxu0 0
        %1899 = vmatpush1.bf16.msra.mxu0 %v1877
        %1900 = vmatprep.subr.bf16.mxu0 0
        %1901 = vmatpush1.bf16.msra.mxu0 %v1876
        %1902 = vmatprep.subr.bf16.mxu0 0
        %1903 = vmatpush1.bf16.msra.mxu0 %v1875
        %1904 = vmatprep.subr.bf16.mxu0 0
        %1905 = vmatpush1.bf16.msra.mxu0 %v1874
        %1906 = vmatprep.subr.bf16.mxu0 0
        %1907 = vmatpush2.bf16.msra.mxu0 0
        %1908 = vmatprep.subr.bf16.mxu0 0
        %1909 = vmatpush2.bf16.msra.mxu0 0
        %1910 = vmatprep.subr.bf16.mxu0 0
        %1911 = vmatpush2.bf16.msra.mxu0 0
        %1912 = vmatprep.subr.bf16.mxu0 0
        %1913 = vmatpush2.bf16.msra.mxu0 0
        %1914 = vmatprep.subr.bf16.mxu0 0
        %1915 = vmatpush2.bf16.msra.mxu0 0
        %1916 = vmatprep.subr.bf16.mxu0 0
        %1917 = vmatpush2.bf16.msra.mxu0 0
        %1918 = vmatprep.subr.bf16.mxu0 0
        %1919 = vmatpush2.bf16.msra.mxu0 0
        %1920 = vmatprep.subr.bf16.mxu0 0
        %1921 = vmatpush2.bf16.msra.mxu0 0
        %1922 = vmatprep.mubr.bf16.mxu0 0
        %1923 = vmatmul.mubr.bf16.gmra.mxu0 %v1491
        %v1924 = vpop.f32.mrf.mxu0
        %v1925 = vadd.f32 %v1840, %v1924
        %v1926 = vpop.f32.mrf.mxu0
        %v1927 = vpop.f32.mrf.mxu0
        %v1928 = vadd.f32 %v1840, %v1927
        %v1929 = vpop.f32.mrf.mxu0
        %1930 = vmatprep.mubr.bf16.mxu0 0
        %1931 = vmatmul.mubr.bf16.gmra.mxu0 %v1492
        %v1932 = vpop.f32.mrf.mxu0
        %v1933 = vadd.f32 %v1840, %v1932
        %v1934 = vpop.f32.mrf.mxu0
        %v1935 = vpop.f32.mrf.mxu0
        %v1936 = vadd.f32 %v1840, %v1935
        %v1937 = vpop.f32.mrf.mxu0
        %1938 = vmatprep.mubr.bf16.mxu0 0
        %1939 = vmatmul.mubr.bf16.gmra.mxu0 %v1493
        %v1940 = vpop.f32.mrf.mxu0
        %v1941 = vadd.f32 %v1840, %v1940
        %v1942 = vpop.f32.mrf.mxu0
        %v1943 = vpop.f32.mrf.mxu0
        %v1944 = vadd.f32 %v1840, %v1943
        %v1945 = vpop.f32.mrf.mxu0
        %1946 = vmatprep.mubr.bf16.mxu0 0
        %1947 = vmatmul.mubr.bf16.gmra.mxu0 %v1494
        %v1948 = vpop.f32.mrf.mxu0
        %v1949 = vadd.f32 %v1840, %v1948
        %v1950 = vpop.f32.mrf.mxu0
        %v1951 = vpop.f32.mrf.mxu0
        %v1952 = vadd.f32 %v1840, %v1951
        %v1953 = vpop.f32.mrf.mxu0
        %1954 = vmatprep.mubr.bf16.mxu0 0
        %1955 = vmatmul.mubr.bf16.gmra.mxu0 %v1495
        %v1956 = vpop.f32.mrf.mxu0
        %v1957 = vadd.f32 %v1840, %v1956
        %v1958 = vpop.f32.mrf.mxu0
        %v1959 = vpop.f32.mrf.mxu0
        %v1960 = vadd.f32 %v1840, %v1959
        %v1961 = vpop.f32.mrf.mxu0
        %1962 = vmatprep.mubr.bf16.mxu0 0
        %1963 = vmatmul.mubr.bf16.gmra.mxu0 %v1496
        %v1964 = vpop.f32.mrf.mxu0
        %v1965 = vadd.f32 %v1840, %v1964
        %v1966 = vpop.f32.mrf.mxu0
        %v1967 = vpop.f32.mrf.mxu0
        %v1968 = vadd.f32 %v1840, %v1967
        %v1969 = vpop.f32.mrf.mxu0
        %1970 = vmatprep.mubr.bf16.mxu0 0
        %1971 = vmatmul.mubr.bf16.gmra.mxu0 %v1497
        %v1972 = vpop.f32.mrf.mxu0
        %v1973 = vadd.f32 %v1840, %v1972
        %v1974 = vpop.f32.mrf.mxu0
        %v1975 = vpop.f32.mrf.mxu0
        %v1976 = vadd.f32 %v1840, %v1975
        %v1977 = vpop.f32.mrf.mxu0
        %1978 = vmatprep.mubr.bf16.mxu0 0
        %1979 = vmatmul.mubr.bf16.gmra.mxu0 %v1498
        %v1980 = vpop.f32.mrf.mxu0
        %v1981 = vadd.f32 %v1840, %v1980
        %v1982 = vpop.f32.mrf.mxu0
        %v1983 = vpop.f32.mrf.mxu0
        %v1984 = vadd.f32 %v1840, %v1983
        %v1985 = vpop.f32.mrf.mxu0
        %1986 = vmatprep.mubr.bf16.mxu0 0
        %1987 = vmatmul.mubr.bf16.gmra.mxu0 %v1499
        %v1988 = vpop.f32.mrf.mxu0
        %v1989 = vadd.f32 %v1840, %v1988
        %v1990 = vpop.f32.mrf.mxu0
        %v1991 = vpop.f32.mrf.mxu0
        %v1992 = vadd.f32 %v1840, %v1991
        %v1993 = vpop.f32.mrf.mxu0
        %1994 = vmatprep.mubr.bf16.mxu0 0
        %1995 = vmatmul.mubr.bf16.gmra.mxu0 %v1500
        %v1996 = vpop.f32.mrf.mxu0
        %v1997 = vadd.f32 %v1840, %v1996
        %v1998 = vpop.f32.mrf.mxu0
        %v1999 = vpop.f32.mrf.mxu0
        %v2000 = vadd.f32 %v1840, %v1999
        %v2001 = vpop.f32.mrf.mxu0
        %2002 = vmatprep.mubr.bf16.mxu0 0
        %2003 = vmatmul.mubr.bf16.gmra.mxu0 %v1501
        %v2004 = vpop.f32.mrf.mxu0
        %v2005 = vadd.f32 %v1840, %v2004
        %v2006 = vpop.f32.mrf.mxu0
        %v2007 = vpop.f32.mrf.mxu0
        %v2008 = vadd.f32 %v1840, %v2007
        %v2009 = vpop.f32.mrf.mxu0
        %2010 = vmatprep.mubr.bf16.mxu0 0
        %2011 = vmatmul.mubr.bf16.gmra.mxu0 %v1502
        %v2012 = vpop.f32.mrf.mxu0
        %v2013 = vadd.f32 %v1840, %v2012
        %v2014 = vpop.f32.mrf.mxu0
        %v2015 = vpop.f32.mrf.mxu0
        %v2016 = vadd.f32 %v1840, %v2015
        %v2017 = vpop.f32.mrf.mxu0
        %2018 = vmatprep.mubr.bf16.mxu0 0
        %2019 = vmatmul.mubr.bf16.gmra.mxu0 %v1503
        %v2020 = vpop.f32.mrf.mxu0
        %v2021 = vadd.f32 %v1840, %v2020
        %v2022 = vpop.f32.mrf.mxu0
        %v2023 = vpop.f32.mrf.mxu0
        %v2024 = vadd.f32 %v1840, %v2023
        %v2025 = vpop.f32.mrf.mxu0
        %2026 = vmatprep.mubr.bf16.mxu0 0
        %2027 = vmatmul.mubr.bf16.gmra.mxu0 %v1504
        %v2028 = vpop.f32.mrf.mxu0
        %v2029 = vadd.f32 %v1840, %v2028
        %v2030 = vpop.f32.mrf.mxu0
        %v2031 = vpop.f32.mrf.mxu0
        %v2032 = vadd.f32 %v1840, %v2031
        %v2033 = vpop.f32.mrf.mxu0
        %2034 = vmatprep.mubr.bf16.mxu0 0
        %2035 = vmatmul.mubr.bf16.gmra.mxu0 %v1505
        %v2036 = vpop.f32.mrf.mxu0
        %v2037 = vadd.f32 %v1840, %v2036
        %v2038 = vpop.f32.mrf.mxu0
        %v2039 = vpop.f32.mrf.mxu0
        %v2040 = vadd.f32 %v1840, %v2039
        %v2041 = vpop.f32.mrf.mxu0
        %2042 = vmatprep.mubr.bf16.mxu0 0
        %2043 = vmatmul.mubr.bf16.gmra.mxu0 %v1506
        %v2044 = vpop.f32.mrf.mxu0
        %v2045 = vadd.f32 %v1840, %v2044
        %v2046 = vpop.f32.mrf.mxu0
        %v2047 = vpop.f32.mrf.mxu0
        %v2048 = vadd.f32 %v1840, %v2047
        %v2049 = vpop.f32.mrf.mxu0
        %2050 = vdwg.mxu0
        %v2051 = vmax.f32 %v1925, 0.0
        %v2052 = vmax.f32 %v1928, 0.0
        %v2053 = vmax.f32 %v1933, 0.0
        %v2054 = vmax.f32 %v1936, 0.0
        %v2055 = vmax.f32 %v1941, 0.0
        %v2056 = vmax.f32 %v1944, 0.0
        %v2057 = vmax.f32 %v1949, 0.0
        %v2058 = vmax.f32 %v1952, 0.0
        %v2059 = vmax.f32 %v1957, 0.0
        %v2060 = vmax.f32 %v1960, 0.0
        %v2061 = vmax.f32 %v1965, 0.0
        %v2062 = vmax.f32 %v1968, 0.0
        %v2063 = vmax.f32 %v1973, 0.0
        %v2064 = vmax.f32 %v1976, 0.0
        %v2065 = vmax.f32 %v1981, 0.0
        %v2066 = vmax.f32 %v1984, 0.0
        %v2067 = vmax.f32 %v1989, 0.0
        %v2068 = vmax.f32 %v1992, 0.0
        %v2069 = vmax.f32 %v1997, 0.0
        %v2070 = vmax.f32 %v2000, 0.0
        %v2071 = vmax.f32 %v2005, 0.0
        %v2072 = vmax.f32 %v2008, 0.0
        %v2073 = vmax.f32 %v2013, 0.0
        %v2074 = vmax.f32 %v2016, 0.0
        %v2075 = vmax.f32 %v2021, 0.0
        %v2076 = vmax.f32 %v2024, 0.0
        %v2077 = vmax.f32 %v2029, 0.0
        %v2078 = vmax.f32 %v2032, 0.0
        %v2079 = vmax.f32 %v2037, 0.0
        %v2080 = vmax.f32 %v2040, 0.0
        %v2081 = vmax.f32 %v2045, 0.0
        %v2082 = vmax.f32 %v2048, 0.0
        %v2083 = vpack.c.bf16 %v2052, %v2051
        %v2084 = vpack.c.bf16 %v2054, %v2053
        %v2085 = vpack.c.bf16 %v2056, %v2055
        %v2086 = vpack.c.bf16 %v2058, %v2057
        %v2087 = vpack.c.bf16 %v2060, %v2059
        %v2088 = vpack.c.bf16 %v2062, %v2061
        %v2089 = vpack.c.bf16 %v2064, %v2063
        %v2090 = vpack.c.bf16 %v2066, %v2065
        %v2091 = vpack.c.bf16 %v2068, %v2067
        %v2092 = vpack.c.bf16 %v2070, %v2069
        %v2093 = vpack.c.bf16 %v2072, %v2071
        %v2094 = vpack.c.bf16 %v2074, %v2073
        %v2095 = vpack.c.bf16 %v2076, %v2075
        %v2096 = vpack.c.bf16 %v2078, %v2077
        %v2097 = vpack.c.bf16 %v2080, %v2079
        %v2098 = vpack.c.bf16 %v2082, %v2081
        %v2099 = vld [vmem:[#allocation7 + $0x140] sm:$0xf]
        %v2100 = vld [vmem:[#allocation7 + $0x144] sm:$0xf]
        %v2101 = vld [vmem:[#allocation7 + $0x148] sm:$0xf]
        %v2102 = vld [vmem:[#allocation7 + $0x14c] sm:$0xf]
        %v2103 = vld [vmem:[#allocation7 + $0x150] sm:$0xf]
        %v2104 = vld [vmem:[#allocation7 + $0x154] sm:$0xf]
        %v2105 = vld [vmem:[#allocation7 + $0x158] sm:$0xf]
        %v2106 = vld [vmem:[#allocation7 + $0x15c] sm:$0xf]
        %v2107 = vld [vmem:[#allocation7 + $0x160] sm:$0xf]
        %v2108 = vld [vmem:[#allocation7 + $0x164] sm:$0xf]
        %v2109 = vld [vmem:[#allocation7 + $0x168] sm:$0xf]
        %v2110 = vld [vmem:[#allocation7 + $0x16c] sm:$0xf]
        %v2111 = vld [vmem:[#allocation7 + $0x170] sm:$0xf]
        %v2112 = vld [vmem:[#allocation7 + $0x174] sm:$0xf]
        %v2113 = vld [vmem:[#allocation7 + $0x178] sm:$0xf]
        %v2114 = vld [vmem:[#allocation7 + $0x17c] sm:$0xf]
        %v2115 = vld [vmem:[#allocation8 + $0x1] sm:$0x1]
        %v2117 = vlaneseq
        %v2118 = vshrl.u32 %v2117, 7
        %v2119 = vsub.s32 0, %v2118
        %v2120 = vrot.slane %v2115, %v2119
        %v2138 = vunpack.c.l.b16 %v2099
        %v2139 = vunpack.c.l.b16 %v2100
        %v2140 = vunpack.c.l.b16 %v2101
        %v2141 = vunpack.c.l.b16 %v2102
        %v2142 = vunpack.c.l.b16 %v2103
        %v2143 = vunpack.c.l.b16 %v2104
        %v2144 = vunpack.c.l.b16 %v2105
        %v2145 = vunpack.c.l.b16 %v2106
        %v2146 = vunpack.c.l.b16 %v2107
        %v2147 = vunpack.c.l.b16 %v2108
        %v2148 = vunpack.c.l.b16 %v2109
        %v2149 = vunpack.c.l.b16 %v2110
        %v2150 = vunpack.c.l.b16 %v2111
        %v2151 = vunpack.c.l.b16 %v2112
        %v2152 = vunpack.c.l.b16 %v2113
        %v2153 = vunpack.c.l.b16 %v2114
        %v2154 = vpack.c.b16 %v2139, %v2138
        %v2155 = vpack.c.b16 %v2141, %v2140
        %v2156 = vpack.c.b16 %v2143, %v2142
        %v2157 = vpack.c.b16 %v2145, %v2144
        %v2158 = vpack.c.b16 %v2147, %v2146
        %v2159 = vpack.c.b16 %v2149, %v2148
        %v2160 = vpack.c.b16 %v2151, %v2150
        %v2161 = vpack.c.b16 %v2153, %v2152
        %2170 = vmatprep.subr.bf16.mxu0 0
        %2171 = vmatpush1.bf16.msra.mxu0 %v2161
        %2172 = vmatprep.subr.bf16.mxu0 0
        %2173 = vmatpush1.bf16.msra.mxu0 %v2160
        %2174 = vmatprep.subr.bf16.mxu0 0
        %2175 = vmatpush1.bf16.msra.mxu0 %v2159
        %2176 = vmatprep.subr.bf16.mxu0 0
        %2177 = vmatpush1.bf16.msra.mxu0 %v2158
        %2178 = vmatprep.subr.bf16.mxu0 0
        %2179 = vmatpush1.bf16.msra.mxu0 %v2157
        %2180 = vmatprep.subr.bf16.mxu0 0
        %2181 = vmatpush1.bf16.msra.mxu0 %v2156
        %2182 = vmatprep.subr.bf16.mxu0 0
        %2183 = vmatpush1.bf16.msra.mxu0 %v2155
        %2184 = vmatprep.subr.bf16.mxu0 0
        %2185 = vmatpush1.bf16.msra.mxu0 %v2154
        %2186 = vmatprep.subr.bf16.mxu0 0
        %2187 = vmatpush2.bf16.msra.mxu0 0
        %2188 = vmatprep.subr.bf16.mxu0 0
        %2189 = vmatpush2.bf16.msra.mxu0 0
        %2190 = vmatprep.subr.bf16.mxu0 0
        %2191 = vmatpush2.bf16.msra.mxu0 0
        %2192 = vmatprep.subr.bf16.mxu0 0
        %2193 = vmatpush2.bf16.msra.mxu0 0
        %2194 = vmatprep.subr.bf16.mxu0 0
        %2195 = vmatpush2.bf16.msra.mxu0 0
        %2196 = vmatprep.subr.bf16.mxu0 0
        %2197 = vmatpush2.bf16.msra.mxu0 0
        %2198 = vmatprep.subr.bf16.mxu0 0
        %2199 = vmatpush2.bf16.msra.mxu0 0
        %2200 = vmatprep.subr.bf16.mxu0 0
        %2201 = vmatpush2.bf16.msra.mxu0 0
        %2202 = vmatprep.mubr.bf16.mxu0 0
        %2203 = vmatmul.mubr.bf16.gmra.mxu0 %v1803
        %v2204 = vpop.f32.mrf.mxu0
        %v2205 = vadd.f32 %v2120, %v2204
        %v2206 = vpop.f32.mrf.mxu0
        %v2207 = vpop.f32.mrf.mxu0
        %v2208 = vadd.f32 %v2120, %v2207
        %v2209 = vpop.f32.mrf.mxu0
        %2210 = vmatprep.mubr.bf16.mxu0 0
        %2211 = vmatmul.mubr.bf16.gmra.mxu0 %v1804
        %v2212 = vpop.f32.mrf.mxu0
        %v2213 = vadd.f32 %v2120, %v2212
        %v2214 = vpop.f32.mrf.mxu0
        %v2215 = vpop.f32.mrf.mxu0
        %v2216 = vadd.f32 %v2120, %v2215
        %v2217 = vpop.f32.mrf.mxu0
        %2218 = vmatprep.mubr.bf16.mxu0 0
        %2219 = vmatmul.mubr.bf16.gmra.mxu0 %v1805
        %v2220 = vpop.f32.mrf.mxu0
        %v2221 = vadd.f32 %v2120, %v2220
        %v2222 = vpop.f32.mrf.mxu0
        %v2223 = vpop.f32.mrf.mxu0
        %v2224 = vadd.f32 %v2120, %v2223
        %v2225 = vpop.f32.mrf.mxu0
        %2226 = vmatprep.mubr.bf16.mxu0 0
        %2227 = vmatmul.mubr.bf16.gmra.mxu0 %v1806
        %v2228 = vpop.f32.mrf.mxu0
        %v2229 = vadd.f32 %v2120, %v2228
        %v2230 = vpop.f32.mrf.mxu0
        %v2231 = vpop.f32.mrf.mxu0
        %v2232 = vadd.f32 %v2120, %v2231
        %v2233 = vpop.f32.mrf.mxu0
        %2234 = vmatprep.mubr.bf16.mxu0 0
        %2235 = vmatmul.mubr.bf16.gmra.mxu0 %v1807
        %v2236 = vpop.f32.mrf.mxu0
        %v2237 = vadd.f32 %v2120, %v2236
        %v2238 = vpop.f32.mrf.mxu0
        %v2239 = vpop.f32.mrf.mxu0
        %v2240 = vadd.f32 %v2120, %v2239
        %v2241 = vpop.f32.mrf.mxu0
        %2242 = vmatprep.mubr.bf16.mxu0 0
        %2243 = vmatmul.mubr.bf16.gmra.mxu0 %v1808
        %v2244 = vpop.f32.mrf.mxu0
        %v2245 = vadd.f32 %v2120, %v2244
        %v2246 = vpop.f32.mrf.mxu0
        %v2247 = vpop.f32.mrf.mxu0
        %v2248 = vadd.f32 %v2120, %v2247
        %v2249 = vpop.f32.mrf.mxu0
        %2250 = vmatprep.mubr.bf16.mxu0 0
        %2251 = vmatmul.mubr.bf16.gmra.mxu0 %v1809
        %v2252 = vpop.f32.mrf.mxu0
        %v2253 = vadd.f32 %v2120, %v2252
        %v2254 = vpop.f32.mrf.mxu0
        %v2255 = vpop.f32.mrf.mxu0
        %v2256 = vadd.f32 %v2120, %v2255
        %v2257 = vpop.f32.mrf.mxu0
        %2258 = vmatprep.mubr.bf16.mxu0 0
        %2259 = vmatmul.mubr.bf16.gmra.mxu0 %v1810
        %v2260 = vpop.f32.mrf.mxu0
        %v2261 = vadd.f32 %v2120, %v2260
        %v2262 = vpop.f32.mrf.mxu0
        %v2263 = vpop.f32.mrf.mxu0
        %v2264 = vadd.f32 %v2120, %v2263
        %v2265 = vpop.f32.mrf.mxu0
        %2266 = vmatprep.mubr.bf16.mxu0 0
        %2267 = vmatmul.mubr.bf16.gmra.mxu0 %v1811
        %v2268 = vpop.f32.mrf.mxu0
        %v2269 = vadd.f32 %v2120, %v2268
        %v2270 = vpop.f32.mrf.mxu0
        %v2271 = vpop.f32.mrf.mxu0
        %v2272 = vadd.f32 %v2120, %v2271
        %v2273 = vpop.f32.mrf.mxu0
        %2274 = vmatprep.mubr.bf16.mxu0 0
        %2275 = vmatmul.mubr.bf16.gmra.mxu0 %v1812
        %v2276 = vpop.f32.mrf.mxu0
        %v2277 = vadd.f32 %v2120, %v2276
        %v2278 = vpop.f32.mrf.mxu0
        %v2279 = vpop.f32.mrf.mxu0
        %v2280 = vadd.f32 %v2120, %v2279
        %v2281 = vpop.f32.mrf.mxu0
        %2282 = vmatprep.mubr.bf16.mxu0 0
        %2283 = vmatmul.mubr.bf16.gmra.mxu0 %v1813
        %v2284 = vpop.f32.mrf.mxu0
        %v2285 = vadd.f32 %v2120, %v2284
        %v2286 = vpop.f32.mrf.mxu0
        %v2287 = vpop.f32.mrf.mxu0
        %v2288 = vadd.f32 %v2120, %v2287
        %v2289 = vpop.f32.mrf.mxu0
        %2290 = vmatprep.mubr.bf16.mxu0 0
        %2291 = vmatmul.mubr.bf16.gmra.mxu0 %v1814
        %v2292 = vpop.f32.mrf.mxu0
        %v2293 = vadd.f32 %v2120, %v2292
        %v2294 = vpop.f32.mrf.mxu0
        %v2295 = vpop.f32.mrf.mxu0
        %v2296 = vadd.f32 %v2120, %v2295
        %v2297 = vpop.f32.mrf.mxu0
        %2298 = vmatprep.mubr.bf16.mxu0 0
        %2299 = vmatmul.mubr.bf16.gmra.mxu0 %v1815
        %v2300 = vpop.f32.mrf.mxu0
        %v2301 = vadd.f32 %v2120, %v2300
        %v2302 = vpop.f32.mrf.mxu0
        %v2303 = vpop.f32.mrf.mxu0
        %v2304 = vadd.f32 %v2120, %v2303
        %v2305 = vpop.f32.mrf.mxu0
        %2306 = vmatprep.mubr.bf16.mxu0 0
        %2307 = vmatmul.mubr.bf16.gmra.mxu0 %v1816
        %v2308 = vpop.f32.mrf.mxu0
        %v2309 = vadd.f32 %v2120, %v2308
        %v2310 = vpop.f32.mrf.mxu0
        %v2311 = vpop.f32.mrf.mxu0
        %v2312 = vadd.f32 %v2120, %v2311
        %v2313 = vpop.f32.mrf.mxu0
        %2314 = vmatprep.mubr.bf16.mxu0 0
        %2315 = vmatmul.mubr.bf16.gmra.mxu0 %v1817
        %v2316 = vpop.f32.mrf.mxu0
        %v2317 = vadd.f32 %v2120, %v2316
        %v2318 = vpop.f32.mrf.mxu0
        %v2319 = vpop.f32.mrf.mxu0
        %v2320 = vadd.f32 %v2120, %v2319
        %v2321 = vpop.f32.mrf.mxu0
        %2322 = vmatprep.mubr.bf16.mxu0 0
        %2323 = vmatmul.mubr.bf16.gmra.mxu0 %v1818
        %v2324 = vpop.f32.mrf.mxu0
        %v2325 = vadd.f32 %v2120, %v2324
        %v2326 = vpop.f32.mrf.mxu0
        %v2327 = vpop.f32.mrf.mxu0
        %v2328 = vadd.f32 %v2120, %v2327
        %v2329 = vpop.f32.mrf.mxu0
        %2330 = vdwg.mxu0
        %v2331 = vmax.f32 %v2205, 0.0
        %v2332 = vmax.f32 %v2208, 0.0
        %v2333 = vmax.f32 %v2213, 0.0
        %v2334 = vmax.f32 %v2216, 0.0
        %v2335 = vmax.f32 %v2221, 0.0
        %v2336 = vmax.f32 %v2224, 0.0
        %v2337 = vmax.f32 %v2229, 0.0
        %v2338 = vmax.f32 %v2232, 0.0
        %v2339 = vmax.f32 %v2237, 0.0
        %v2340 = vmax.f32 %v2240, 0.0
        %v2341 = vmax.f32 %v2245, 0.0
        %v2342 = vmax.f32 %v2248, 0.0
        %v2343 = vmax.f32 %v2253, 0.0
        %v2344 = vmax.f32 %v2256, 0.0
        %v2345 = vmax.f32 %v2261, 0.0
        %v2346 = vmax.f32 %v2264, 0.0
        %v2347 = vmax.f32 %v2269, 0.0
        %v2348 = vmax.f32 %v2272, 0.0
        %v2349 = vmax.f32 %v2277, 0.0
        %v2350 = vmax.f32 %v2280, 0.0
        %v2351 = vmax.f32 %v2285, 0.0
        %v2352 = vmax.f32 %v2288, 0.0
        %v2353 = vmax.f32 %v2293, 0.0
        %v2354 = vmax.f32 %v2296, 0.0
        %v2355 = vmax.f32 %v2301, 0.0
        %v2356 = vmax.f32 %v2304, 0.0
        %v2357 = vmax.f32 %v2309, 0.0
        %v2358 = vmax.f32 %v2312, 0.0
        %v2359 = vmax.f32 %v2317, 0.0
        %v2360 = vmax.f32 %v2320, 0.0
        %v2361 = vmax.f32 %v2325, 0.0
        %v2362 = vmax.f32 %v2328, 0.0
        %v2363 = vpack.c.bf16 %v2332, %v2331
        %v2364 = vpack.c.bf16 %v2334, %v2333
        %v2365 = vpack.c.bf16 %v2336, %v2335
        %v2366 = vpack.c.bf16 %v2338, %v2337
        %v2367 = vpack.c.bf16 %v2340, %v2339
        %v2368 = vpack.c.bf16 %v2342, %v2341
        %v2369 = vpack.c.bf16 %v2344, %v2343
        %v2370 = vpack.c.bf16 %v2346, %v2345
        %v2371 = vpack.c.bf16 %v2348, %v2347
        %v2372 = vpack.c.bf16 %v2350, %v2349
        %v2373 = vpack.c.bf16 %v2352, %v2351
        %v2374 = vpack.c.bf16 %v2354, %v2353
        %v2375 = vpack.c.bf16 %v2356, %v2355
        %v2376 = vpack.c.bf16 %v2358, %v2357
        %v2377 = vpack.c.bf16 %v2360, %v2359
        %v2378 = vpack.c.bf16 %v2362, %v2361
        %v2379 = vld [vmem:[#allocation7 + $0x180] sm:$0xf]
        %v2380 = vld [vmem:[#allocation7 + $0x184] sm:$0xf]
        %v2381 = vld [vmem:[#allocation7 + $0x188] sm:$0xf]
        %v2382 = vld [vmem:[#allocation7 + $0x18c] sm:$0xf]
        %v2383 = vld [vmem:[#allocation7 + $0x190] sm:$0xf]
        %v2384 = vld [vmem:[#allocation7 + $0x194] sm:$0xf]
        %v2385 = vld [vmem:[#allocation7 + $0x198] sm:$0xf]
        %v2386 = vld [vmem:[#allocation7 + $0x19c] sm:$0xf]
        %v2387 = vld [vmem:[#allocation7 + $0x1a0] sm:$0xf]
        %v2388 = vld [vmem:[#allocation7 + $0x1a4] sm:$0xf]
        %v2389 = vld [vmem:[#allocation7 + $0x1a8] sm:$0xf]
        %v2390 = vld [vmem:[#allocation7 + $0x1ac] sm:$0xf]
        %v2391 = vld [vmem:[#allocation7 + $0x1b0] sm:$0xf]
        %v2392 = vld [vmem:[#allocation7 + $0x1b4] sm:$0xf]
        %v2393 = vld [vmem:[#allocation7 + $0x1b8] sm:$0xf]
        %v2394 = vld [vmem:[#allocation7 + $0x1bc] sm:$0xf]
        %v2395 = vld [vmem:[#allocation8 + $0x2] sm:$0x1]
        %v2397 = vlaneseq
        %v2398 = vshrl.u32 %v2397, 7
        %v2399 = vsub.s32 0, %v2398
        %v2400 = vrot.slane %v2395, %v2399
        %v2418 = vunpack.c.l.b16 %v2379
        %v2419 = vunpack.c.l.b16 %v2380
        %v2420 = vunpack.c.l.b16 %v2381
        %v2421 = vunpack.c.l.b16 %v2382
        %v2422 = vunpack.c.l.b16 %v2383
        %v2423 = vunpack.c.l.b16 %v2384
        %v2424 = vunpack.c.l.b16 %v2385
        %v2425 = vunpack.c.l.b16 %v2386
        %v2426 = vunpack.c.l.b16 %v2387
        %v2427 = vunpack.c.l.b16 %v2388
        %v2428 = vunpack.c.l.b16 %v2389
        %v2429 = vunpack.c.l.b16 %v2390
        %v2430 = vunpack.c.l.b16 %v2391
        %v2431 = vunpack.c.l.b16 %v2392
        %v2432 = vunpack.c.l.b16 %v2393
        %v2433 = vunpack.c.l.b16 %v2394
        %v2434 = vpack.c.b16 %v2419, %v2418
        %v2435 = vpack.c.b16 %v2421, %v2420
        %v2436 = vpack.c.b16 %v2423, %v2422
        %v2437 = vpack.c.b16 %v2425, %v2424
        %v2438 = vpack.c.b16 %v2427, %v2426
        %v2439 = vpack.c.b16 %v2429, %v2428
        %v2440 = vpack.c.b16 %v2431, %v2430
        %v2441 = vpack.c.b16 %v2433, %v2432
        %2450 = vmatprep.subr.bf16.mxu0 0
        %2451 = vmatpush1.bf16.msra.mxu0 %v2441
        %2452 = vmatprep.subr.bf16.mxu0 0
        %2453 = vmatpush1.bf16.msra.mxu0 %v2440
        %2454 = vmatprep.subr.bf16.mxu0 0
        %2455 = vmatpush1.bf16.msra.mxu0 %v2439
        %2456 = vmatprep.subr.bf16.mxu0 0
        %2457 = vmatpush1.bf16.msra.mxu0 %v2438
        %2458 = vmatprep.subr.bf16.mxu0 0
        %2459 = vmatpush1.bf16.msra.mxu0 %v2437
        %2460 = vmatprep.subr.bf16.mxu0 0
        %2461 = vmatpush1.bf16.msra.mxu0 %v2436
        %2462 = vmatprep.subr.bf16.mxu0 0
        %2463 = vmatpush1.bf16.msra.mxu0 %v2435
        %2464 = vmatprep.subr.bf16.mxu0 0
        %2465 = vmatpush1.bf16.msra.mxu0 %v2434
        %2466 = vmatprep.subr.bf16.mxu0 0
        %2467 = vmatpush2.bf16.msra.mxu0 0
        %2468 = vmatprep.subr.bf16.mxu0 0
        %2469 = vmatpush2.bf16.msra.mxu0 0
        %2470 = vmatprep.subr.bf16.mxu0 0
        %2471 = vmatpush2.bf16.msra.mxu0 0
        %2472 = vmatprep.subr.bf16.mxu0 0
        %2473 = vmatpush2.bf16.msra.mxu0 0
        %2474 = vmatprep.subr.bf16.mxu0 0
        %2475 = vmatpush2.bf16.msra.mxu0 0
        %2476 = vmatprep.subr.bf16.mxu0 0
        %2477 = vmatpush2.bf16.msra.mxu0 0
        %2478 = vmatprep.subr.bf16.mxu0 0
        %2479 = vmatpush2.bf16.msra.mxu0 0
        %2480 = vmatprep.subr.bf16.mxu0 0
        %2481 = vmatpush2.bf16.msra.mxu0 0
        %2482 = vmatprep.mubr.bf16.mxu0 0
        %2483 = vmatmul.mubr.bf16.gmra.mxu0 %v2363
        %v2484 = vpop.f32.mrf.mxu0
        %v2485 = vadd.f32 %v2400, %v2484
        %v2486 = vpop.f32.mrf.mxu0
        %v2487 = vpop.f32.mrf.mxu0
        %v2488 = vadd.f32 %v2400, %v2487
        %v2489 = vpop.f32.mrf.mxu0
        %2490 = vmatprep.mubr.bf16.mxu0 0
        %2491 = vmatmul.mubr.bf16.gmra.mxu0 %v2364
        %v2492 = vpop.f32.mrf.mxu0
        %v2493 = vadd.f32 %v2400, %v2492
        %v2494 = vpop.f32.mrf.mxu0
        %v2495 = vpop.f32.mrf.mxu0
        %v2496 = vadd.f32 %v2400, %v2495
        %v2497 = vpop.f32.mrf.mxu0
        %2498 = vmatprep.mubr.bf16.mxu0 0
        %2499 = vmatmul.mubr.bf16.gmra.mxu0 %v2365
        %v2500 = vpop.f32.mrf.mxu0
        %v2501 = vadd.f32 %v2400, %v2500
        %v2502 = vpop.f32.mrf.mxu0
        %v2503 = vpop.f32.mrf.mxu0
        %v2504 = vadd.f32 %v2400, %v2503
        %v2505 = vpop.f32.mrf.mxu0
        %2506 = vmatprep.mubr.bf16.mxu0 0
        %2507 = vmatmul.mubr.bf16.gmra.mxu0 %v2366
        %v2508 = vpop.f32.mrf.mxu0
        %v2509 = vadd.f32 %v2400, %v2508
        %v2510 = vpop.f32.mrf.mxu0
        %v2511 = vpop.f32.mrf.mxu0
        %v2512 = vadd.f32 %v2400, %v2511
        %v2513 = vpop.f32.mrf.mxu0
        %2514 = vmatprep.mubr.bf16.mxu0 0
        %2515 = vmatmul.mubr.bf16.gmra.mxu0 %v2367
        %v2516 = vpop.f32.mrf.mxu0
        %v2517 = vadd.f32 %v2400, %v2516
        %v2518 = vpop.f32.mrf.mxu0
        %v2519 = vpop.f32.mrf.mxu0
        %v2520 = vadd.f32 %v2400, %v2519
        %v2521 = vpop.f32.mrf.mxu0
        %2522 = vmatprep.mubr.bf16.mxu0 0
        %2523 = vmatmul.mubr.bf16.gmra.mxu0 %v2368
        %v2524 = vpop.f32.mrf.mxu0
        %v2525 = vadd.f32 %v2400, %v2524
        %v2526 = vpop.f32.mrf.mxu0
        %v2527 = vpop.f32.mrf.mxu0
        %v2528 = vadd.f32 %v2400, %v2527
        %v2529 = vpop.f32.mrf.mxu0
        %2530 = vmatprep.mubr.bf16.mxu0 0
        %2531 = vmatmul.mubr.bf16.gmra.mxu0 %v2369
        %v2532 = vpop.f32.mrf.mxu0
        %v2533 = vadd.f32 %v2400, %v2532
        %v2534 = vpop.f32.mrf.mxu0
        %v2535 = vpop.f32.mrf.mxu0
        %v2536 = vadd.f32 %v2400, %v2535
        %v2537 = vpop.f32.mrf.mxu0
        %2538 = vmatprep.mubr.bf16.mxu0 0
        %2539 = vmatmul.mubr.bf16.gmra.mxu0 %v2370
        %v2540 = vpop.f32.mrf.mxu0
        %v2541 = vadd.f32 %v2400, %v2540
        %v2542 = vpop.f32.mrf.mxu0
        %v2543 = vpop.f32.mrf.mxu0
        %v2544 = vadd.f32 %v2400, %v2543
        %v2545 = vpop.f32.mrf.mxu0
        %2546 = vmatprep.mubr.bf16.mxu0 0
        %2547 = vmatmul.mubr.bf16.gmra.mxu0 %v2371
        %v2548 = vpop.f32.mrf.mxu0
        %v2549 = vadd.f32 %v2400, %v2548
        %v2550 = vpop.f32.mrf.mxu0
        %v2551 = vpop.f32.mrf.mxu0
        %v2552 = vadd.f32 %v2400, %v2551
        %v2553 = vpop.f32.mrf.mxu0
        %2554 = vmatprep.mubr.bf16.mxu0 0
        %2555 = vmatmul.mubr.bf16.gmra.mxu0 %v2372
        %v2556 = vpop.f32.mrf.mxu0
        %v2557 = vadd.f32 %v2400, %v2556
        %v2558 = vpop.f32.mrf.mxu0
        %v2559 = vpop.f32.mrf.mxu0
        %v2560 = vadd.f32 %v2400, %v2559
        %v2561 = vpop.f32.mrf.mxu0
        %2562 = vmatprep.mubr.bf16.mxu0 0
        %2563 = vmatmul.mubr.bf16.gmra.mxu0 %v2373
        %v2564 = vpop.f32.mrf.mxu0
        %v2565 = vadd.f32 %v2400, %v2564
        %v2566 = vpop.f32.mrf.mxu0
        %v2567 = vpop.f32.mrf.mxu0
        %v2568 = vadd.f32 %v2400, %v2567
        %v2569 = vpop.f32.mrf.mxu0
        %2570 = vmatprep.mubr.bf16.mxu0 0
        %2571 = vmatmul.mubr.bf16.gmra.mxu0 %v2374
        %v2572 = vpop.f32.mrf.mxu0
        %v2573 = vadd.f32 %v2400, %v2572
        %v2574 = vpop.f32.mrf.mxu0
        %v2575 = vpop.f32.mrf.mxu0
        %v2576 = vadd.f32 %v2400, %v2575
        %v2577 = vpop.f32.mrf.mxu0
        %2578 = vmatprep.mubr.bf16.mxu0 0
        %2579 = vmatmul.mubr.bf16.gmra.mxu0 %v2375
        %v2580 = vpop.f32.mrf.mxu0
        %v2581 = vadd.f32 %v2400, %v2580
        %v2582 = vpop.f32.mrf.mxu0
        %v2583 = vpop.f32.mrf.mxu0
        %v2584 = vadd.f32 %v2400, %v2583
        %v2585 = vpop.f32.mrf.mxu0
        %2586 = vmatprep.mubr.bf16.mxu0 0
        %2587 = vmatmul.mubr.bf16.gmra.mxu0 %v2376
        %v2588 = vpop.f32.mrf.mxu0
        %v2589 = vadd.f32 %v2400, %v2588
        %v2590 = vpop.f32.mrf.mxu0
        %v2591 = vpop.f32.mrf.mxu0
        %v2592 = vadd.f32 %v2400, %v2591
        %v2593 = vpop.f32.mrf.mxu0
        %2594 = vmatprep.mubr.bf16.mxu0 0
        %2595 = vmatmul.mubr.bf16.gmra.mxu0 %v2377
        %v2596 = vpop.f32.mrf.mxu0
        %v2597 = vadd.f32 %v2400, %v2596
        %v2598 = vpop.f32.mrf.mxu0
        %v2599 = vpop.f32.mrf.mxu0
        %v2600 = vadd.f32 %v2400, %v2599
        %v2601 = vpop.f32.mrf.mxu0
        %2602 = vmatprep.mubr.bf16.mxu0 0
        %2603 = vmatmul.mubr.bf16.gmra.mxu0 %v2378
        %v2604 = vpop.f32.mrf.mxu0
        %v2605 = vadd.f32 %v2400, %v2604
        %v2606 = vpop.f32.mrf.mxu0
        %v2607 = vpop.f32.mrf.mxu0
        %v2608 = vadd.f32 %v2400, %v2607
        %v2609 = vpop.f32.mrf.mxu0
        %2610 = vdwg.mxu0
        %v2611 = vld [vmem:[#allocation7 + $0x1c0] sm:$0xf]
        %v2612 = vld [vmem:[#allocation7 + $0x1c4] sm:$0xf]
        %v2613 = vld [vmem:[#allocation7 + $0x1c8] sm:$0xf]
        %v2614 = vld [vmem:[#allocation7 + $0x1cc] sm:$0xf]
        %v2615 = vld [vmem:[#allocation7 + $0x1d0] sm:$0xf]
        %v2616 = vld [vmem:[#allocation7 + $0x1d4] sm:$0xf]
        %v2617 = vld [vmem:[#allocation7 + $0x1d8] sm:$0xf]
        %v2618 = vld [vmem:[#allocation7 + $0x1dc] sm:$0xf]
        %v2619 = vld [vmem:[#allocation7 + $0x1e0] sm:$0xf]
        %v2620 = vld [vmem:[#allocation7 + $0x1e4] sm:$0xf]
        %v2621 = vld [vmem:[#allocation7 + $0x1e8] sm:$0xf]
        %v2622 = vld [vmem:[#allocation7 + $0x1ec] sm:$0xf]
        %v2623 = vld [vmem:[#allocation7 + $0x1f0] sm:$0xf]
        %v2624 = vld [vmem:[#allocation7 + $0x1f4] sm:$0xf]
        %v2625 = vld [vmem:[#allocation7 + $0x1f8] sm:$0xf]
        %v2626 = vld [vmem:[#allocation7 + $0x1fc] sm:$0xf]
        %v2627 = vld [vmem:[#allocation8 + $0x4] sm:$0x1]
        %v2629 = vlaneseq
        %v2630 = vshrl.u32 %v2629, 7
        %v2631 = vsub.s32 0, %v2630
        %v2632 = vrot.slane %v2627, %v2631
        %v2650 = vunpack.c.l.b16 %v2611
        %v2651 = vunpack.c.l.b16 %v2612
        %v2652 = vunpack.c.l.b16 %v2613
        %v2653 = vunpack.c.l.b16 %v2614
        %v2654 = vunpack.c.l.b16 %v2615
        %v2655 = vunpack.c.l.b16 %v2616
        %v2656 = vunpack.c.l.b16 %v2617
        %v2657 = vunpack.c.l.b16 %v2618
        %v2658 = vunpack.c.l.b16 %v2619
        %v2659 = vunpack.c.l.b16 %v2620
        %v2660 = vunpack.c.l.b16 %v2621
        %v2661 = vunpack.c.l.b16 %v2622
        %v2662 = vunpack.c.l.b16 %v2623
        %v2663 = vunpack.c.l.b16 %v2624
        %v2664 = vunpack.c.l.b16 %v2625
        %v2665 = vunpack.c.l.b16 %v2626
        %v2666 = vpack.c.b16 %v2651, %v2650
        %v2667 = vpack.c.b16 %v2653, %v2652
        %v2668 = vpack.c.b16 %v2655, %v2654
        %v2669 = vpack.c.b16 %v2657, %v2656
        %v2670 = vpack.c.b16 %v2659, %v2658
        %v2671 = vpack.c.b16 %v2661, %v2660
        %v2672 = vpack.c.b16 %v2663, %v2662
        %v2673 = vpack.c.b16 %v2665, %v2664
        %2682 = vmatprep.subr.bf16.mxu0 0
        %2683 = vmatpush1.bf16.msra.mxu0 %v2673
        %2684 = vmatprep.subr.bf16.mxu0 0
        %2685 = vmatpush1.bf16.msra.mxu0 %v2672
        %2686 = vmatprep.subr.bf16.mxu0 0
        %2687 = vmatpush1.bf16.msra.mxu0 %v2671
        %2688 = vmatprep.subr.bf16.mxu0 0
        %2689 = vmatpush1.bf16.msra.mxu0 %v2670
        %2690 = vmatprep.subr.bf16.mxu0 0
        %2691 = vmatpush1.bf16.msra.mxu0 %v2669
        %2692 = vmatprep.subr.bf16.mxu0 0
        %2693 = vmatpush1.bf16.msra.mxu0 %v2668
        %2694 = vmatprep.subr.bf16.mxu0 0
        %2695 = vmatpush1.bf16.msra.mxu0 %v2667
        %2696 = vmatprep.subr.bf16.mxu0 0
        %2697 = vmatpush1.bf16.msra.mxu0 %v2666
        %2698 = vmatprep.subr.bf16.mxu0 0
        %2699 = vmatpush2.bf16.msra.mxu0 0
        %2700 = vmatprep.subr.bf16.mxu0 0
        %2701 = vmatpush2.bf16.msra.mxu0 0
        %2702 = vmatprep.subr.bf16.mxu0 0
        %2703 = vmatpush2.bf16.msra.mxu0 0
        %2704 = vmatprep.subr.bf16.mxu0 0
        %2705 = vmatpush2.bf16.msra.mxu0 0
        %2706 = vmatprep.subr.bf16.mxu0 0
        %2707 = vmatpush2.bf16.msra.mxu0 0
        %2708 = vmatprep.subr.bf16.mxu0 0
        %2709 = vmatpush2.bf16.msra.mxu0 0
        %2710 = vmatprep.subr.bf16.mxu0 0
        %2711 = vmatpush2.bf16.msra.mxu0 0
        %2712 = vmatprep.subr.bf16.mxu0 0
        %2713 = vmatpush2.bf16.msra.mxu0 0
        %2714 = vmatprep.mubr.bf16.mxu0 0
        %2715 = vmatmul.mubr.bf16.gmra.mxu0 %v2083
        %v2716 = vpop.f32.mrf.mxu0
        %v2717 = vadd.f32 %v2632, %v2716
        %v2718 = vpop.f32.mrf.mxu0
        %v2719 = vpop.f32.mrf.mxu0
        %v2720 = vadd.f32 %v2632, %v2719
        %v2721 = vpop.f32.mrf.mxu0
        %2722 = vmatprep.mubr.bf16.mxu0 0
        %2723 = vmatmul.mubr.bf16.gmra.mxu0 %v2084
        %v2724 = vpop.f32.mrf.mxu0
        %v2725 = vadd.f32 %v2632, %v2724
        %v2726 = vpop.f32.mrf.mxu0
        %v2727 = vpop.f32.mrf.mxu0
        %v2728 = vadd.f32 %v2632, %v2727
        %v2729 = vpop.f32.mrf.mxu0
        %2730 = vmatprep.mubr.bf16.mxu0 0
        %2731 = vmatmul.mubr.bf16.gmra.mxu0 %v2085
        %v2732 = vpop.f32.mrf.mxu0
        %v2733 = vadd.f32 %v2632, %v2732
        %v2734 = vpop.f32.mrf.mxu0
        %v2735 = vpop.f32.mrf.mxu0
        %v2736 = vadd.f32 %v2632, %v2735
        %v2737 = vpop.f32.mrf.mxu0
        %2738 = vmatprep.mubr.bf16.mxu0 0
        %2739 = vmatmul.mubr.bf16.gmra.mxu0 %v2086
        %v2740 = vpop.f32.mrf.mxu0
        %v2741 = vadd.f32 %v2632, %v2740
        %v2742 = vpop.f32.mrf.mxu0
        %v2743 = vpop.f32.mrf.mxu0
        %v2744 = vadd.f32 %v2632, %v2743
        %v2745 = vpop.f32.mrf.mxu0
        %2746 = vmatprep.mubr.bf16.mxu0 0
        %2747 = vmatmul.mubr.bf16.gmra.mxu0 %v2087
        %v2748 = vpop.f32.mrf.mxu0
        %v2749 = vadd.f32 %v2632, %v2748
        %v2750 = vpop.f32.mrf.mxu0
        %v2751 = vpop.f32.mrf.mxu0
        %v2752 = vadd.f32 %v2632, %v2751
        %v2753 = vpop.f32.mrf.mxu0
        %2754 = vmatprep.mubr.bf16.mxu0 0
        %2755 = vmatmul.mubr.bf16.gmra.mxu0 %v2088
        %v2756 = vpop.f32.mrf.mxu0
        %v2757 = vadd.f32 %v2632, %v2756
        %v2758 = vpop.f32.mrf.mxu0
        %v2759 = vpop.f32.mrf.mxu0
        %v2760 = vadd.f32 %v2632, %v2759
        %v2761 = vpop.f32.mrf.mxu0
        %2762 = vmatprep.mubr.bf16.mxu0 0
        %2763 = vmatmul.mubr.bf16.gmra.mxu0 %v2089
        %v2764 = vpop.f32.mrf.mxu0
        %v2765 = vadd.f32 %v2632, %v2764
        %v2766 = vpop.f32.mrf.mxu0
        %v2767 = vpop.f32.mrf.mxu0
        %v2768 = vadd.f32 %v2632, %v2767
        %v2769 = vpop.f32.mrf.mxu0
        %2770 = vmatprep.mubr.bf16.mxu0 0
        %2771 = vmatmul.mubr.bf16.gmra.mxu0 %v2090
        %v2772 = vpop.f32.mrf.mxu0
        %v2773 = vadd.f32 %v2632, %v2772
        %v2774 = vpop.f32.mrf.mxu0
        %v2775 = vpop.f32.mrf.mxu0
        %v2776 = vadd.f32 %v2632, %v2775
        %v2777 = vpop.f32.mrf.mxu0
        %2778 = vmatprep.mubr.bf16.mxu0 0
        %2779 = vmatmul.mubr.bf16.gmra.mxu0 %v2091
        %v2780 = vpop.f32.mrf.mxu0
        %v2781 = vadd.f32 %v2632, %v2780
        %v2782 = vpop.f32.mrf.mxu0
        %v2783 = vpop.f32.mrf.mxu0
        %v2784 = vadd.f32 %v2632, %v2783
        %v2785 = vpop.f32.mrf.mxu0
        %2786 = vmatprep.mubr.bf16.mxu0 0
        %2787 = vmatmul.mubr.bf16.gmra.mxu0 %v2092
        %v2788 = vpop.f32.mrf.mxu0
        %v2789 = vadd.f32 %v2632, %v2788
        %v2790 = vpop.f32.mrf.mxu0
        %v2791 = vpop.f32.mrf.mxu0
        %v2792 = vadd.f32 %v2632, %v2791
        %v2793 = vpop.f32.mrf.mxu0
        %2794 = vmatprep.mubr.bf16.mxu0 0
        %2795 = vmatmul.mubr.bf16.gmra.mxu0 %v2093
        %v2796 = vpop.f32.mrf.mxu0
        %v2797 = vadd.f32 %v2632, %v2796
        %v2798 = vpop.f32.mrf.mxu0
        %v2799 = vpop.f32.mrf.mxu0
        %v2800 = vadd.f32 %v2632, %v2799
        %v2801 = vpop.f32.mrf.mxu0
        %2802 = vmatprep.mubr.bf16.mxu0 0
        %2803 = vmatmul.mubr.bf16.gmra.mxu0 %v2094
        %v2804 = vpop.f32.mrf.mxu0
        %v2805 = vadd.f32 %v2632, %v2804
        %v2806 = vpop.f32.mrf.mxu0
        %v2807 = vpop.f32.mrf.mxu0
        %v2808 = vadd.f32 %v2632, %v2807
        %v2809 = vpop.f32.mrf.mxu0
        %2810 = vmatprep.mubr.bf16.mxu0 0
        %2811 = vmatmul.mubr.bf16.gmra.mxu0 %v2095
        %v2812 = vpop.f32.mrf.mxu0
        %v2813 = vadd.f32 %v2632, %v2812
        %v2814 = vpop.f32.mrf.mxu0
        %v2815 = vpop.f32.mrf.mxu0
        %v2816 = vadd.f32 %v2632, %v2815
        %v2817 = vpop.f32.mrf.mxu0
        %2818 = vmatprep.mubr.bf16.mxu0 0
        %2819 = vmatmul.mubr.bf16.gmra.mxu0 %v2096
        %v2820 = vpop.f32.mrf.mxu0
        %v2821 = vadd.f32 %v2632, %v2820
        %v2822 = vpop.f32.mrf.mxu0
        %v2823 = vpop.f32.mrf.mxu0
        %v2824 = vadd.f32 %v2632, %v2823
        %v2825 = vpop.f32.mrf.mxu0
        %2826 = vmatprep.mubr.bf16.mxu0 0
        %2827 = vmatmul.mubr.bf16.gmra.mxu0 %v2097
        %v2828 = vpop.f32.mrf.mxu0
        %v2829 = vadd.f32 %v2632, %v2828
        %v2830 = vpop.f32.mrf.mxu0
        %v2831 = vpop.f32.mrf.mxu0
        %v2832 = vadd.f32 %v2632, %v2831
        %v2833 = vpop.f32.mrf.mxu0
        %2834 = vmatprep.mubr.bf16.mxu0 0
        %2835 = vmatmul.mubr.bf16.gmra.mxu0 %v2098
        %v2836 = vpop.f32.mrf.mxu0
        %v2837 = vadd.f32 %v2632, %v2836
        %v2838 = vpop.f32.mrf.mxu0
        %v2839 = vpop.f32.mrf.mxu0
        %v2840 = vadd.f32 %v2632, %v2839
        %v2841 = vpop.f32.mrf.mxu0
        %2842 = vdwg.mxu0
        %v2843 = vmax.f32 %v2717, 0.0
        %v2844 = vmax.f32 %v2720, 0.0
        %v2845 = vmax.f32 %v2725, 0.0
        %v2846 = vmax.f32 %v2728, 0.0
        %v2847 = vmax.f32 %v2733, 0.0
        %v2848 = vmax.f32 %v2736, 0.0
        %v2849 = vmax.f32 %v2741, 0.0
        %v2850 = vmax.f32 %v2744, 0.0
        %v2851 = vmax.f32 %v2749, 0.0
        %v2852 = vmax.f32 %v2752, 0.0
        %v2853 = vmax.f32 %v2757, 0.0
        %v2854 = vmax.f32 %v2760, 0.0
        %v2855 = vmax.f32 %v2765, 0.0
        %v2856 = vmax.f32 %v2768, 0.0
        %v2857 = vmax.f32 %v2773, 0.0
        %v2858 = vmax.f32 %v2776, 0.0
        %v2859 = vmax.f32 %v2781, 0.0
        %v2860 = vmax.f32 %v2784, 0.0
        %v2861 = vmax.f32 %v2789, 0.0
        %v2862 = vmax.f32 %v2792, 0.0
        %v2863 = vmax.f32 %v2797, 0.0
        %v2864 = vmax.f32 %v2800, 0.0
        %v2865 = vmax.f32 %v2805, 0.0
        %v2866 = vmax.f32 %v2808, 0.0
        %v2867 = vmax.f32 %v2813, 0.0
        %v2868 = vmax.f32 %v2816, 0.0
        %v2869 = vmax.f32 %v2821, 0.0
        %v2870 = vmax.f32 %v2824, 0.0
        %v2871 = vmax.f32 %v2829, 0.0
        %v2872 = vmax.f32 %v2832, 0.0
        %v2873 = vmax.f32 %v2837, 0.0
        %v2874 = vmax.f32 %v2840, 0.0
        %v2875 = vpack.c.bf16 %v2844, %v2843
        %v2876 = vpack.c.bf16 %v2846, %v2845
        %v2877 = vpack.c.bf16 %v2848, %v2847
        %v2878 = vpack.c.bf16 %v2850, %v2849
        %v2879 = vpack.c.bf16 %v2852, %v2851
        %v2880 = vpack.c.bf16 %v2854, %v2853
        %v2881 = vpack.c.bf16 %v2856, %v2855
        %v2882 = vpack.c.bf16 %v2858, %v2857
        %v2883 = vpack.c.bf16 %v2860, %v2859
        %v2884 = vpack.c.bf16 %v2862, %v2861
        %v2885 = vpack.c.bf16 %v2864, %v2863
        %v2886 = vpack.c.bf16 %v2866, %v2865
        %v2887 = vpack.c.bf16 %v2868, %v2867
        %v2888 = vpack.c.bf16 %v2870, %v2869
        %v2889 = vpack.c.bf16 %v2872, %v2871
        %v2890 = vpack.c.bf16 %v2874, %v2873
        %v2891 = vld [vmem:[#allocation7 + $0x200] sm:$0xf]
        %v2892 = vld [vmem:[#allocation7 + $0x204] sm:$0xf]
        %v2893 = vld [vmem:[#allocation7 + $0x208] sm:$0xf]
        %v2894 = vld [vmem:[#allocation7 + $0x20c] sm:$0xf]
        %v2895 = vld [vmem:[#allocation7 + $0x210] sm:$0xf]
        %v2896 = vld [vmem:[#allocation7 + $0x214] sm:$0xf]
        %v2897 = vld [vmem:[#allocation7 + $0x218] sm:$0xf]
        %v2898 = vld [vmem:[#allocation7 + $0x21c] sm:$0xf]
        %v2899 = vld [vmem:[#allocation7 + $0x220] sm:$0xf]
        %v2900 = vld [vmem:[#allocation7 + $0x224] sm:$0xf]
        %v2901 = vld [vmem:[#allocation7 + $0x228] sm:$0xf]
        %v2902 = vld [vmem:[#allocation7 + $0x22c] sm:$0xf]
        %v2903 = vld [vmem:[#allocation7 + $0x230] sm:$0xf]
        %v2904 = vld [vmem:[#allocation7 + $0x234] sm:$0xf]
        %v2905 = vld [vmem:[#allocation7 + $0x238] sm:$0xf]
        %v2906 = vld [vmem:[#allocation7 + $0x23c] sm:$0xf]
        %v2907 = vld [vmem:[#allocation8 + $0x5] sm:$0x1]
        %v2909 = vlaneseq
        %v2910 = vshrl.u32 %v2909, 7
        %v2911 = vsub.s32 0, %v2910
        %v2912 = vrot.slane %v2907, %v2911
        %v2930 = vunpack.c.l.b16 %v2891
        %v2931 = vunpack.c.l.b16 %v2892
        %v2932 = vunpack.c.l.b16 %v2893
        %v2933 = vunpack.c.l.b16 %v2894
        %v2934 = vunpack.c.l.b16 %v2895
        %v2935 = vunpack.c.l.b16 %v2896
        %v2936 = vunpack.c.l.b16 %v2897
        %v2937 = vunpack.c.l.b16 %v2898
        %v2938 = vunpack.c.l.b16 %v2899
        %v2939 = vunpack.c.l.b16 %v2900
        %v2940 = vunpack.c.l.b16 %v2901
        %v2941 = vunpack.c.l.b16 %v2902
        %v2942 = vunpack.c.l.b16 %v2903
        %v2943 = vunpack.c.l.b16 %v2904
        %v2944 = vunpack.c.l.b16 %v2905
        %v2945 = vunpack.c.l.b16 %v2906
        %v2946 = vpack.c.b16 %v2931, %v2930
        %v2947 = vpack.c.b16 %v2933, %v2932
        %v2948 = vpack.c.b16 %v2935, %v2934
        %v2949 = vpack.c.b16 %v2937, %v2936
        %v2950 = vpack.c.b16 %v2939, %v2938
        %v2951 = vpack.c.b16 %v2941, %v2940
        %v2952 = vpack.c.b16 %v2943, %v2942
        %v2953 = vpack.c.b16 %v2945, %v2944
        %2962 = vmatprep.subr.bf16.mxu0 0
        %2963 = vmatpush1.bf16.msra.mxu0 %v2953
        %2964 = vmatprep.subr.bf16.mxu0 0
        %2965 = vmatpush1.bf16.msra.mxu0 %v2952
        %2966 = vmatprep.subr.bf16.mxu0 0
        %2967 = vmatpush1.bf16.msra.mxu0 %v2951
        %2968 = vmatprep.subr.bf16.mxu0 0
        %2969 = vmatpush1.bf16.msra.mxu0 %v2950
        %2970 = vmatprep.subr.bf16.mxu0 0
        %2971 = vmatpush1.bf16.msra.mxu0 %v2949
        %2972 = vmatprep.subr.bf16.mxu0 0
        %2973 = vmatpush1.bf16.msra.mxu0 %v2948
        %2974 = vmatprep.subr.bf16.mxu0 0
        %2975 = vmatpush1.bf16.msra.mxu0 %v2947
        %2976 = vmatprep.subr.bf16.mxu0 0
        %2977 = vmatpush1.bf16.msra.mxu0 %v2946
        %2978 = vmatprep.subr.bf16.mxu0 0
        %2979 = vmatpush2.bf16.msra.mxu0 0
        %2980 = vmatprep.subr.bf16.mxu0 0
        %2981 = vmatpush2.bf16.msra.mxu0 0
        %2982 = vmatprep.subr.bf16.mxu0 0
        %2983 = vmatpush2.bf16.msra.mxu0 0
        %2984 = vmatprep.subr.bf16.mxu0 0
        %2985 = vmatpush2.bf16.msra.mxu0 0
        %2986 = vmatprep.subr.bf16.mxu0 0
        %2987 = vmatpush2.bf16.msra.mxu0 0
        %2988 = vmatprep.subr.bf16.mxu0 0
        %2989 = vmatpush2.bf16.msra.mxu0 0
        %2990 = vmatprep.subr.bf16.mxu0 0
        %2991 = vmatpush2.bf16.msra.mxu0 0
        %2992 = vmatprep.subr.bf16.mxu0 0
        %2993 = vmatpush2.bf16.msra.mxu0 0
        %2994 = vmatprep.mubr.bf16.mxu0 0
        %2995 = vmatmul.mubr.bf16.gmra.mxu0 %v2875
        %v2996 = vpop.f32.mrf.mxu0
        %v2997 = vadd.f32 %v2912, %v2996
        %v2998 = vpop.f32.mrf.mxu0
        %v2999 = vpop.f32.mrf.mxu0
        %v3000 = vadd.f32 %v2912, %v2999
        %v3001 = vpop.f32.mrf.mxu0
        %3002 = vmatprep.mubr.bf16.mxu0 0
        %3003 = vmatmul.mubr.bf16.gmra.mxu0 %v2876
        %v3004 = vpop.f32.mrf.mxu0
        %v3005 = vadd.f32 %v2912, %v3004
        %v3006 = vpop.f32.mrf.mxu0
        %v3007 = vpop.f32.mrf.mxu0
        %v3008 = vadd.f32 %v2912, %v3007
        %v3009 = vpop.f32.mrf.mxu0
        %3010 = vmatprep.mubr.bf16.mxu0 0
        %3011 = vmatmul.mubr.bf16.gmra.mxu0 %v2877
        %v3012 = vpop.f32.mrf.mxu0
        %v3013 = vadd.f32 %v2912, %v3012
        %v3014 = vpop.f32.mrf.mxu0
        %v3015 = vpop.f32.mrf.mxu0
        %v3016 = vadd.f32 %v2912, %v3015
        %v3017 = vpop.f32.mrf.mxu0
        %3018 = vmatprep.mubr.bf16.mxu0 0
        %3019 = vmatmul.mubr.bf16.gmra.mxu0 %v2878
        %v3020 = vpop.f32.mrf.mxu0
        %v3021 = vadd.f32 %v2912, %v3020
        %v3022 = vpop.f32.mrf.mxu0
        %v3023 = vpop.f32.mrf.mxu0
        %v3024 = vadd.f32 %v2912, %v3023
        %v3025 = vpop.f32.mrf.mxu0
        %3026 = vmatprep.mubr.bf16.mxu0 0
        %3027 = vmatmul.mubr.bf16.gmra.mxu0 %v2879
        %v3028 = vpop.f32.mrf.mxu0
        %v3029 = vadd.f32 %v2912, %v3028
        %v3030 = vpop.f32.mrf.mxu0
        %v3031 = vpop.f32.mrf.mxu0
        %v3032 = vadd.f32 %v2912, %v3031
        %v3033 = vpop.f32.mrf.mxu0
        %3034 = vmatprep.mubr.bf16.mxu0 0
        %3035 = vmatmul.mubr.bf16.gmra.mxu0 %v2880
        %v3036 = vpop.f32.mrf.mxu0
        %v3037 = vadd.f32 %v2912, %v3036
        %v3038 = vpop.f32.mrf.mxu0
        %v3039 = vpop.f32.mrf.mxu0
        %v3040 = vadd.f32 %v2912, %v3039
        %v3041 = vpop.f32.mrf.mxu0
        %3042 = vmatprep.mubr.bf16.mxu0 0
        %3043 = vmatmul.mubr.bf16.gmra.mxu0 %v2881
        %v3044 = vpop.f32.mrf.mxu0
        %v3045 = vadd.f32 %v2912, %v3044
        %v3046 = vpop.f32.mrf.mxu0
        %v3047 = vpop.f32.mrf.mxu0
        %v3048 = vadd.f32 %v2912, %v3047
        %v3049 = vpop.f32.mrf.mxu0
        %3050 = vmatprep.mubr.bf16.mxu0 0
        %3051 = vmatmul.mubr.bf16.gmra.mxu0 %v2882
        %v3052 = vpop.f32.mrf.mxu0
        %v3053 = vadd.f32 %v2912, %v3052
        %v3054 = vpop.f32.mrf.mxu0
        %v3055 = vpop.f32.mrf.mxu0
        %v3056 = vadd.f32 %v2912, %v3055
        %v3057 = vpop.f32.mrf.mxu0
        %3058 = vmatprep.mubr.bf16.mxu0 0
        %3059 = vmatmul.mubr.bf16.gmra.mxu0 %v2883
        %v3060 = vpop.f32.mrf.mxu0
        %v3061 = vadd.f32 %v2912, %v3060
        %v3062 = vpop.f32.mrf.mxu0
        %v3063 = vpop.f32.mrf.mxu0
        %v3064 = vadd.f32 %v2912, %v3063
        %v3065 = vpop.f32.mrf.mxu0
        %3066 = vmatprep.mubr.bf16.mxu0 0
        %3067 = vmatmul.mubr.bf16.gmra.mxu0 %v2884
        %v3068 = vpop.f32.mrf.mxu0
        %v3069 = vadd.f32 %v2912, %v3068
        %v3070 = vpop.f32.mrf.mxu0
        %v3071 = vpop.f32.mrf.mxu0
        %v3072 = vadd.f32 %v2912, %v3071
        %v3073 = vpop.f32.mrf.mxu0
        %3074 = vmatprep.mubr.bf16.mxu0 0
        %3075 = vmatmul.mubr.bf16.gmra.mxu0 %v2885
        %v3076 = vpop.f32.mrf.mxu0
        %v3077 = vadd.f32 %v2912, %v3076
        %v3078 = vpop.f32.mrf.mxu0
        %v3079 = vpop.f32.mrf.mxu0
        %v3080 = vadd.f32 %v2912, %v3079
        %v3081 = vpop.f32.mrf.mxu0
        %3082 = vmatprep.mubr.bf16.mxu0 0
        %3083 = vmatmul.mubr.bf16.gmra.mxu0 %v2886
        %v3084 = vpop.f32.mrf.mxu0
        %v3085 = vadd.f32 %v2912, %v3084
        %v3086 = vpop.f32.mrf.mxu0
        %v3087 = vpop.f32.mrf.mxu0
        %v3088 = vadd.f32 %v2912, %v3087
        %v3089 = vpop.f32.mrf.mxu0
        %3090 = vmatprep.mubr.bf16.mxu0 0
        %3091 = vmatmul.mubr.bf16.gmra.mxu0 %v2887
        %v3092 = vpop.f32.mrf.mxu0
        %v3093 = vadd.f32 %v2912, %v3092
        %v3094 = vpop.f32.mrf.mxu0
        %v3095 = vpop.f32.mrf.mxu0
        %v3096 = vadd.f32 %v2912, %v3095
        %v3097 = vpop.f32.mrf.mxu0
        %3098 = vmatprep.mubr.bf16.mxu0 0
        %3099 = vmatmul.mubr.bf16.gmra.mxu0 %v2888
        %v3100 = vpop.f32.mrf.mxu0
        %v3101 = vadd.f32 %v2912, %v3100
        %v3102 = vpop.f32.mrf.mxu0
        %v3103 = vpop.f32.mrf.mxu0
        %v3104 = vadd.f32 %v2912, %v3103
        %v3105 = vpop.f32.mrf.mxu0
        %3106 = vmatprep.mubr.bf16.mxu0 0
        %3107 = vmatmul.mubr.bf16.gmra.mxu0 %v2889
        %v3108 = vpop.f32.mrf.mxu0
        %v3109 = vadd.f32 %v2912, %v3108
        %v3110 = vpop.f32.mrf.mxu0
        %v3111 = vpop.f32.mrf.mxu0
        %v3112 = vadd.f32 %v2912, %v3111
        %v3113 = vpop.f32.mrf.mxu0
        %3114 = vmatprep.mubr.bf16.mxu0 0
        %3115 = vmatmul.mubr.bf16.gmra.mxu0 %v2890
        %v3116 = vpop.f32.mrf.mxu0
        %v3117 = vadd.f32 %v2912, %v3116
        %v3118 = vpop.f32.mrf.mxu0
        %v3119 = vpop.f32.mrf.mxu0
        %v3120 = vadd.f32 %v2912, %v3119
        %v3121 = vpop.f32.mrf.mxu0
        %3122 = vdwg.mxu0
        %v3123 = vmul.f32 %v2485, %v2997
        %v3124 = vmul.f32 %v2488, %v3000
        %v3125 = vmul.f32 %v2493, %v3005
        %v3126 = vmul.f32 %v2496, %v3008
        %v3127 = vmul.f32 %v2501, %v3013
        %v3128 = vmul.f32 %v2504, %v3016
        %v3129 = vmul.f32 %v2509, %v3021
        %v3130 = vmul.f32 %v2512, %v3024
        %v3131 = vmul.f32 %v2517, %v3029
        %v3132 = vmul.f32 %v2520, %v3032
        %v3133 = vmul.f32 %v2525, %v3037
        %v3134 = vmul.f32 %v2528, %v3040
        %v3135 = vmul.f32 %v2533, %v3045
        %v3136 = vmul.f32 %v2536, %v3048
        %v3137 = vmul.f32 %v2541, %v3053
        %v3138 = vmul.f32 %v2544, %v3056
        %v3139 = vmul.f32 %v2549, %v3061
        %v3140 = vmul.f32 %v2552, %v3064
        %v3141 = vmul.f32 %v2557, %v3069
        %v3142 = vmul.f32 %v2560, %v3072
        %v3143 = vmul.f32 %v2565, %v3077
        %v3144 = vmul.f32 %v2568, %v3080
        %v3145 = vmul.f32 %v2573, %v3085
        %v3146 = vmul.f32 %v2576, %v3088
        %v3147 = vmul.f32 %v2581, %v3093
        %v3148 = vmul.f32 %v2584, %v3096
        %v3149 = vmul.f32 %v2589, %v3101
        %v3150 = vmul.f32 %v2592, %v3104
        %v3151 = vmul.f32 %v2597, %v3109
        %v3152 = vmul.f32 %v2600, %v3112
        %v3153 = vmul.f32 %v2605, %v3117
        %v3154 = vmul.f32 %v2608, %v3120
        %v3155 = vpack.c.bf16 %v3124, %v3123
        %v3156 = vpack.c.bf16 %v3126, %v3125
        %v3157 = vpack.c.bf16 %v3128, %v3127
        %v3158 = vpack.c.bf16 %v3130, %v3129
        %v3159 = vpack.c.bf16 %v3132, %v3131
        %v3160 = vpack.c.bf16 %v3134, %v3133
        %v3161 = vpack.c.bf16 %v3136, %v3135
        %v3162 = vpack.c.bf16 %v3138, %v3137
        %v3163 = vpack.c.bf16 %v3140, %v3139
        %v3164 = vpack.c.bf16 %v3142, %v3141
        %v3165 = vpack.c.bf16 %v3144, %v3143
        %v3166 = vpack.c.bf16 %v3146, %v3145
        %v3167 = vpack.c.bf16 %v3148, %v3147
        %v3168 = vpack.c.bf16 %v3150, %v3149
        %v3169 = vpack.c.bf16 %v3152, %v3151
        %v3170 = vpack.c.bf16 %v3154, %v3153
        %3171 = vmatprep.subr.bf16.mxu0 0
        %3172 = vmatpush1.bf16.xpose.msra.mxu0 %v3162
        %3173 = vmatprep.subr.bf16.mxu0 0
        %3174 = vmatpush1.bf16.xpose.msra.mxu0 %v3161
        %3175 = vmatprep.subr.bf16.mxu0 0
        %3176 = vmatpush1.bf16.xpose.msra.mxu0 %v3160
        %3177 = vmatprep.subr.bf16.mxu0 0
        %3178 = vmatpush1.bf16.xpose.msra.mxu0 %v3159
        %3179 = vmatprep.subr.bf16.mxu0 0
        %3180 = vmatpush1.bf16.xpose.msra.mxu0 %v3158
        %3181 = vmatprep.subr.bf16.mxu0 0
        %3182 = vmatpush1.bf16.xpose.msra.mxu0 %v3157
        %3183 = vmatprep.subr.bf16.mxu0 0
        %3184 = vmatpush1.bf16.xpose.msra.mxu0 %v3156
        %3185 = vmatprep.subr.bf16.mxu0 0
        %3186 = vmatpush1.bf16.xpose.msra.mxu0 %v3155
        %3187 = vmatprep.subr.bf16.mxu0 0
        %3188 = vmatpush2.bf16.xpose.msra.mxu0 %v3170
        %3189 = vmatprep.subr.bf16.mxu0 0
        %3190 = vmatpush2.bf16.xpose.msra.mxu0 %v3169
        %3191 = vmatprep.subr.bf16.mxu0 0
        %3192 = vmatpush2.bf16.xpose.msra.mxu0 %v3168
        %3193 = vmatprep.subr.bf16.mxu0 0
        %3194 = vmatpush2.bf16.xpose.msra.mxu0 %v3167
        %3195 = vmatprep.subr.bf16.mxu0 0
        %3196 = vmatpush2.bf16.xpose.msra.mxu0 %v3166
        %3197 = vmatprep.subr.bf16.mxu0 0
        %3198 = vmatpush2.bf16.xpose.msra.mxu0 %v3165
        %3199 = vmatprep.subr.bf16.mxu0 0
        %3200 = vmatpush2.bf16.xpose.msra.mxu0 %v3164
        %3201 = vmatprep.subr.bf16.mxu0 0
        %3202 = vmatpush2.bf16.xpose.msra.mxu0 %v3163
        %3203 = vmatprep.mubr.bf16.mxu0 0
        %3204 = vmatmul.mubr.bf16.gmra.mxu0 1065369472
        %v3205 = vpop.f32.mrf.mxu0
        %v3206 = vadd.f32 0.0, %v3205
        %v3207 = vpop.f32.mrf.mxu0
        %v3208 = vadd.f32 0.0, %v3207
        %v3209 = vpop.f32.mrf.mxu0
        %v3210 = vpop.f32.mrf.mxu0
        %3211 = vdwg.mxu0
        %v3214 = vcombine.low %v3206, %v3208
        %v3216 = vunpack.c.l.s4 1966171168
        %v3217 = vunpack.c.0.s8 %v3216
        %v3218 = vlaneseq
        %v3219 = vshrl.u32 %v3218, 7
        %v3220 = vsub.s32 %v3217, %v3219
        %v3221 = vrot.slane %v3214, %v3220
        %v3223 = vunpack.c.l.s4 1966171168
        %v3224 = vunpack.c.0.s8 %v3223
        %v3225 = vlaneseq
        %v3226 = vshrl.u32 %v3225, 7
        %v3227 = vsub.s32 %v3224, %v3226
        %v3228 = vrot.slane %v3221, %v3227
        %v3230 = vlaneseq
        %vm3231 = vcmp.ge.s32.totalorder %v3230, 0
        %vm3232 = vcmp.lt.s32.totalorder %v3230, 256
        %vm3233 = vmand %vm3231, %vm3232
        %3234 = vst.msk [vmem:[%s283] sm:$0x3] %vm3233, %v3228
        %s3235 = sand.u32 %s127, 1
        %s3236 = scalar_lea.sflag [#allocation4], %s3235
        %s3237 = sand.u32 %s127, 1
        %s3238 = smul.addr %s3237, 2
        %s3239 = scalar_lea.vmem [#allocation10], %s3238
        // Predicated region
        $region53: #{tpu_custom_call.1} parent=35 // pred_check
          %p3240 = pneg %p137
        $region54: #{tpu_custom_call.1} parent=35 // pred_check_branch
          %3242 = sbr.rel (%p3240) target = $region56
        $region55: #{tpu_custom_call.1} parent=35 // pred_region
          %s3243 = smul.u32 2, %s25
          %s3245 = ssub.s32 32, 32
          %3246 = vsyncadd %s3236, %s3245
          %s3247 = smul.addr %s3243, 16
          %s3248 = scalar_lea.hbm %s4, %s3247
          %s3250 = sshll.u32 %s3239, 4
          %s3251 = int_to_ptr.vmem [resolvable:$true] %s3250
          %3253 = dma.vmem_to_hbm [thread:$0]  %s3251, 32, %s3248, %s3236
        $region56: #{tpu_custom_call.1} parent=35 // pred_fallthru
          _
      $region36: #{tpu_custom_call.1} parent=5 // pred_fallthru
        _
      %p3254 = scmp.le.s32.totalorder 2, %s20
      // Predicated region
      $region57: #{tpu_custom_call.1} parent=5 // pred_check
        %p3255 = pneg %p3254
      $region58: #{tpu_custom_call.1} parent=5 // pred_check_branch
        %3257 = sbr.rel (%p3255) target = $region60
      $region59: #{tpu_custom_call.1} parent=5 // pred_region
        %s3258 = ssub.s32 %s20, 2
        // Predicated region
        $region61: #{tpu_custom_call.1} parent=59 // pred_check
          %p3259 = pneg %p143
        $region62: #{tpu_custom_call.1} parent=59 // pred_check_branch
          %3261 = sbr.rel (%p3259) target = $region64
        $region63: #{tpu_custom_call.1} parent=59 // pred_region
          %s3262 = sand.u32 %s128, 1
          %s3263 = scalar_lea.sflag [#allocation4], %s3262
          %s3264 = sand.u32 %s128, 1
          %s3265 = smul.addr %s3264, 2
          %s3266 = scalar_lea.vmem [#allocation10], %s3265
          %3267 = dma.done %s3263, 32
        $region64: #{tpu_custom_call.1} parent=59 // pred_fallthru
          _
      $region60: #{tpu_custom_call.1} parent=5 // pred_fallthru
        _
    $region6: #{tpu_custom_call.1} parent=1 // loop_footer
      %s24 = sadd.s32 1, %s20
    $region7: #{tpu_custom_call.1} parent=1 // loop_footer_branch
      %19 = sbr.rel target = $region3
    $region8: #{tpu_custom_call.1} parent=1 // loop_exit
      _
    %3268 = vsyncpa [#allocation3], 1
    %s3269 = scalar_lea.sflag [#allocation3], 1
    %3270 = vsyncpa %s3269, 1
    %3271 = vsyncpa [#allocation6], 1
    %s3272 = scalar_lea.sflag [#allocation6], 1
    %3273 = vsyncpa %s3272, 1
    %3274 = vsyncpa [#allocation9], 1
    %3275 = vsyncpa [#allocation4], 1
    %s3276 = scalar_lea.sflag [#allocation4], 1
    %3277 = vsyncpa %s3276, 1

</llo_original>
